<compile_context>
chip_gen: v7x
topology: tpu7x:2x2x1
jax: 0.10.0
libtpu: 0.0.40
codegen_flags: <defaults>
</compile_context>

<pallas_src>
import numpy as np
import jax
import jax.numpy as jnp
from jax import lax
from jax.experimental import pallas as pl
from jax.experimental.pallas import tpu as pltpu

EPS = 1e-5


# ---------------------------------------------------------------------------
# Pallas kernel: whole forward pass (both branches + restore + mse loss).
# All activations live in the packed (rows, N*cols) layout.
# ---------------------------------------------------------------------------
def _attention_pool_kernel(
    x_ref,          # (H,  NW)       input, packed
    swt_full_ref,   # (3, NW,  NW)   block-diag col shifts, stride 1, full res
    swt_half_ref,   # (3, NW2, NW2)  block-diag col shifts, stride 1, half res
    swt_down_ref,   # (3, NW,  NW2)  block-diag col selects, stride 2
    shf_full_ref,   # (8, 3, H,  H)  weight-folded row shifts, full res
    shf_half_ref,   # (8, 3, H2, H2) weight-folded row shifts, half res
    shfd3_ref,      # (3, H2, H)     weight-folded stride-2 row selects (conv 3)
    shd_ref,        # (3, H2, H)     raw stride-2 row selects (maxpool)
    uh_ref,         # (H,  H2)       bilinear upsample rows (align_corners=True)
    uwt_ref,        # (NW2, NW)      block-diag bilinear upsample cols (transposed)
    lmask_ref,      # (H, NW)        1.0 where the "col-1" tap is a real element
    rmask_ref,      # (H, NW)        1.0 where the "col+1" tap is a real element
    topmask_ref,    # (H2, NW2)      1.0 where the "row 2i-1" tap is a real element
    bias_ref,       # (8,)   SMEM    conv biases
    gamma_ref,      # (3,)   SMEM    BN weights (pool, conv, restore)
    beta_ref,       # (3,)   SMEM    BN biases
    att_ref,        # (H2, NW2) out  attention map, packed
    loss_ref,       # (1, 1)    out  MSE loss
):
    f32 = jnp.float32
    NEG = f32(-1e30)

    def mm(a, b):
        return jnp.dot(a, b, preferred_element_type=jnp.float32)

    # Hoist the small shared structured matrices once.
    swt_full = [swt_full_ref[c] for c in range(3)]
    swt_half = [swt_half_ref[c] for c in range(3)]
    swt_down = [swt_down_ref[c] for c in range(3)]
    shd = [shd_ref[a] for a in range(3)]
    shfd3 = [shfd3_ref[c] for c in range(3)]
    uh = uh_ref[...]
    uwt = uwt_ref[...]

    def colshift3(x, swt):
        # zero-padded column shifts of the whole packed batch (3 matmuls)
        return [mm(x, swt[c]) for c in range(3)]

    def rowmix(zc, shf_ref, k, add_bias):
        # weight-folded row mix: sum_c SHf[k,c] @ zc[c]  (3 matmuls)
        acc = (mm(shf_ref[k, 0], zc[0]) + mm(shf_ref[k, 1], zc[1])
               + mm(shf_ref[k, 2], zc[2]))
        if add_bias:
            acc = acc + bias_ref[k]
        return acc

    def conv_full(x, k, add_bias=True):
        return rowmix(colshift3(x, swt_full), shf_full_ref, k, add_bias)

    def conv_half(x, k, add_bias=True):
        return rowmix(colshift3(x, swt_half), shf_half_ref, k, add_bias)

    def conv_stride2(x, k):
        # Conv2d(1,1,3,stride=2,pad=1): stride-2 col selects + folded row selects.
        zd = colshift3(x, swt_down)
        acc = mm(shfd3[0], zd[0]) + mm(shfd3[1], zd[1]) + mm(shfd3[2], zd[2])
        return acc + bias_ref[k]

    def maxpool3x3_s2(x):
        # MaxPool2d(kernel=3, stride=2, pad=1); padded taps masked to -inf-ish.
        zc = colshift3(x, swt_full)
        m = jnp.maximum(
            jnp.where(lmask_ref[...] > 0.5, zc[0], NEG),
            jnp.maximum(zc[1], jnp.where(rmask_ref[...] > 0.5, zc[2], NEG)))
        mdc = mm(m, swt_down[1])                 # even columns
        c0 = mm(shd[0], mdc)                     # rows 2i-1 (row 0 is padding)
        c1 = mm(shd[1], mdc)                     # rows 2i
        c2 = mm(shd[2], mdc)                     # rows 2i+1 (always valid, H even)
        return jnp.maximum(jnp.where(topmask_ref[...] > 0.5, c0, NEG),
                           jnp.maximum(c1, c2))

    def batchnorm(x, idx):
        # Training-mode BatchNorm2d(1): single-pass batch stats (biased var).
        cnt = f32(x.shape[0] * x.shape[1])       # == N * H * W of this map
        s = jnp.sum(x, keepdims=True)
        s2 = jnp.sum(x * x, keepdims=True)
        mean = s / cnt
        var = jnp.maximum(s2 / cnt - mean * mean, 0.0)
        scale = gamma_ref[idx] * lax.rsqrt(var + f32(EPS))
        shift = beta_ref[idx] - mean * scale
        return x * scale + shift

    x = x_ref[...]

    # Shared column shifts of the raw input (used by conv 0 and conv 2).
    zc_x = colshift3(x, swt_full)

    # ---- pool branch: Conv -> MaxPool(3,2,1) -> Conv -> BN -----------------
    p = rowmix(zc_x, shf_full_ref, 0, True)
    p = maxpool3x3_s2(p)
    p = rowmix(colshift3(p, swt_half), shf_half_ref, 1, False)  # bias cancels in BN
    p = batchnorm(p, 0)

    # ---- conv branch: Conv -> Conv(stride 2) -> Conv -> BN -----------------
    c = rowmix(zc_x, shf_full_ref, 2, True)
    c = conv_stride2(c, 3)
    c = rowmix(colshift3(c, swt_half), shf_half_ref, 4, False)  # bias cancels in BN
    c = batchnorm(c, 1)

    # ---- attention map (module output): exact sigmoid ----------------------
    att = 1.0 / (1.0 + jnp.exp(-(p + c)))
    att_ref[...] = att

    # ---- restore branch (side effect: self.loss = MSE(x, restore)) ---------
    r = conv_half(att, 5, True)
    r = mm(uh, mm(r, uwt))                       # bilinear x2, align_corners=True
    r = conv_full(r, 6, False)                   # bias cancels in BN
    r = batchnorm(r, 2)
    r = conv_full(r, 7, True)
    r = pl.reciprocal(1.0 + jnp.exp(-r), approx=True)   # sigmoid (loss path only)

    d = x - r
    loss_ref[...] = jnp.sum(d * d, keepdims=True) / f32(d.shape[0] * d.shape[1])


# ---------------------------------------------------------------------------
# Glue: structured-matrix builders (plain numpy) + host-side weight folding.
# ---------------------------------------------------------------------------
def _row_shift_mats(h_in, stride):
    h_out = (h_in - 1) // stride + 1
    m = np.zeros((3, h_out, h_in), np.float32)
    for a in range(3):
        for i in range(h_out):
            s = i * stride + a - 1
            if 0 <= s < h_in:
                m[a, i, s] = 1.0
    return m


def _col_shift_mats_T(w_in, stride):
    w_out = (w_in - 1) // stride + 1
    m = np.zeros((3, w_in, w_out), np.float32)
    for c in range(3):
        for j in range(w_out):
            s = j * stride + c - 1
            if 0 <= s < w_in:
                m[c, s, j] = 1.0
    return m


def _upsample_mat(size_out, size_in):
    """Bilinear, align_corners=True (nn.UpsamplingBilinear2d)."""
    u = np.zeros((size_out, size_in), np.float32)
    if size_out == 1 or size_in == 1:
        u[:, 0] = 1.0
        return u
    scale = (size_in - 1) / (size_out - 1)
    for i in range(size_out):
        src = i * scale
        f = int(np.floor(src))
        if f >= size_in - 1:
            u[i, size_in - 1] = 1.0
        else:
            frac = src - f
            u[i, f] = 1.0 - frac
            u[i, f + 1] = frac
    return u


def _block_diag_stack(mats, n):
    """Per-sample matrices -> block-diagonal over the packed (n*dim) axis."""
    eye = np.eye(n, dtype=np.float32)
    return np.stack([np.kron(eye, m).astype(np.float32) for m in mats])


def init_params(key):
    """Deterministic synthetic params.  8 convs (1->1, 3x3, bias) + 3 BNs."""
    kw, kb = jax.random.split(key)
    bound = 1.0 / 3.0  # PyTorch default: U(-1/sqrt(fan_in)), fan_in = 1*3*3
    wts = jax.random.uniform(kw, (8, 9), jnp.float32, -bound, bound)
    biases = jax.random.uniform(kb, (8,), jnp.float32, -bound, bound)
    gammas = jnp.ones((3,), jnp.float32)   # BatchNorm2d default init
    betas = jnp.zeros((3,), jnp.float32)
    return wts, biases, gammas, betas


def attention_pool_forward(x_nchw, params):
    """Returns (att in NCHW, mse loss scalar), matching the PyTorch forward."""
    wts, biases, gammas, betas = params
    N, C, H, W = x_nchw.shape
    assert C == 1 and H % 2 == 0 and W % 2 == 0
    H2, W2 = H // 2, W // 2
    NW, NW2 = N * W, N * W2

    # Packed lane-dense layout: x_packed[h, n*W + w] = x[n, 0, h, w].
    x_packed = jnp.transpose(x_nchw[:, 0].astype(jnp.float32),
                             (1, 0, 2)).reshape(H, NW)

    # ---- host-built structured matrices ------------------------------------
    sh_full_np = _row_shift_mats(H, 1)           # (3, H,  H)
    sh_half_np = _row_shift_mats(H2, 1)          # (3, H2, H2)
    sh_down_np = _row_shift_mats(H, 2)           # (3, H2, H)
    swt_full = jnp.asarray(_block_diag_stack(_col_shift_mats_T(W, 1), N))
    swt_half = jnp.asarray(_block_diag_stack(_col_shift_mats_T(W2, 1), N))
    swt_down = jnp.asarray(_block_diag_stack(_col_shift_mats_T(W, 2), N))
    shd = jnp.asarray(sh_down_np)
    uh = jnp.asarray(_upsample_mat(H, H2))
    uwt = jnp.asarray(np.kron(np.eye(N, dtype=np.float32),
                              _upsample_mat(W, W2).T))

    # ---- fold 3x3 conv weights into the row-shift matrices (exact f32) -----
    w3 = wts.reshape(8, 3, 3)                    # w3[k, a, c] = wts[k, a*3 + c]
    shf_full = jnp.sum(w3[:, :, :, None, None]
                       * jnp.asarray(sh_full_np)[None, :, None, :, :], axis=1)
    shf_half = jnp.sum(w3[:, :, :, None, None]
                       * jnp.asarray(sh_half_np)[None, :, None, :, :], axis=1)
    shfd3 = jnp.sum(w3[3][:, :, None, None]
                    * jnp.asarray(sh_down_np)[:, None, :, :], axis=0)

    # ---- maxpool boundary-validity masks (1.0 = real element) --------------
    lane = np.arange(NW) % W
    lmask = jnp.asarray(np.repeat((lane != 0)[None, :].astype(np.float32), H, 0))
    rmask = jnp.asarray(np.repeat((lane != W - 1)[None, :].astype(np.float32), H, 0))
    topmask_np = np.ones((H2, NW2), np.float32)
    topmask_np[0, :] = 0.0
    topmask = jnp.asarray(topmask_np)

    vmem = lambda: pl.BlockSpec(memory_space=pltpu.MemorySpace.VMEM)
    smem = lambda: pl.BlockSpec(memory_space=pltpu.MemorySpace.SMEM)

    att_packed, loss = pl.pallas_call(
        _attention_pool_kernel,
        out_shape=(
            jax.ShapeDtypeStruct((H2, NW2), jnp.float32),
            jax.ShapeDtypeStruct((1, 1), jnp.float32),
        ),
        in_specs=[vmem() for _ in range(13)] + [smem() for _ in range(3)],
        out_specs=(vmem(), vmem()),
    )(x_packed, swt_full, swt_half, swt_down, shf_full, shf_half, shfd3,
      shd, uh, uwt, lmask, rmask, topmask, biases, gammas, betas)

    # Unpack (H2, N*W2) -> (N, 1, H2, W2).
    att = att_packed.reshape(H2, N, W2).transpose(1, 0, 2).reshape(N, 1, H2, W2)
    return att, loss[0, 0]


if __name__ == "__main__":
    key = jax.random.PRNGKey(0)
    kx, kp = jax.random.split(key)
    x = jax.random.normal(kx, (2, 1, 16, 16), jnp.float32)   # NCHW, C=1
    params = init_params(kp)

    att, loss = attention_pool_forward(x, params)
    jax.block_until_ready((att, loss))
    print("KERNEL_OK")
</pallas_src>

<mosaic_0001>
module attributes {stable_mosaic.version = 11 : i64} {
  func.func @_attention_pool_kernel(%arg0: memref<16x32xf32, #tpu.memory_space<vmem>>, %arg1: memref<3x32x32xf32, #tpu.memory_space<vmem>>, %arg2: memref<3x16x16xf32, #tpu.memory_space<vmem>>, %arg3: memref<3x32x16xf32, #tpu.memory_space<vmem>>, %arg4: memref<8x3x16x16xf32, #tpu.memory_space<vmem>>, %arg5: memref<8x3x8x8xf32, #tpu.memory_space<vmem>>, %arg6: memref<3x8x16xf32, #tpu.memory_space<vmem>>, %arg7: memref<3x8x16xf32, #tpu.memory_space<vmem>>, %arg8: memref<16x8xf32, #tpu.memory_space<vmem>>, %arg9: memref<16x32xf32, #tpu.memory_space<vmem>>, %arg10: memref<16x32xf32, #tpu.memory_space<vmem>>, %arg11: memref<16x32xf32, #tpu.memory_space<vmem>>, %arg12: memref<8x16xf32, #tpu.memory_space<vmem>>, %arg13: memref<8xf32, #tpu.memory_space<smem>>, %arg14: memref<3xf32, #tpu.memory_space<smem>>, %arg15: memref<3xf32, #tpu.memory_space<smem>>, %arg16: memref<8x16xf32, #tpu.memory_space<vmem>>, %arg17: memref<1x1xf32, #tpu.memory_space<vmem>>) attributes {dimension_semantics = [], scalar_prefetch = 0 : i64, scratch_operands = 0 : i64, tpu.core_type = #tpu.core_type<tc>} {
    %c0 = arith.constant 0 : index
    %c0_0 = arith.constant 0 : index
    %c0_1 = arith.constant 0 : index
    %0 = vector.load %arg1[%c0, %c0_0, %c0_1] : memref<3x32x32xf32, #tpu.memory_space<vmem>>, vector<1x32x32xf32>
    %1 = vector.shape_cast %0 : vector<1x32x32xf32> to vector<32x32xf32>
    %c1 = arith.constant 1 : index
    %c0_2 = arith.constant 0 : index
    %c0_3 = arith.constant 0 : index
    %2 = vector.load %arg1[%c1, %c0_2, %c0_3] : memref<3x32x32xf32, #tpu.memory_space<vmem>>, vector<1x32x32xf32>
    %3 = vector.shape_cast %2 : vector<1x32x32xf32> to vector<32x32xf32>
    %c2 = arith.constant 2 : index
    %c0_4 = arith.constant 0 : index
    %c0_5 = arith.constant 0 : index
    %4 = vector.load %arg1[%c2, %c0_4, %c0_5] : memref<3x32x32xf32, #tpu.memory_space<vmem>>, vector<1x32x32xf32>
    %5 = vector.shape_cast %4 : vector<1x32x32xf32> to vector<32x32xf32>
    %c0_6 = arith.constant 0 : index
    %c0_7 = arith.constant 0 : index
    %c0_8 = arith.constant 0 : index
    %6 = vector.load %arg2[%c0_6, %c0_7, %c0_8] : memref<3x16x16xf32, #tpu.memory_space<vmem>>, vector<1x16x16xf32>
    %7 = vector.shape_cast %6 : vector<1x16x16xf32> to vector<16x16xf32>
    %c1_9 = arith.constant 1 : index
    %c0_10 = arith.constant 0 : index
    %c0_11 = arith.constant 0 : index
    %8 = vector.load %arg2[%c1_9, %c0_10, %c0_11] : memref<3x16x16xf32, #tpu.memory_space<vmem>>, vector<1x16x16xf32>
    %9 = vector.shape_cast %8 : vector<1x16x16xf32> to vector<16x16xf32>
    %c2_12 = arith.constant 2 : index
    %c0_13 = arith.constant 0 : index
    %c0_14 = arith.constant 0 : index
    %10 = vector.load %arg2[%c2_12, %c0_13, %c0_14] : memref<3x16x16xf32, #tpu.memory_space<vmem>>, vector<1x16x16xf32>
    %11 = vector.shape_cast %10 : vector<1x16x16xf32> to vector<16x16xf32>
    %c0_15 = arith.constant 0 : index
    %c0_16 = arith.constant 0 : index
    %c0_17 = arith.constant 0 : index
    %12 = vector.load %arg3[%c0_15, %c0_16, %c0_17] : memref<3x32x16xf32, #tpu.memory_space<vmem>>, vector<1x32x16xf32>
    %13 = vector.shape_cast %12 : vector<1x32x16xf32> to vector<32x16xf32>
    %c1_18 = arith.constant 1 : index
    %c0_19 = arith.constant 0 : index
    %c0_20 = arith.constant 0 : index
    %14 = vector.load %arg3[%c1_18, %c0_19, %c0_20] : memref<3x32x16xf32, #tpu.memory_space<vmem>>, vector<1x32x16xf32>
    %15 = vector.shape_cast %14 : vector<1x32x16xf32> to vector<32x16xf32>
    %c2_21 = arith.constant 2 : index
    %c0_22 = arith.constant 0 : index
    %c0_23 = arith.constant 0 : index
    %16 = vector.load %arg3[%c2_21, %c0_22, %c0_23] : memref<3x32x16xf32, #tpu.memory_space<vmem>>, vector<1x32x16xf32>
    %17 = vector.shape_cast %16 : vector<1x32x16xf32> to vector<32x16xf32>
    %c0_24 = arith.constant 0 : index
    %c0_25 = arith.constant 0 : index
    %c0_26 = arith.constant 0 : index
    %18 = vector.load %arg7[%c0_24, %c0_25, %c0_26] : memref<3x8x16xf32, #tpu.memory_space<vmem>>, vector<1x8x16xf32>
    %19 = vector.shape_cast %18 : vector<1x8x16xf32> to vector<8x16xf32>
    %c1_27 = arith.constant 1 : index
    %c0_28 = arith.constant 0 : index
    %c0_29 = arith.constant 0 : index
    %20 = vector.load %arg7[%c1_27, %c0_28, %c0_29] : memref<3x8x16xf32, #tpu.memory_space<vmem>>, vector<1x8x16xf32>
    %21 = vector.shape_cast %20 : vector<1x8x16xf32> to vector<8x16xf32>
    %c2_30 = arith.constant 2 : index
    %c0_31 = arith.constant 0 : index
    %c0_32 = arith.constant 0 : index
    %22 = vector.load %arg7[%c2_30, %c0_31, %c0_32] : memref<3x8x16xf32, #tpu.memory_space<vmem>>, vector<1x8x16xf32>
    %23 = vector.shape_cast %22 : vector<1x8x16xf32> to vector<8x16xf32>
    %c0_33 = arith.constant 0 : index
    %c0_34 = arith.constant 0 : index
    %c0_35 = arith.constant 0 : index
    %24 = vector.load %arg6[%c0_33, %c0_34, %c0_35] : memref<3x8x16xf32, #tpu.memory_space<vmem>>, vector<1x8x16xf32>
    %25 = vector.shape_cast %24 : vector<1x8x16xf32> to vector<8x16xf32>
    %c1_36 = arith.constant 1 : index
    %c0_37 = arith.constant 0 : index
    %c0_38 = arith.constant 0 : index
    %26 = vector.load %arg6[%c1_36, %c0_37, %c0_38] : memref<3x8x16xf32, #tpu.memory_space<vmem>>, vector<1x8x16xf32>
    %27 = vector.shape_cast %26 : vector<1x8x16xf32> to vector<8x16xf32>
    %c2_39 = arith.constant 2 : index
    %c0_40 = arith.constant 0 : index
    %c0_41 = arith.constant 0 : index
    %28 = vector.load %arg6[%c2_39, %c0_40, %c0_41] : memref<3x8x16xf32, #tpu.memory_space<vmem>>, vector<1x8x16xf32>
    %29 = vector.shape_cast %28 : vector<1x8x16xf32> to vector<8x16xf32>
    %c0_42 = arith.constant 0 : index
    %c0_43 = arith.constant 0 : index
    %30 = vector.load %arg8[%c0_42, %c0_43] : memref<16x8xf32, #tpu.memory_space<vmem>>, vector<16x8xf32>
    %c0_44 = arith.constant 0 : index
    %c0_45 = arith.constant 0 : index
    %31 = vector.load %arg9[%c0_44, %c0_45] : memref<16x32xf32, #tpu.memory_space<vmem>>, vector<16x32xf32>
    %c0_46 = arith.constant 0 : index
    %c0_47 = arith.constant 0 : index
    %32 = vector.load %arg0[%c0_46, %c0_47] : memref<16x32xf32, #tpu.memory_space<vmem>>, vector<16x32xf32>
    %cst = arith.constant dense<0.000000e+00> : vector<16x32xf32>
    %33 = tpu.matmul %32, %1, %cst {dimension_numbers = #tpu.dot_dimension_numbers<[1], [0], [0], [1], [0, 0, 1, 1], [], []>} : vector<16x32xf32>, vector<32x32xf32>, vector<16x32xf32> -> vector<16x32xf32>
    %cst_48 = arith.constant dense<0.000000e+00> : vector<16x32xf32>
    %34 = tpu.matmul %32, %3, %cst_48 {dimension_numbers = #tpu.dot_dimension_numbers<[1], [0], [0], [1], [0, 0, 1, 1], [], []>} : vector<16x32xf32>, vector<32x32xf32>, vector<16x32xf32> -> vector<16x32xf32>
    %cst_49 = arith.constant dense<0.000000e+00> : vector<16x32xf32>
    %35 = tpu.matmul %32, %5, %cst_49 {dimension_numbers = #tpu.dot_dimension_numbers<[1], [0], [0], [1], [0, 0, 1, 1], [], []>} : vector<16x32xf32>, vector<32x32xf32>, vector<16x32xf32> -> vector<16x32xf32>
    %c0_50 = arith.constant 0 : index
    %c0_51 = arith.constant 0 : index
    %c0_52 = arith.constant 0 : index
    %c0_53 = arith.constant 0 : index
    %36 = vector.load %arg4[%c0_50, %c0_51, %c0_52, %c0_53] : memref<8x3x16x16xf32, #tpu.memory_space<vmem>>, vector<1x1x16x16xf32>
    %37 = vector.shape_cast %36 : vector<1x1x16x16xf32> to vector<16x16xf32>
    %cst_54 = arith.constant dense<0.000000e+00> : vector<16x32xf32>
    %38 = tpu.matmul %37, %33, %cst_54 {dimension_numbers = #tpu.dot_dimension_numbers<[1], [0], [0], [1], [0, 0, 1, 1], [], []>} : vector<16x16xf32>, vector<16x32xf32>, vector<16x32xf32> -> vector<16x32xf32>
    %c0_55 = arith.constant 0 : index
    %c1_56 = arith.constant 1 : index
    %c0_57 = arith.constant 0 : index
    %c0_58 = arith.constant 0 : index
    %39 = vector.load %arg4[%c0_55, %c1_56, %c0_57, %c0_58] : memref<8x3x16x16xf32, #tpu.memory_space<vmem>>, vector<1x1x16x16xf32>
    %40 = vector.shape_cast %39 : vector<1x1x16x16xf32> to vector<16x16xf32>
    %cst_59 = arith.constant dense<0.000000e+00> : vector<16x32xf32>
    %41 = tpu.matmul %40, %34, %cst_59 {dimension_numbers = #tpu.dot_dimension_numbers<[1], [0], [0], [1], [0, 0, 1, 1], [], []>} : vector<16x16xf32>, vector<16x32xf32>, vector<16x32xf32> -> vector<16x32xf32>
    %42 = arith.addf %38, %41 : vector<16x32xf32>
    %c0_60 = arith.constant 0 : index
    %c2_61 = arith.constant 2 : index
    %c0_62 = arith.constant 0 : index
    %c0_63 = arith.constant 0 : index
    %43 = vector.load %arg4[%c0_60, %c2_61, %c0_62, %c0_63] : memref<8x3x16x16xf32, #tpu.memory_space<vmem>>, vector<1x1x16x16xf32>
    %44 = vector.shape_cast %43 : vector<1x1x16x16xf32> to vector<16x16xf32>
    %cst_64 = arith.constant dense<0.000000e+00> : vector<16x32xf32>
    %45 = tpu.matmul %44, %35, %cst_64 {dimension_numbers = #tpu.dot_dimension_numbers<[1], [0], [0], [1], [0, 0, 1, 1], [], []>} : vector<16x16xf32>, vector<16x32xf32>, vector<16x32xf32> -> vector<16x32xf32>
    %46 = arith.addf %42, %45 : vector<16x32xf32>
    %c0_65 = arith.constant 0 : index
    %47 = memref.load %arg13[%c0_65] : memref<8xf32, #tpu.memory_space<smem>>
    %48 = vector.broadcast %47 : f32 to vector<16x32xf32>
    %49 = arith.addf %46, %48 : vector<16x32xf32>
    %cst_66 = arith.constant dense<0.000000e+00> : vector<16x32xf32>
    %50 = tpu.matmul %49, %1, %cst_66 {dimension_numbers = #tpu.dot_dimension_numbers<[1], [0], [0], [1], [0, 0, 1, 1], [], []>} : vector<16x32xf32>, vector<32x32xf32>, vector<16x32xf32> -> vector<16x32xf32>
    %cst_67 = arith.constant dense<0.000000e+00> : vector<16x32xf32>
    %51 = tpu.matmul %49, %3, %cst_67 {dimension_numbers = #tpu.dot_dimension_numbers<[1], [0], [0], [1], [0, 0, 1, 1], [], []>} : vector<16x32xf32>, vector<32x32xf32>, vector<16x32xf32> -> vector<16x32xf32>
    %cst_68 = arith.constant dense<0.000000e+00> : vector<16x32xf32>
    %52 = tpu.matmul %49, %5, %cst_68 {dimension_numbers = #tpu.dot_dimension_numbers<[1], [0], [0], [1], [0, 0, 1, 1], [], []>} : vector<16x32xf32>, vector<32x32xf32>, vector<16x32xf32> -> vector<16x32xf32>
    %c0_69 = arith.constant 0 : index
    %c0_70 = arith.constant 0 : index
    %53 = vector.load %arg10[%c0_69, %c0_70] : memref<16x32xf32, #tpu.memory_space<vmem>>, vector<16x32xf32>
    %cst_71 = arith.constant 5.000000e-01 : f32
    %54 = vector.broadcast %cst_71 : f32 to vector<16x32xf32>
    %55 = arith.cmpf ogt, %53, %54 : vector<16x32xf32>
    %cst_72 = arith.constant -1.000000e+30 : f32
    %56 = vector.broadcast %cst_72 : f32 to vector<16x32xf32>
    %57 = arith.select %55, %50, %56 : vector<16x32xi1>, vector<16x32xf32>
    %c0_73 = arith.constant 0 : index
    %c0_74 = arith.constant 0 : index
    %58 = vector.load %arg11[%c0_73, %c0_74] : memref<16x32xf32, #tpu.memory_space<vmem>>, vector<16x32xf32>
    %cst_75 = arith.constant 5.000000e-01 : f32
    %59 = vector.broadcast %cst_75 : f32 to vector<16x32xf32>
    %60 = arith.cmpf ogt, %58, %59 : vector<16x32xf32>
    %cst_76 = arith.constant -1.000000e+30 : f32
    %61 = vector.broadcast %cst_76 : f32 to vector<16x32xf32>
    %62 = arith.select %60, %52, %61 : vector<16x32xi1>, vector<16x32xf32>
    %63 = arith.maximumf %51, %62 : vector<16x32xf32>
    %64 = arith.maximumf %57, %63 : vector<16x32xf32>
    %cst_77 = arith.constant dense<0.000000e+00> : vector<16x16xf32>
    %65 = tpu.matmul %64, %15, %cst_77 {dimension_numbers = #tpu.dot_dimension_numbers<[1], [0], [0], [1], [0, 0, 1, 1], [], []>} : vector<16x32xf32>, vector<32x16xf32>, vector<16x16xf32> -> vector<16x16xf32>
    %cst_78 = arith.constant dense<0.000000e+00> : vector<8x16xf32>
    %66 = tpu.matmul %19, %65, %cst_78 {dimension_numbers = #tpu.dot_dimension_numbers<[1], [0], [0], [1], [0, 0, 1, 1], [], []>} : vector<8x16xf32>, vector<16x16xf32>, vector<8x16xf32> -> vector<8x16xf32>
    %cst_79 = arith.constant dense<0.000000e+00> : vector<8x16xf32>
    %67 = tpu.matmul %21, %65, %cst_79 {dimension_numbers = #tpu.dot_dimension_numbers<[1], [0], [0], [1], [0, 0, 1, 1], [], []>} : vector<8x16xf32>, vector<16x16xf32>, vector<8x16xf32> -> vector<8x16xf32>
    %cst_80 = arith.constant dense<0.000000e+00> : vector<8x16xf32>
    %68 = tpu.matmul %23, %65, %cst_80 {dimension_numbers = #tpu.dot_dimension_numbers<[1], [0], [0], [1], [0, 0, 1, 1], [], []>} : vector<8x16xf32>, vector<16x16xf32>, vector<8x16xf32> -> vector<8x16xf32>
    %c0_81 = arith.constant 0 : index
    %c0_82 = arith.constant 0 : index
    %69 = vector.load %arg12[%c0_81, %c0_82] : memref<8x16xf32, #tpu.memory_space<vmem>>, vector<8x16xf32>
    %cst_83 = arith.constant 5.000000e-01 : f32
    %70 = vector.broadcast %cst_83 : f32 to vector<8x16xf32>
    %71 = arith.cmpf ogt, %69, %70 : vector<8x16xf32>
    %cst_84 = arith.constant -1.000000e+30 : f32
    %72 = vector.broadcast %cst_84 : f32 to vector<8x16xf32>
    %73 = arith.select %71, %66, %72 : vector<8x16xi1>, vector<8x16xf32>
    %74 = arith.maximumf %67, %68 : vector<8x16xf32>
    %75 = arith.maximumf %73, %74 : vector<8x16xf32>
    %cst_85 = arith.constant dense<0.000000e+00> : vector<8x16xf32>
    %76 = tpu.matmul %75, %7, %cst_85 {dimension_numbers = #tpu.dot_dimension_numbers<[1], [0], [0], [1], [0, 0, 1, 1], [], []>} : vector<8x16xf32>, vector<16x16xf32>, vector<8x16xf32> -> vector<8x16xf32>
    %cst_86 = arith.constant dense<0.000000e+00> : vector<8x16xf32>
    %77 = tpu.matmul %75, %9, %cst_86 {dimension_numbers = #tpu.dot_dimension_numbers<[1], [0], [0], [1], [0, 0, 1, 1], [], []>} : vector<8x16xf32>, vector<16x16xf32>, vector<8x16xf32> -> vector<8x16xf32>
    %cst_87 = arith.constant dense<0.000000e+00> : vector<8x16xf32>
    %78 = tpu.matmul %75, %11, %cst_87 {dimension_numbers = #tpu.dot_dimension_numbers<[1], [0], [0], [1], [0, 0, 1, 1], [], []>} : vector<8x16xf32>, vector<16x16xf32>, vector<8x16xf32> -> vector<8x16xf32>
    %c1_88 = arith.constant 1 : index
    %c0_89 = arith.constant 0 : index
    %c0_90 = arith.constant 0 : index
    %c0_91 = arith.constant 0 : index
    %79 = vector.load %arg5[%c1_88, %c0_89, %c0_90, %c0_91] : memref<8x3x8x8xf32, #tpu.memory_space<vmem>>, vector<1x1x8x8xf32>
    %80 = vector.shape_cast %79 : vector<1x1x8x8xf32> to vector<8x8xf32>
    %cst_92 = arith.constant dense<0.000000e+00> : vector<8x16xf32>
    %81 = tpu.matmul %80, %76, %cst_92 {dimension_numbers = #tpu.dot_dimension_numbers<[1], [0], [0], [1], [0, 0, 1, 1], [], []>} : vector<8x8xf32>, vector<8x16xf32>, vector<8x16xf32> -> vector<8x16xf32>
    %c1_93 = arith.constant 1 : index
    %c1_94 = arith.constant 1 : index
    %c0_95 = arith.constant 0 : index
    %c0_96 = arith.constant 0 : index
    %82 = vector.load %arg5[%c1_93, %c1_94, %c0_95, %c0_96] : memref<8x3x8x8xf32, #tpu.memory_space<vmem>>, vector<1x1x8x8xf32>
    %83 = vector.shape_cast %82 : vector<1x1x8x8xf32> to vector<8x8xf32>
    %cst_97 = arith.constant dense<0.000000e+00> : vector<8x16xf32>
    %84 = tpu.matmul %83, %77, %cst_97 {dimension_numbers = #tpu.dot_dimension_numbers<[1], [0], [0], [1], [0, 0, 1, 1], [], []>} : vector<8x8xf32>, vector<8x16xf32>, vector<8x16xf32> -> vector<8x16xf32>
    %85 = arith.addf %81, %84 : vector<8x16xf32>
    %c1_98 = arith.constant 1 : index
    %c2_99 = arith.constant 2 : index
    %c0_100 = arith.constant 0 : index
    %c0_101 = arith.constant 0 : index
    %86 = vector.load %arg5[%c1_98, %c2_99, %c0_100, %c0_101] : memref<8x3x8x8xf32, #tpu.memory_space<vmem>>, vector<1x1x8x8xf32>
    %87 = vector.shape_cast %86 : vector<1x1x8x8xf32> to vector<8x8xf32>
    %cst_102 = arith.constant dense<0.000000e+00> : vector<8x16xf32>
    %88 = tpu.matmul %87, %78, %cst_102 {dimension_numbers = #tpu.dot_dimension_numbers<[1], [0], [0], [1], [0, 0, 1, 1], [], []>} : vector<8x8xf32>, vector<8x16xf32>, vector<8x16xf32> -> vector<8x16xf32>
    %89 = arith.addf %85, %88 : vector<8x16xf32>
    %90 = vector.shape_cast %89 : vector<8x16xf32> to vector<1x8x16xf32>
    %cst_103 = arith.constant dense<0.000000e+00> : vector<1xf32>
    %91 = vector.multi_reduction <add>, %90, %cst_103 [1, 2] : vector<1x8x16xf32> to vector<1xf32>
    %92 = vector.shape_cast %91 : vector<1xf32> to vector<1x1x1xf32>
    %93 = vector.extract %92[0, 0, 0] : f32 from vector<1x1x1xf32>
    %94 = vector.broadcast %93 : f32 to vector<1x1xf32>
    %95 = arith.mulf %89, %89 : vector<8x16xf32>
    %96 = vector.shape_cast %95 : vector<8x16xf32> to vector<1x8x16xf32>
    %cst_104 = arith.constant dense<0.000000e+00> : vector<1xf32>
    %97 = vector.multi_reduction <add>, %96, %cst_104 [1, 2] : vector<1x8x16xf32> to vector<1xf32>
    %98 = vector.shape_cast %97 : vector<1xf32> to vector<1x1x1xf32>
    %99 = vector.extract %98[0, 0, 0] : f32 from vector<1x1x1xf32>
    %100 = vector.broadcast %99 : f32 to vector<1x1xf32>
    %cst_105 = arith.constant 1.280000e+02 : f32
    %101 = vector.broadcast %cst_105 : f32 to vector<1x1xf32>
    %102 = arith.divf %94, %101 : vector<1x1xf32>
    %cst_106 = arith.constant 1.280000e+02 : f32
    %103 = vector.broadcast %cst_106 : f32 to vector<1x1xf32>
    %104 = arith.divf %100, %103 : vector<1x1xf32>
    %105 = arith.mulf %102, %102 : vector<1x1xf32>
    %106 = arith.subf %104, %105 : vector<1x1xf32>
    %cst_107 = arith.constant 0.000000e+00 : f32
    %107 = vector.broadcast %cst_107 : f32 to vector<1x1xf32>
    %108 = arith.maximumf %106, %107 : vector<1x1xf32>
    %c0_108 = arith.constant 0 : index
    %109 = memref.load %arg14[%c0_108] : memref<3xf32, #tpu.memory_space<smem>>
    %cst_109 = arith.constant 9.99999974E-6 : f32
    %110 = vector.broadcast %cst_109 : f32 to vector<1x1xf32>
    %111 = arith.addf %108, %110 : vector<1x1xf32>
    %112 = math.rsqrt %111 : vector<1x1xf32>
    %113 = vector.broadcast %109 : f32 to vector<1x1xf32>
    %114 = arith.mulf %113, %112 : vector<1x1xf32>
    %c0_110 = arith.constant 0 : index
    %115 = memref.load %arg15[%c0_110] : memref<3xf32, #tpu.memory_space<smem>>
    %116 = arith.mulf %102, %114 : vector<1x1xf32>
    %117 = vector.broadcast %115 : f32 to vector<1x1xf32>
    %118 = arith.subf %117, %116 : vector<1x1xf32>
    %119 = vector.broadcast %114 : vector<1x1xf32> to vector<8x16xf32>
    %120 = arith.mulf %89, %119 : vector<8x16xf32>
    %121 = vector.broadcast %118 : vector<1x1xf32> to vector<8x16xf32>
    %122 = arith.addf %120, %121 : vector<8x16xf32>
    %c2_111 = arith.constant 2 : index
    %c0_112 = arith.constant 0 : index
    %c0_113 = arith.constant 0 : index
    %c0_114 = arith.constant 0 : index
    %123 = vector.load %arg4[%c2_111, %c0_112, %c0_113, %c0_114] : memref<8x3x16x16xf32, #tpu.memory_space<vmem>>, vector<1x1x16x16xf32>
    %124 = vector.shape_cast %123 : vector<1x1x16x16xf32> to vector<16x16xf32>
    %cst_115 = arith.constant dense<0.000000e+00> : vector<16x32xf32>
    %125 = tpu.matmul %124, %33, %cst_115 {dimension_numbers = #tpu.dot_dimension_numbers<[1], [0], [0], [1], [0, 0, 1, 1], [], []>} : vector<16x16xf32>, vector<16x32xf32>, vector<16x32xf32> -> vector<16x32xf32>
    %c2_116 = arith.constant 2 : index
    %c1_117 = arith.constant 1 : index
    %c0_118 = arith.constant 0 : index
    %c0_119 = arith.constant 0 : index
    %126 = vector.load %arg4[%c2_116, %c1_117, %c0_118, %c0_119] : memref<8x3x16x16xf32, #tpu.memory_space<vmem>>, vector<1x1x16x16xf32>
    %127 = vector.shape_cast %126 : vector<1x1x16x16xf32> to vector<16x16xf32>
    %cst_120 = arith.constant dense<0.000000e+00> : vector<16x32xf32>
    %128 = tpu.matmul %127, %34, %cst_120 {dimension_numbers = #tpu.dot_dimension_numbers<[1], [0], [0], [1], [0, 0, 1, 1], [], []>} : vector<16x16xf32>, vector<16x32xf32>, vector<16x32xf32> -> vector<16x32xf32>
    %129 = arith.addf %125, %128 : vector<16x32xf32>
    %c2_121 = arith.constant 2 : index
    %c2_122 = arith.constant 2 : index
    %c0_123 = arith.constant 0 : index
    %c0_124 = arith.constant 0 : index
    %130 = vector.load %arg4[%c2_121, %c2_122, %c0_123, %c0_124] : memref<8x3x16x16xf32, #tpu.memory_space<vmem>>, vector<1x1x16x16xf32>
    %131 = vector.shape_cast %130 : vector<1x1x16x16xf32> to vector<16x16xf32>
    %cst_125 = arith.constant dense<0.000000e+00> : vector<16x32xf32>
    %132 = tpu.matmul %131, %35, %cst_125 {dimension_numbers = #tpu.dot_dimension_numbers<[1], [0], [0], [1], [0, 0, 1, 1], [], []>} : vector<16x16xf32>, vector<16x32xf32>, vector<16x32xf32> -> vector<16x32xf32>
    %133 = arith.addf %129, %132 : vector<16x32xf32>
    %c2_126 = arith.constant 2 : index
    %134 = memref.load %arg13[%c2_126] : memref<8xf32, #tpu.memory_space<smem>>
    %135 = vector.broadcast %134 : f32 to vector<16x32xf32>
    %136 = arith.addf %133, %135 : vector<16x32xf32>
    %cst_127 = arith.constant dense<0.000000e+00> : vector<16x16xf32>
    %137 = tpu.matmul %136, %13, %cst_127 {dimension_numbers = #tpu.dot_dimension_numbers<[1], [0], [0], [1], [0, 0, 1, 1], [], []>} : vector<16x32xf32>, vector<32x16xf32>, vector<16x16xf32> -> vector<16x16xf32>
    %cst_128 = arith.constant dense<0.000000e+00> : vector<16x16xf32>
    %138 = tpu.matmul %136, %15, %cst_128 {dimension_numbers = #tpu.dot_dimension_numbers<[1], [0], [0], [1], [0, 0, 1, 1], [], []>} : vector<16x32xf32>, vector<32x16xf32>, vector<16x16xf32> -> vector<16x16xf32>
    %cst_129 = arith.constant dense<0.000000e+00> : vector<16x16xf32>
    %139 = tpu.matmul %136, %17, %cst_129 {dimension_numbers = #tpu.dot_dimension_numbers<[1], [0], [0], [1], [0, 0, 1, 1], [], []>} : vector<16x32xf32>, vector<32x16xf32>, vector<16x16xf32> -> vector<16x16xf32>
    %cst_130 = arith.constant dense<0.000000e+00> : vector<8x16xf32>
    %140 = tpu.matmul %25, %137, %cst_130 {dimension_numbers = #tpu.dot_dimension_numbers<[1], [0], [0], [1], [0, 0, 1, 1], [], []>} : vector<8x16xf32>, vector<16x16xf32>, vector<8x16xf32> -> vector<8x16xf32>
    %cst_131 = arith.constant dense<0.000000e+00> : vector<8x16xf32>
    %141 = tpu.matmul %27, %138, %cst_131 {dimension_numbers = #tpu.dot_dimension_numbers<[1], [0], [0], [1], [0, 0, 1, 1], [], []>} : vector<8x16xf32>, vector<16x16xf32>, vector<8x16xf32> -> vector<8x16xf32>
    %142 = arith.addf %140, %141 : vector<8x16xf32>
    %cst_132 = arith.constant dense<0.000000e+00> : vector<8x16xf32>
    %143 = tpu.matmul %29, %139, %cst_132 {dimension_numbers = #tpu.dot_dimension_numbers<[1], [0], [0], [1], [0, 0, 1, 1], [], []>} : vector<8x16xf32>, vector<16x16xf32>, vector<8x16xf32> -> vector<8x16xf32>
    %144 = arith.addf %142, %143 : vector<8x16xf32>
    %c3 = arith.constant 3 : index
    %145 = memref.load %arg13[%c3] : memref<8xf32, #tpu.memory_space<smem>>
    %146 = vector.broadcast %145 : f32 to vector<8x16xf32>
    %147 = arith.addf %144, %146 : vector<8x16xf32>
    %cst_133 = arith.constant dense<0.000000e+00> : vector<8x16xf32>
    %148 = tpu.matmul %147, %7, %cst_133 {dimension_numbers = #tpu.dot_dimension_numbers<[1], [0], [0], [1], [0, 0, 1, 1], [], []>} : vector<8x16xf32>, vector<16x16xf32>, vector<8x16xf32> -> vector<8x16xf32>
    %cst_134 = arith.constant dense<0.000000e+00> : vector<8x16xf32>
    %149 = tpu.matmul %147, %9, %cst_134 {dimension_numbers = #tpu.dot_dimension_numbers<[1], [0], [0], [1], [0, 0, 1, 1], [], []>} : vector<8x16xf32>, vector<16x16xf32>, vector<8x16xf32> -> vector<8x16xf32>
    %cst_135 = arith.constant dense<0.000000e+00> : vector<8x16xf32>
    %150 = tpu.matmul %147, %11, %cst_135 {dimension_numbers = #tpu.dot_dimension_numbers<[1], [0], [0], [1], [0, 0, 1, 1], [], []>} : vector<8x16xf32>, vector<16x16xf32>, vector<8x16xf32> -> vector<8x16xf32>
    %c4 = arith.constant 4 : index
    %c0_136 = arith.constant 0 : index
    %c0_137 = arith.constant 0 : index
    %c0_138 = arith.constant 0 : index
    %151 = vector.load %arg5[%c4, %c0_136, %c0_137, %c0_138] : memref<8x3x8x8xf32, #tpu.memory_space<vmem>>, vector<1x1x8x8xf32>
    %152 = vector.shape_cast %151 : vector<1x1x8x8xf32> to vector<8x8xf32>
    %cst_139 = arith.constant dense<0.000000e+00> : vector<8x16xf32>
    %153 = tpu.matmul %152, %148, %cst_139 {dimension_numbers = #tpu.dot_dimension_numbers<[1], [0], [0], [1], [0, 0, 1, 1], [], []>} : vector<8x8xf32>, vector<8x16xf32>, vector<8x16xf32> -> vector<8x16xf32>
    %c4_140 = arith.constant 4 : index
    %c1_141 = arith.constant 1 : index
    %c0_142 = arith.constant 0 : index
    %c0_143 = arith.constant 0 : index
    %154 = vector.load %arg5[%c4_140, %c1_141, %c0_142, %c0_143] : memref<8x3x8x8xf32, #tpu.memory_space<vmem>>, vector<1x1x8x8xf32>
    %155 = vector.shape_cast %154 : vector<1x1x8x8xf32> to vector<8x8xf32>
    %cst_144 = arith.constant dense<0.000000e+00> : vector<8x16xf32>
    %156 = tpu.matmul %155, %149, %cst_144 {dimension_numbers = #tpu.dot_dimension_numbers<[1], [0], [0], [1], [0, 0, 1, 1], [], []>} : vector<8x8xf32>, vector<8x16xf32>, vector<8x16xf32> -> vector<8x16xf32>
    %157 = arith.addf %153, %156 : vector<8x16xf32>
    %c4_145 = arith.constant 4 : index
    %c2_146 = arith.constant 2 : index
    %c0_147 = arith.constant 0 : index
    %c0_148 = arith.constant 0 : index
    %158 = vector.load %arg5[%c4_145, %c2_146, %c0_147, %c0_148] : memref<8x3x8x8xf32, #tpu.memory_space<vmem>>, vector<1x1x8x8xf32>
    %159 = vector.shape_cast %158 : vector<1x1x8x8xf32> to vector<8x8xf32>
    %cst_149 = arith.constant dense<0.000000e+00> : vector<8x16xf32>
    %160 = tpu.matmul %159, %150, %cst_149 {dimension_numbers = #tpu.dot_dimension_numbers<[1], [0], [0], [1], [0, 0, 1, 1], [], []>} : vector<8x8xf32>, vector<8x16xf32>, vector<8x16xf32> -> vector<8x16xf32>
    %161 = arith.addf %157, %160 : vector<8x16xf32>
    %162 = vector.shape_cast %161 : vector<8x16xf32> to vector<1x8x16xf32>
    %cst_150 = arith.constant dense<0.000000e+00> : vector<1xf32>
    %163 = vector.multi_reduction <add>, %162, %cst_150 [1, 2] : vector<1x8x16xf32> to vector<1xf32>
    %164 = vector.shape_cast %163 : vector<1xf32> to vector<1x1x1xf32>
    %165 = vector.extract %164[0, 0, 0] : f32 from vector<1x1x1xf32>
    %166 = vector.broadcast %165 : f32 to vector<1x1xf32>
    %167 = arith.mulf %161, %161 : vector<8x16xf32>
    %168 = vector.shape_cast %167 : vector<8x16xf32> to vector<1x8x16xf32>
    %cst_151 = arith.constant dense<0.000000e+00> : vector<1xf32>
    %169 = vector.multi_reduction <add>, %168, %cst_151 [1, 2] : vector<1x8x16xf32> to vector<1xf32>
    %170 = vector.shape_cast %169 : vector<1xf32> to vector<1x1x1xf32>
    %171 = vector.extract %170[0, 0, 0] : f32 from vector<1x1x1xf32>
    %172 = vector.broadcast %171 : f32 to vector<1x1xf32>
    %cst_152 = arith.constant 1.280000e+02 : f32
    %173 = vector.broadcast %cst_152 : f32 to vector<1x1xf32>
    %174 = arith.divf %166, %173 : vector<1x1xf32>
    %cst_153 = arith.constant 1.280000e+02 : f32
    %175 = vector.broadcast %cst_153 : f32 to vector<1x1xf32>
    %176 = arith.divf %172, %175 : vector<1x1xf32>
    %177 = arith.mulf %174, %174 : vector<1x1xf32>
    %178 = arith.subf %176, %177 : vector<1x1xf32>
    %cst_154 = arith.constant 0.000000e+00 : f32
    %179 = vector.broadcast %cst_154 : f32 to vector<1x1xf32>
    %180 = arith.maximumf %178, %179 : vector<1x1xf32>
    %c1_155 = arith.constant 1 : index
    %181 = memref.load %arg14[%c1_155] : memref<3xf32, #tpu.memory_space<smem>>
    %cst_156 = arith.constant 9.99999974E-6 : f32
    %182 = vector.broadcast %cst_156 : f32 to vector<1x1xf32>
    %183 = arith.addf %180, %182 : vector<1x1xf32>
    %184 = math.rsqrt %183 : vector<1x1xf32>
    %185 = vector.broadcast %181 : f32 to vector<1x1xf32>
    %186 = arith.mulf %185, %184 : vector<1x1xf32>
    %c1_157 = arith.constant 1 : index
    %187 = memref.load %arg15[%c1_157] : memref<3xf32, #tpu.memory_space<smem>>
    %188 = arith.mulf %174, %186 : vector<1x1xf32>
    %189 = vector.broadcast %187 : f32 to vector<1x1xf32>
    %190 = arith.subf %189, %188 : vector<1x1xf32>
    %191 = vector.broadcast %186 : vector<1x1xf32> to vector<8x16xf32>
    %192 = arith.mulf %161, %191 : vector<8x16xf32>
    %193 = vector.broadcast %190 : vector<1x1xf32> to vector<8x16xf32>
    %194 = arith.addf %192, %193 : vector<8x16xf32>
    %195 = arith.addf %122, %194 : vector<8x16xf32>
    %cst_158 = arith.constant 0.000000e+00 : f32
    %196 = vector.broadcast %cst_158 : f32 to vector<8x16xf32>
    %197 = arith.subf %196, %195 : vector<8x16xf32>
    %198 = math.exp %197 : vector<8x16xf32>
    %cst_159 = arith.constant 1.000000e+00 : f32
    %199 = vector.broadcast %cst_159 : f32 to vector<8x16xf32>
    %200 = arith.addf %199, %198 : vector<8x16xf32>
    %cst_160 = arith.constant 1.000000e+00 : f32
    %201 = vector.broadcast %cst_160 : f32 to vector<8x16xf32>
    %202 = arith.divf %201, %200 : vector<8x16xf32>
    %c0_161 = arith.constant 0 : index
    %c0_162 = arith.constant 0 : index
    %203 = vector.load %arg16[%c0_161, %c0_162] : memref<8x16xf32, #tpu.memory_space<vmem>>, vector<8x16xf32>
    tpu.vector_store %arg16[%c0_161, %c0_162], %202 {strides = array<i32>} : memref<8x16xf32, #tpu.memory_space<vmem>>, vector<8x16xf32>,
    %cst_163 = arith.constant dense<0.000000e+00> : vector<8x16xf32>
    %204 = tpu.matmul %202, %7, %cst_163 {dimension_numbers = #tpu.dot_dimension_numbers<[1], [0], [0], [1], [0, 0, 1, 1], [], []>} : vector<8x16xf32>, vector<16x16xf32>, vector<8x16xf32> -> vector<8x16xf32>
    %cst_164 = arith.constant dense<0.000000e+00> : vector<8x16xf32>
    %205 = tpu.matmul %202, %9, %cst_164 {dimension_numbers = #tpu.dot_dimension_numbers<[1], [0], [0], [1], [0, 0, 1, 1], [], []>} : vector<8x16xf32>, vector<16x16xf32>, vector<8x16xf32> -> vector<8x16xf32>
    %cst_165 = arith.constant dense<0.000000e+00> : vector<8x16xf32>
    %206 = tpu.matmul %202, %11, %cst_165 {dimension_numbers = #tpu.dot_dimension_numbers<[1], [0], [0], [1], [0, 0, 1, 1], [], []>} : vector<8x16xf32>, vector<16x16xf32>, vector<8x16xf32> -> vector<8x16xf32>
    %c5 = arith.constant 5 : index
    %c0_166 = arith.constant 0 : index
    %c0_167 = arith.constant 0 : index
    %c0_168 = arith.constant 0 : index
    %207 = vector.load %arg5[%c5, %c0_166, %c0_167, %c0_168] : memref<8x3x8x8xf32, #tpu.memory_space<vmem>>, vector<1x1x8x8xf32>
    %208 = vector.shape_cast %207 : vector<1x1x8x8xf32> to vector<8x8xf32>
    %cst_169 = arith.constant dense<0.000000e+00> : vector<8x16xf32>
    %209 = tpu.matmul %208, %204, %cst_169 {dimension_numbers = #tpu.dot_dimension_numbers<[1], [0], [0], [1], [0, 0, 1, 1], [], []>} : vector<8x8xf32>, vector<8x16xf32>, vector<8x16xf32> -> vector<8x16xf32>
    %c5_170 = arith.constant 5 : index
    %c1_171 = arith.constant 1 : index
    %c0_172 = arith.constant 0 : index
    %c0_173 = arith.constant 0 : index
    %210 = vector.load %arg5[%c5_170, %c1_171, %c0_172, %c0_173] : memref<8x3x8x8xf32, #tpu.memory_space<vmem>>, vector<1x1x8x8xf32>
    %211 = vector.shape_cast %210 : vector<1x1x8x8xf32> to vector<8x8xf32>
    %cst_174 = arith.constant dense<0.000000e+00> : vector<8x16xf32>
    %212 = tpu.matmul %211, %205, %cst_174 {dimension_numbers = #tpu.dot_dimension_numbers<[1], [0], [0], [1], [0, 0, 1, 1], [], []>} : vector<8x8xf32>, vector<8x16xf32>, vector<8x16xf32> -> vector<8x16xf32>
    %213 = arith.addf %209, %212 : vector<8x16xf32>
    %c5_175 = arith.constant 5 : index
    %c2_176 = arith.constant 2 : index
    %c0_177 = arith.constant 0 : index
    %c0_178 = arith.constant 0 : index
    %214 = vector.load %arg5[%c5_175, %c2_176, %c0_177, %c0_178] : memref<8x3x8x8xf32, #tpu.memory_space<vmem>>, vector<1x1x8x8xf32>
    %215 = vector.shape_cast %214 : vector<1x1x8x8xf32> to vector<8x8xf32>
    %cst_179 = arith.constant dense<0.000000e+00> : vector<8x16xf32>
    %216 = tpu.matmul %215, %206, %cst_179 {dimension_numbers = #tpu.dot_dimension_numbers<[1], [0], [0], [1], [0, 0, 1, 1], [], []>} : vector<8x8xf32>, vector<8x16xf32>, vector<8x16xf32> -> vector<8x16xf32>
    %217 = arith.addf %213, %216 : vector<8x16xf32>
    %c5_180 = arith.constant 5 : index
    %218 = memref.load %arg13[%c5_180] : memref<8xf32, #tpu.memory_space<smem>>
    %219 = vector.broadcast %218 : f32 to vector<8x16xf32>
    %220 = arith.addf %217, %219 : vector<8x16xf32>
    %cst_181 = arith.constant dense<0.000000e+00> : vector<8x32xf32>
    %221 = tpu.matmul %220, %31, %cst_181 {dimension_numbers = #tpu.dot_dimension_numbers<[1], [0], [0], [1], [0, 0, 1, 1], [], []>} : vector<8x16xf32>, vector<16x32xf32>, vector<8x32xf32> -> vector<8x32xf32>
    %cst_182 = arith.constant dense<0.000000e+00> : vector<16x32xf32>
    %222 = tpu.matmul %30, %221, %cst_182 {dimension_numbers = #tpu.dot_dimension_numbers<[1], [0], [0], [1], [0, 0, 1, 1], [], []>} : vector<16x8xf32>, vector<8x32xf32>, vector<16x32xf32> -> vector<16x32xf32>
    %cst_183 = arith.constant dense<0.000000e+00> : vector<16x32xf32>
    %223 = tpu.matmul %222, %1, %cst_183 {dimension_numbers = #tpu.dot_dimension_numbers<[1], [0], [0], [1], [0, 0, 1, 1], [], []>} : vector<16x32xf32>, vector<32x32xf32>, vector<16x32xf32> -> vector<16x32xf32>
    %cst_184 = arith.constant dense<0.000000e+00> : vector<16x32xf32>
    %224 = tpu.matmul %222, %3, %cst_184 {dimension_numbers = #tpu.dot_dimension_numbers<[1], [0], [0], [1], [0, 0, 1, 1], [], []>} : vector<16x32xf32>, vector<32x32xf32>, vector<16x32xf32> -> vector<16x32xf32>
    %cst_185 = arith.constant dense<0.000000e+00> : vector<16x32xf32>
    %225 = tpu.matmul %222, %5, %cst_185 {dimension_numbers = #tpu.dot_dimension_numbers<[1], [0], [0], [1], [0, 0, 1, 1], [], []>} : vector<16x32xf32>, vector<32x32xf32>, vector<16x32xf32> -> vector<16x32xf32>
    %c6 = arith.constant 6 : index
    %c0_186 = arith.constant 0 : index
    %c0_187 = arith.constant 0 : index
    %c0_188 = arith.constant 0 : index
    %226 = vector.load %arg4[%c6, %c0_186, %c0_187, %c0_188] : memref<8x3x16x16xf32, #tpu.memory_space<vmem>>, vector<1x1x16x16xf32>
    %227 = vector.shape_cast %226 : vector<1x1x16x16xf32> to vector<16x16xf32>
    %cst_189 = arith.constant dense<0.000000e+00> : vector<16x32xf32>
    %228 = tpu.matmul %227, %223, %cst_189 {dimension_numbers = #tpu.dot_dimension_numbers<[1], [0], [0], [1], [0, 0, 1, 1], [], []>} : vector<16x16xf32>, vector<16x32xf32>, vector<16x32xf32> -> vector<16x32xf32>
    %c6_190 = arith.constant 6 : index
    %c1_191 = arith.constant 1 : index
    %c0_192 = arith.constant 0 : index
    %c0_193 = arith.constant 0 : index
    %229 = vector.load %arg4[%c6_190, %c1_191, %c0_192, %c0_193] : memref<8x3x16x16xf32, #tpu.memory_space<vmem>>, vector<1x1x16x16xf32>
    %230 = vector.shape_cast %229 : vector<1x1x16x16xf32> to vector<16x16xf32>
    %cst_194 = arith.constant dense<0.000000e+00> : vector<16x32xf32>
    %231 = tpu.matmul %230, %224, %cst_194 {dimension_numbers = #tpu.dot_dimension_numbers<[1], [0], [0], [1], [0, 0, 1, 1], [], []>} : vector<16x16xf32>, vector<16x32xf32>, vector<16x32xf32> -> vector<16x32xf32>
    %232 = arith.addf %228, %231 : vector<16x32xf32>
    %c6_195 = arith.constant 6 : index
    %c2_196 = arith.constant 2 : index
    %c0_197 = arith.constant 0 : index
    %c0_198 = arith.constant 0 : index
    %233 = vector.load %arg4[%c6_195, %c2_196, %c0_197, %c0_198] : memref<8x3x16x16xf32, #tpu.memory_space<vmem>>, vector<1x1x16x16xf32>
    %234 = vector.shape_cast %233 : vector<1x1x16x16xf32> to vector<16x16xf32>
    %cst_199 = arith.constant dense<0.000000e+00> : vector<16x32xf32>
    %235 = tpu.matmul %234, %225, %cst_199 {dimension_numbers = #tpu.dot_dimension_numbers<[1], [0], [0], [1], [0, 0, 1, 1], [], []>} : vector<16x16xf32>, vector<16x32xf32>, vector<16x32xf32> -> vector<16x32xf32>
    %236 = arith.addf %232, %235 : vector<16x32xf32>
    %237 = vector.shape_cast %236 : vector<16x32xf32> to vector<1x16x32xf32>
    %cst_200 = arith.constant dense<0.000000e+00> : vector<1xf32>
    %238 = vector.multi_reduction <add>, %237, %cst_200 [1, 2] : vector<1x16x32xf32> to vector<1xf32>
    %239 = vector.shape_cast %238 : vector<1xf32> to vector<1x1x1xf32>
    %240 = vector.extract %239[0, 0, 0] : f32 from vector<1x1x1xf32>
    %241 = vector.broadcast %240 : f32 to vector<1x1xf32>
    %242 = arith.mulf %236, %236 : vector<16x32xf32>
    %243 = vector.shape_cast %242 : vector<16x32xf32> to vector<1x16x32xf32>
    %cst_201 = arith.constant dense<0.000000e+00> : vector<1xf32>
    %244 = vector.multi_reduction <add>, %243, %cst_201 [1, 2] : vector<1x16x32xf32> to vector<1xf32>
    %245 = vector.shape_cast %244 : vector<1xf32> to vector<1x1x1xf32>
    %246 = vector.extract %245[0, 0, 0] : f32 from vector<1x1x1xf32>
    %247 = vector.broadcast %246 : f32 to vector<1x1xf32>
    %cst_202 = arith.constant 5.120000e+02 : f32
    %248 = vector.broadcast %cst_202 : f32 to vector<1x1xf32>
    %249 = arith.divf %241, %248 : vector<1x1xf32>
    %cst_203 = arith.constant 5.120000e+02 : f32
    %250 = vector.broadcast %cst_203 : f32 to vector<1x1xf32>
    %251 = arith.divf %247, %250 : vector<1x1xf32>
    %252 = arith.mulf %249, %249 : vector<1x1xf32>
    %253 = arith.subf %251, %252 : vector<1x1xf32>
    %cst_204 = arith.constant 0.000000e+00 : f32
    %254 = vector.broadcast %cst_204 : f32 to vector<1x1xf32>
    %255 = arith.maximumf %253, %254 : vector<1x1xf32>
    %c2_205 = arith.constant 2 : index
    %256 = memref.load %arg14[%c2_205] : memref<3xf32, #tpu.memory_space<smem>>
    %cst_206 = arith.constant 9.99999974E-6 : f32
    %257 = vector.broadcast %cst_206 : f32 to vector<1x1xf32>
    %258 = arith.addf %255, %257 : vector<1x1xf32>
    %259 = math.rsqrt %258 : vector<1x1xf32>
    %260 = vector.broadcast %256 : f32 to vector<1x1xf32>
    %261 = arith.mulf %260, %259 : vector<1x1xf32>
    %c2_207 = arith.constant 2 : index
    %262 = memref.load %arg15[%c2_207] : memref<3xf32, #tpu.memory_space<smem>>
    %263 = arith.mulf %249, %261 : vector<1x1xf32>
    %264 = vector.broadcast %262 : f32 to vector<1x1xf32>
    %265 = arith.subf %264, %263 : vector<1x1xf32>
    %266 = vector.broadcast %261 : vector<1x1xf32> to vector<16x32xf32>
    %267 = arith.mulf %236, %266 : vector<16x32xf32>
    %268 = vector.broadcast %265 : vector<1x1xf32> to vector<16x32xf32>
    %269 = arith.addf %267, %268 : vector<16x32xf32>
    %cst_208 = arith.constant dense<0.000000e+00> : vector<16x32xf32>
    %270 = tpu.matmul %269, %1, %cst_208 {dimension_numbers = #tpu.dot_dimension_numbers<[1], [0], [0], [1], [0, 0, 1, 1], [], []>} : vector<16x32xf32>, vector<32x32xf32>, vector<16x32xf32> -> vector<16x32xf32>
    %cst_209 = arith.constant dense<0.000000e+00> : vector<16x32xf32>
    %271 = tpu.matmul %269, %3, %cst_209 {dimension_numbers = #tpu.dot_dimension_numbers<[1], [0], [0], [1], [0, 0, 1, 1], [], []>} : vector<16x32xf32>, vector<32x32xf32>, vector<16x32xf32> -> vector<16x32xf32>
    %cst_210 = arith.constant dense<0.000000e+00> : vector<16x32xf32>
    %272 = tpu.matmul %269, %5, %cst_210 {dimension_numbers = #tpu.dot_dimension_numbers<[1], [0], [0], [1], [0, 0, 1, 1], [], []>} : vector<16x32xf32>, vector<32x32xf32>, vector<16x32xf32> -> vector<16x32xf32>
    %c7 = arith.constant 7 : index
    %c0_211 = arith.constant 0 : index
    %c0_212 = arith.constant 0 : index
    %c0_213 = arith.constant 0 : index
    %273 = vector.load %arg4[%c7, %c0_211, %c0_212, %c0_213] : memref<8x3x16x16xf32, #tpu.memory_space<vmem>>, vector<1x1x16x16xf32>
    %274 = vector.shape_cast %273 : vector<1x1x16x16xf32> to vector<16x16xf32>
    %cst_214 = arith.constant dense<0.000000e+00> : vector<16x32xf32>
    %275 = tpu.matmul %274, %270, %cst_214 {dimension_numbers = #tpu.dot_dimension_numbers<[1], [0], [0], [1], [0, 0, 1, 1], [], []>} : vector<16x16xf32>, vector<16x32xf32>, vector<16x32xf32> -> vector<16x32xf32>
    %c7_215 = arith.constant 7 : index
    %c1_216 = arith.constant 1 : index
    %c0_217 = arith.constant 0 : index
    %c0_218 = arith.constant 0 : index
    %276 = vector.load %arg4[%c7_215, %c1_216, %c0_217, %c0_218] : memref<8x3x16x16xf32, #tpu.memory_space<vmem>>, vector<1x1x16x16xf32>
    %277 = vector.shape_cast %276 : vector<1x1x16x16xf32> to vector<16x16xf32>
    %cst_219 = arith.constant dense<0.000000e+00> : vector<16x32xf32>
    %278 = tpu.matmul %277, %271, %cst_219 {dimension_numbers = #tpu.dot_dimension_numbers<[1], [0], [0], [1], [0, 0, 1, 1], [], []>} : vector<16x16xf32>, vector<16x32xf32>, vector<16x32xf32> -> vector<16x32xf32>
    %279 = arith.addf %275, %278 : vector<16x32xf32>
    %c7_220 = arith.constant 7 : index
    %c2_221 = arith.constant 2 : index
    %c0_222 = arith.constant 0 : index
    %c0_223 = arith.constant 0 : index
    %280 = vector.load %arg4[%c7_220, %c2_221, %c0_222, %c0_223] : memref<8x3x16x16xf32, #tpu.memory_space<vmem>>, vector<1x1x16x16xf32>
    %281 = vector.shape_cast %280 : vector<1x1x16x16xf32> to vector<16x16xf32>
    %cst_224 = arith.constant dense<0.000000e+00> : vector<16x32xf32>
    %282 = tpu.matmul %281, %272, %cst_224 {dimension_numbers = #tpu.dot_dimension_numbers<[1], [0], [0], [1], [0, 0, 1, 1], [], []>} : vector<16x16xf32>, vector<16x32xf32>, vector<16x32xf32> -> vector<16x32xf32>
    %283 = arith.addf %279, %282 : vector<16x32xf32>
    %c7_225 = arith.constant 7 : index
    %284 = memref.load %arg13[%c7_225] : memref<8xf32, #tpu.memory_space<smem>>
    %285 = vector.broadcast %284 : f32 to vector<16x32xf32>
    %286 = arith.addf %283, %285 : vector<16x32xf32>
    %cst_226 = arith.constant 0.000000e+00 : f32
    %287 = vector.broadcast %cst_226 : f32 to vector<16x32xf32>
    %288 = arith.subf %287, %286 : vector<16x32xf32>
    %289 = math.exp %288 : vector<16x32xf32>
    %cst_227 = arith.constant 1.000000e+00 : f32
    %290 = vector.broadcast %cst_227 : f32 to vector<16x32xf32>
    %291 = arith.addf %290, %289 : vector<16x32xf32>
    %292 = tpu.reciprocal %291 {approx = true} : vector<16x32xf32> -> vector<16x32xf32>
    %293 = arith.subf %32, %292 : vector<16x32xf32>
    %294 = arith.mulf %293, %293 : vector<16x32xf32>
    %295 = vector.shape_cast %294 : vector<16x32xf32> to vector<1x16x32xf32>
    %cst_228 = arith.constant dense<0.000000e+00> : vector<1xf32>
    %296 = vector.multi_reduction <add>, %295, %cst_228 [1, 2] : vector<1x16x32xf32> to vector<1xf32>
    %297 = vector.shape_cast %296 : vector<1xf32> to vector<1x1x1xf32>
    %298 = vector.extract %297[0, 0, 0] : f32 from vector<1x1x1xf32>
    %299 = vector.broadcast %298 : f32 to vector<1x1xf32>
    %cst_229 = arith.constant 5.120000e+02 : f32
    %300 = vector.broadcast %cst_229 : f32 to vector<1x1xf32>
    %301 = arith.divf %299, %300 : vector<1x1xf32>
    %c0_230 = arith.constant 0 : index
    %c0_231 = arith.constant 0 : index
    %302 = vector.load %arg17[%c0_230, %c0_231] : memref<1x1xf32, #tpu.memory_space<vmem>>, vector<1x1xf32>
    tpu.vector_store %arg17[%c0_230, %c0_231], %301 {strides = array<i32>} : memref<1x1xf32, #tpu.memory_space<vmem>>, vector<1x1xf32>,
    return
  }
}

</mosaic_0001>

<llo_original>
// kernel: tpu_custom_call.1
$region0: #{tpu_custom_call.1}
  #allocation0 [shape = 'u32[]', space=smem, size = 0x4, offset = 0x4, fixed_abs, tag = 'smem constant byte address 0x4 - core index']
  #allocation1 [shape = 'u32[144,128]{1,0:T(1,128)}', space=vmem, size = 0x12000, scoped, tag = 'internal scratch']
  %s0 = inlined_call_operand.hbm [shape: f32[16,32], index: 0, kind: input, shape index: {}]
  %s1 = inlined_call_operand.vmem [shape: f32[3,32,32], index: 1, kind: input, shape index: {}]
  %s2 = inlined_call_operand.vmem [shape: f32[3,16,16], index: 2, kind: input, shape index: {}]
  %s3 = inlined_call_operand.vmem [shape: f32[3,32,16], index: 3, kind: input, shape index: {}]
  %s4 = inlined_call_operand.hbm [shape: f32[8,3,16,16], index: 4, kind: input, shape index: {}]
  %s5 = inlined_call_operand.hbm [shape: f32[8,3,8,8], index: 5, kind: input, shape index: {}]
  %s6 = inlined_call_operand.vmem [shape: f32[3,8,16], index: 6, kind: input, shape index: {}]
  %s7 = inlined_call_operand.vmem [shape: f32[3,8,16], index: 7, kind: input, shape index: {}]
  %s8 = inlined_call_operand.vmem [shape: f32[16,8], index: 8, kind: input, shape index: {}]
  %s9 = inlined_call_operand.hbm [shape: f32[16,32], index: 9, kind: input, shape index: {}]
  %s10 = inlined_call_operand.hbm [shape: f32[16,32], index: 10, kind: input, shape index: {}]
  %s11 = inlined_call_operand.vmem [shape: f32[16,32], index: 11, kind: input, shape index: {}]
  %s12 = inlined_call_operand.hbm [shape: f32[8,16], index: 12, kind: input, shape index: {}]
  %s13 = inlined_call_operand.vmem [shape: f32[8], index: 13, kind: input, shape index: {}]
  %s14 = inlined_call_operand.vmem [shape: f32[3], index: 14, kind: input, shape index: {}]
  %s15 = inlined_call_operand.vmem [shape: f32[3], index: 15, kind: input, shape index: {}]
  %s16 = inlined_call_operand.hbm [shape: f32[8,16], index: 16, kind: output, shape index: {0}]
  %s17 = inlined_call_operand.hbm [shape: f32[1,1], index: 17, kind: output, shape index: {1}]
  %18 = xla_tuple %s16, %s17
  %s19 = sld [smem:[#allocation0]]
  $region118: #{tpu_custom_call.1} parent=0
    _
  %s21 = ssub.s32 1, %s19
  %s22 = scalar_select 0, %s21, %s19
  $region1: #{tpu_custom_call.1} parent=0
    #allocation2 [shape = 'u8[8192]{0}', space=vmem, size = 0x2000, scoped, tag = 'input window, operand 0, single buffered']
    #allocation3 [shape = 's32[1]{0}', space=sflag, size = 0x4, scoped, tag = 'scoped memory for tpu_custom_call.1']
    #allocation4 [shape = 's32[1]{0}', space=sflag, size = 0x4, scoped, tag = 'scoped memory for tpu_custom_call.1']
    #allocation5 [shape = 's32[1]{0}', space=sflag, size = 0x4, scoped, tag = 'scoped memory for tpu_custom_call.1']
    #allocation6 [shape = 'u8[196608]{0}', space=vmem, size = 0x30000, scoped, tag = 'input window, operand 4, single buffered']
    #allocation7 [shape = 's32[1]{0}', space=sflag, size = 0x4, scoped, tag = 'scoped memory for tpu_custom_call.1']
    #allocation8 [shape = 'u8[98304]{0}', space=vmem, size = 0x18000, scoped, tag = 'input window, operand 5, single buffered']
    #allocation9 [shape = 'u8[8192]{0}', space=vmem, size = 0x2000, scoped, tag = 'input window, operand 9, single buffered']
    #allocation10 [shape = 's32[1]{0}', space=sflag, size = 0x4, scoped, tag = 'scoped memory for tpu_custom_call.1']
    #allocation11 [shape = 'u8[8192]{0}', space=vmem, size = 0x2000, scoped, tag = 'input window, operand 10, single buffered']
    #allocation12 [shape = 'u8[4096]{0}', space=vmem, size = 0x1000, scoped, tag = 'input window, operand 12, single buffered']
    #allocation13 [shape = 's32[1]{0}', space=sflag, size = 0x4, scoped, tag = 'scoped memory for tpu_custom_call.1']
    #allocation14 [shape = 'u8[512]{0}', space=smem, size = 0x200, scoped, tag = 'input window, operand 13, single buffered']
    #allocation15 [shape = 'u8[512]{0}', space=smem, size = 0x200, scoped, tag = 'input window, operand 14, single buffered']
    #allocation16 [shape = 's32[1]{0}', space=sflag, size = 0x4, scoped, tag = 'scoped memory for tpu_custom_call.1']
    #allocation17 [shape = 'u8[512]{0}', space=smem, size = 0x200, scoped, tag = 'input window, operand 15, single buffered']
    #allocation18 [shape = 'u8[4096]{0}', space=vmem, size = 0x1000, scoped, tag = 'output window, operand 0, single buffered']
    #allocation19 [shape = 'u8[512]{0}', space=vmem, size = 0x400, scoped, tag = 'output window, operand 1, single buffered']
    #allocation20 [shape = 's32[1]{0}', space=sflag, size = 0x4, scoped, tag = 'scoped memory for tpu_custom_call.1']
    %23 = vsyncpa [#allocation3], 0
    %24 = vsyncpa [#allocation7], 0
    %25 = vsyncpa [#allocation10], 0
    %26 = vsyncpa [#allocation13], 0
    %27 = vsyncpa [#allocation5], 0
    %28 = vsyncpa [#allocation16], 0
    %29 = vsyncpa [#allocation4], 0
    %30 = vsyncpa [#allocation20], 0
    // Predicated region
    $region2: #{tpu_custom_call.1} parent=1 // pred_check
      _
    $region3: #{tpu_custom_call.1} parent=1 // pred_check_branch
      %32 = sbr.rel (0) target = $region5
    $region4: #{tpu_custom_call.1} parent=1 // pred_region
      %s34 = ssub.s32 256, 256
      %35 = vsyncadd [#allocation3], %s34
      %s36 = sshll.u32 [#allocation2], 4
      %s37 = int_to_ptr.vmem [resolvable:$true] %s36
      %42 = dma.hbm_to_vmem [thread:$0]  %s0, 256, %s37, [#allocation3], 128, 128, 8
    $region5: #{tpu_custom_call.1} parent=1 // pred_fallthru
      _
    // Predicated region
    $region6: #{tpu_custom_call.1} parent=1 // pred_check
      _
    $region7: #{tpu_custom_call.1} parent=1 // pred_check_branch
      %44 = sbr.rel (0) target = $region9
    $region8: #{tpu_custom_call.1} parent=1 // pred_region
      _
    $region9: #{tpu_custom_call.1} parent=1 // pred_fallthru
      _
    // Predicated region
    $region10: #{tpu_custom_call.1} parent=1 // pred_check
      _
    $region11: #{tpu_custom_call.1} parent=1 // pred_check_branch
      %46 = sbr.rel (0) target = $region13
    $region12: #{tpu_custom_call.1} parent=1 // pred_region
      _
    $region13: #{tpu_custom_call.1} parent=1 // pred_fallthru
      _
    // Predicated region
    $region14: #{tpu_custom_call.1} parent=1 // pred_check
      _
    $region15: #{tpu_custom_call.1} parent=1 // pred_check_branch
      %48 = sbr.rel (0) target = $region17
    $region16: #{tpu_custom_call.1} parent=1 // pred_region
      _
    $region17: #{tpu_custom_call.1} parent=1 // pred_fallthru
      _
    // Predicated region
    $region18: #{tpu_custom_call.1} parent=1 // pred_check
      _
    $region19: #{tpu_custom_call.1} parent=1 // pred_check_branch
      %50 = sbr.rel (0) target = $region21
    $region20: #{tpu_custom_call.1} parent=1 // pred_region
      %s52 = ssub.s32 6144, 6144
      %53 = vsyncadd [#allocation7], %s52
      %s54 = sshll.u32 [#allocation6], 4
      %s55 = int_to_ptr.vmem [resolvable:$true] %s54
      %60 = dma.hbm_to_vmem [thread:$0]  %s4, 6144, %s55, [#allocation7], 128, 128, 8
    $region21: #{tpu_custom_call.1} parent=1 // pred_fallthru
      _
    // Predicated region
    $region22: #{tpu_custom_call.1} parent=1 // pred_check
      _
    $region23: #{tpu_custom_call.1} parent=1 // pred_check_branch
      %62 = sbr.rel (0) target = $region25
    $region24: #{tpu_custom_call.1} parent=1 // pred_region
      %s64 = ssub.s32 3072, 3072
      %65 = vsyncadd [#allocation7], %s64
      %s66 = sshll.u32 [#allocation8], 4
      %s67 = int_to_ptr.vmem [resolvable:$true] %s66
      %72 = dma.hbm_to_vmem [thread:$0]  %s5, 3072, %s67, [#allocation7], 128, 128, 8
    $region25: #{tpu_custom_call.1} parent=1 // pred_fallthru
      _
    // Predicated region
    $region26: #{tpu_custom_call.1} parent=1 // pred_check
      _
    $region27: #{tpu_custom_call.1} parent=1 // pred_check_branch
      %74 = sbr.rel (0) target = $region29
    $region28: #{tpu_custom_call.1} parent=1 // pred_region
      _
    $region29: #{tpu_custom_call.1} parent=1 // pred_fallthru
      _
    // Predicated region
    $region30: #{tpu_custom_call.1} parent=1 // pred_check
      _
    $region31: #{tpu_custom_call.1} parent=1 // pred_check_branch
      %76 = sbr.rel (0) target = $region33
    $region32: #{tpu_custom_call.1} parent=1 // pred_region
      _
    $region33: #{tpu_custom_call.1} parent=1 // pred_fallthru
      _
    // Predicated region
    $region34: #{tpu_custom_call.1} parent=1 // pred_check
      _
    $region35: #{tpu_custom_call.1} parent=1 // pred_check_branch
      %78 = sbr.rel (0) target = $region37
    $region36: #{tpu_custom_call.1} parent=1 // pred_region
      _
    $region37: #{tpu_custom_call.1} parent=1 // pred_fallthru
      _
    // Predicated region
    $region38: #{tpu_custom_call.1} parent=1 // pred_check
      _
    $region39: #{tpu_custom_call.1} parent=1 // pred_check_branch
      %80 = sbr.rel (0) target = $region41
    $region40: #{tpu_custom_call.1} parent=1 // pred_region
      %s82 = ssub.s32 256, 256
      %83 = vsyncadd [#allocation10], %s82
      %s84 = sshll.u32 [#allocation9], 4
      %s85 = int_to_ptr.vmem [resolvable:$true] %s84
      %90 = dma.hbm_to_vmem [thread:$0]  %s9, 256, %s85, [#allocation10], 128, 128, 8
    $region41: #{tpu_custom_call.1} parent=1 // pred_fallthru
      _
    // Predicated region
    $region42: #{tpu_custom_call.1} parent=1 // pred_check
      _
    $region43: #{tpu_custom_call.1} parent=1 // pred_check_branch
      %92 = sbr.rel (0) target = $region45
    $region44: #{tpu_custom_call.1} parent=1 // pred_region
      %s94 = ssub.s32 256, 256
      %95 = vsyncadd [#allocation10], %s94
      %s96 = sshll.u32 [#allocation11], 4
      %s97 = int_to_ptr.vmem [resolvable:$true] %s96
      %102 = dma.hbm_to_vmem [thread:$0]  %s10, 256, %s97, [#allocation10], 128, 128, 8
    $region45: #{tpu_custom_call.1} parent=1 // pred_fallthru
      _
    // Predicated region
    $region46: #{tpu_custom_call.1} parent=1 // pred_check
      _
    $region47: #{tpu_custom_call.1} parent=1 // pred_check_branch
      %104 = sbr.rel (0) target = $region49
    $region48: #{tpu_custom_call.1} parent=1 // pred_region
      _
    $region49: #{tpu_custom_call.1} parent=1 // pred_fallthru
      _
    // Predicated region
    $region50: #{tpu_custom_call.1} parent=1 // pred_check
      _
    $region51: #{tpu_custom_call.1} parent=1 // pred_check_branch
      %106 = sbr.rel (0) target = $region53
    $region52: #{tpu_custom_call.1} parent=1 // pred_region
      %s108 = ssub.s32 128, 128
      %109 = vsyncadd [#allocation13], %s108
      %s111 = sshll.u32 [#allocation12], 4
      %s112 = int_to_ptr.vmem [resolvable:$true] %s111
      %114 = dma.hbm_to_vmem [thread:$0]  %s12, 128, %s112, [#allocation13]
    $region53: #{tpu_custom_call.1} parent=1 // pred_fallthru
      _
    // Predicated region
    $region54: #{tpu_custom_call.1} parent=1 // pred_check
      _
    $region55: #{tpu_custom_call.1} parent=1 // pred_check_branch
      %116 = sbr.rel (0) target = $region57
    $region56: #{tpu_custom_call.1} parent=1 // pred_region
      %s118 = ssub.s32 16, 16
      %119 = vsyncadd [#allocation5], %s118
      %s121 = sshll.u32 %s13, 4
      %s122 = int_to_ptr.vmem [resolvable:$true] %s121
      %124 = dma.vmem_to_smem %s122, 16, [#allocation14], [#allocation5]
    $region57: #{tpu_custom_call.1} parent=1 // pred_fallthru
      _
    // Predicated region
    $region58: #{tpu_custom_call.1} parent=1 // pred_check
      _
    $region59: #{tpu_custom_call.1} parent=1 // pred_check_branch
      %126 = sbr.rel (0) target = $region61
    $region60: #{tpu_custom_call.1} parent=1 // pred_region
      %s128 = ssub.s32 16, 16
      %129 = vsyncadd [#allocation16], %s128
      %s131 = sshll.u32 %s14, 4
      %s132 = int_to_ptr.vmem [resolvable:$true] %s131
      %134 = dma.vmem_to_smem %s132, 16, [#allocation15], [#allocation16]
    $region61: #{tpu_custom_call.1} parent=1 // pred_fallthru
      _
    // Predicated region
    $region62: #{tpu_custom_call.1} parent=1 // pred_check
      _
    $region63: #{tpu_custom_call.1} parent=1 // pred_check_branch
      %136 = sbr.rel (0) target = $region65
    $region64: #{tpu_custom_call.1} parent=1 // pred_region
      %s138 = ssub.s32 16, 16
      %139 = vsyncadd [#allocation16], %s138
      %s141 = sshll.u32 %s15, 4
      %s142 = int_to_ptr.vmem [resolvable:$true] %s141
      %144 = dma.vmem_to_smem %s142, 16, [#allocation17], [#allocation16]
    $region65: #{tpu_custom_call.1} parent=1 // pred_fallthru
      _
    // Predicated region
    $region66: #{tpu_custom_call.1} parent=1 // pred_check
      _
    $region67: #{tpu_custom_call.1} parent=1 // pred_check_branch
      %146 = sbr.rel (0) target = $region69
    $region68: #{tpu_custom_call.1} parent=1 // pred_region
      %147 = dma.done [#allocation3], 256
    $region69: #{tpu_custom_call.1} parent=1 // pred_fallthru
      _
    // Predicated region
    $region70: #{tpu_custom_call.1} parent=1 // pred_check
      _
    $region71: #{tpu_custom_call.1} parent=1 // pred_check_branch
      %149 = sbr.rel (0) target = $region73
    $region72: #{tpu_custom_call.1} parent=1 // pred_region
      %150 = dma.done [#allocation7], 6144
    $region73: #{tpu_custom_call.1} parent=1 // pred_fallthru
      _
    // Predicated region
    $region74: #{tpu_custom_call.1} parent=1 // pred_check
      _
    $region75: #{tpu_custom_call.1} parent=1 // pred_check_branch
      %152 = sbr.rel (0) target = $region77
    $region76: #{tpu_custom_call.1} parent=1 // pred_region
      %153 = dma.done [#allocation7], 3072
    $region77: #{tpu_custom_call.1} parent=1 // pred_fallthru
      _
    // Predicated region
    $region78: #{tpu_custom_call.1} parent=1 // pred_check
      _
    $region79: #{tpu_custom_call.1} parent=1 // pred_check_branch
      %155 = sbr.rel (0) target = $region81
    $region80: #{tpu_custom_call.1} parent=1 // pred_region
      %156 = dma.done [#allocation10], 256
    $region81: #{tpu_custom_call.1} parent=1 // pred_fallthru
      _
    // Predicated region
    $region82: #{tpu_custom_call.1} parent=1 // pred_check
      _
    $region83: #{tpu_custom_call.1} parent=1 // pred_check_branch
      %158 = sbr.rel (0) target = $region85
    $region84: #{tpu_custom_call.1} parent=1 // pred_region
      %159 = dma.done [#allocation10], 256
    $region85: #{tpu_custom_call.1} parent=1 // pred_fallthru
      _
    // Predicated region
    $region86: #{tpu_custom_call.1} parent=1 // pred_check
      _
    $region87: #{tpu_custom_call.1} parent=1 // pred_check_branch
      %161 = sbr.rel (0) target = $region89
    $region88: #{tpu_custom_call.1} parent=1 // pred_region
      %162 = dma.done [#allocation13], 128
    $region89: #{tpu_custom_call.1} parent=1 // pred_fallthru
      _
    // Predicated region
    $region90: #{tpu_custom_call.1} parent=1 // pred_check
      _
    $region91: #{tpu_custom_call.1} parent=1 // pred_check_branch
      %164 = sbr.rel (0) target = $region93
    $region92: #{tpu_custom_call.1} parent=1 // pred_region
      %165 = dma.done [#allocation5], 16
    $region93: #{tpu_custom_call.1} parent=1 // pred_fallthru
      _
    // Predicated region
    $region94: #{tpu_custom_call.1} parent=1 // pred_check
      _
    $region95: #{tpu_custom_call.1} parent=1 // pred_check_branch
      %167 = sbr.rel (0) target = $region97
    $region96: #{tpu_custom_call.1} parent=1 // pred_region
      %168 = dma.done [#allocation16], 16
    $region97: #{tpu_custom_call.1} parent=1 // pred_fallthru
      _
    // Predicated region
    $region98: #{tpu_custom_call.1} parent=1 // pred_check
      _
    $region99: #{tpu_custom_call.1} parent=1 // pred_check_branch
      %170 = sbr.rel (0) target = $region101
    $region100: #{tpu_custom_call.1} parent=1 // pred_region
      %171 = dma.done [#allocation16], 16
    $region101: #{tpu_custom_call.1} parent=1 // pred_fallthru
      _
    %172 = sfence
    %v173 = vld [vmem:[%s1] sm:$0xff]
    %v174 = vld [vmem:[%s1 + $0x8] sm:$0xff]
    %v175 = vld [vmem:[%s1 + $0x10] sm:$0xff]
    %v176 = vld [vmem:[%s1 + $0x18] sm:$0xff]
    %s177 = scalar_lea.vmem %s1, 32
    %v178 = vld [vmem:[%s177] sm:$0xff]
    %v179 = vld [vmem:[%s177 + $0x8] sm:$0xff]
    %v180 = vld [vmem:[%s177 + $0x10] sm:$0xff]
    %v181 = vld [vmem:[%s177 + $0x18] sm:$0xff]
    %s182 = scalar_lea.vmem %s1, 64
    %v183 = vld [vmem:[%s182] sm:$0xff]
    %v184 = vld [vmem:[%s182 + $0x8] sm:$0xff]
    %v185 = vld [vmem:[%s182 + $0x10] sm:$0xff]
    %v186 = vld [vmem:[%s182 + $0x18] sm:$0xff]
    %v187 = vld [vmem:[%s2] sm:$0xff]
    %v188 = vld [vmem:[%s2 + $0x8] sm:$0xff]
    %s189 = scalar_lea.vmem %s2, 16
    %v190 = vld [vmem:[%s189] sm:$0xff]
    %v191 = vld [vmem:[%s189 + $0x8] sm:$0xff]
    %s192 = scalar_lea.vmem %s2, 32
    %v193 = vld [vmem:[%s192] sm:$0xff]
    %v194 = vld [vmem:[%s192 + $0x8] sm:$0xff]
    %v195 = vld [vmem:[%s3] sm:$0xff]
    %v196 = vld [vmem:[%s3 + $0x8] sm:$0xff]
    %v197 = vld [vmem:[%s3 + $0x10] sm:$0xff]
    %v198 = vld [vmem:[%s3 + $0x18] sm:$0xff]
    %s199 = scalar_lea.vmem %s3, 32
    %v200 = vld [vmem:[%s199] sm:$0xff]
    %v201 = vld [vmem:[%s199 + $0x8] sm:$0xff]
    %v202 = vld [vmem:[%s199 + $0x10] sm:$0xff]
    %v203 = vld [vmem:[%s199 + $0x18] sm:$0xff]
    %s204 = scalar_lea.vmem %s3, 64
    %v205 = vld [vmem:[%s204] sm:$0xff]
    %v206 = vld [vmem:[%s204 + $0x8] sm:$0xff]
    %v207 = vld [vmem:[%s204 + $0x10] sm:$0xff]
    %v208 = vld [vmem:[%s204 + $0x18] sm:$0xff]
    %v209 = vld [vmem:[%s7] sm:$0xff]
    %s210 = scalar_lea.vmem %s7, 8
    %v211 = vld [vmem:[%s210] sm:$0xff]
    %s212 = scalar_lea.vmem %s7, 16
    %v213 = vld [vmem:[%s212] sm:$0xff]
    %v214 = vld [vmem:[%s6] sm:$0xff]
    %s215 = scalar_lea.vmem %s6, 8
    %v216 = vld [vmem:[%s215] sm:$0xff]
    %s217 = scalar_lea.vmem %s6, 16
    %v218 = vld [vmem:[%s217] sm:$0xff]
    %v219 = vld [vmem:[%s8] sm:$0xff]
    %v220 = vld [vmem:[%s8 + $0x8] sm:$0xff]
    %v221 = vld [vmem:[#allocation9] sm:$0xff]
    %v222 = vld [vmem:[#allocation9 + $0x8] sm:$0xff]
    %v223 = vld [vmem:[#allocation2] sm:$0xff]
    %v224 = vld [vmem:[#allocation2 + $0x8] sm:$0xff]
    %vm225 = vcmask 261120
    %v227 = vsel %vm225, %v223, 0
    %v230 = vsel %vm225, %v224, 0
    %232 = vmatprep.subr.mxu0 0.0
    %233 = vmatpush1.msra.mxu0 %v173
    %234 = vmatprep.subr.mxu0 0.0
    %235 = vmatpush1.msra.mxu0 %v174
    %236 = vmatprep.subr.mxu0 0.0
    %237 = vmatpush1.msra.mxu0 %v175
    %238 = vmatprep.subr.mxu0 0.0
    %239 = vmatpush1.msra.mxu0 %v176
    %240 = vmatprep.subr.mxu0 0.0
    %241 = vmatpush1.msra.mxu0 0.0
    %242 = vmatprep.subr.mxu0 0.0
    %243 = vmatpush1.msra.mxu0 0.0
    %244 = vmatprep.subr.mxu0 0.0
    %245 = vmatpush1.msra.mxu0 0.0
    %246 = vmatprep.subr.mxu0 0.0
    %247 = vmatpush1.msra.mxu0 0.0
    %248 = vmatprep.subr.mxu0 0.0
    %249 = vmatpush1.msra.mxu0 0.0
    %250 = vmatprep.subr.mxu0 0.0
    %251 = vmatpush1.msra.mxu0 0.0
    %252 = vmatprep.subr.mxu0 0.0
    %253 = vmatpush1.msra.mxu0 0.0
    %254 = vmatprep.subr.mxu0 0.0
    %255 = vmatpush1.msra.mxu0 0.0
    %256 = vmatprep.subr.mxu0 0.0
    %257 = vmatpush1.msra.mxu0 0.0
    %258 = vmatprep.subr.mxu0 0.0
    %259 = vmatpush1.msra.mxu0 0.0
    %260 = vmatprep.subr.mxu0 0.0
    %261 = vmatpush1.msra.mxu0 0.0
    %262 = vmatprep.subr.mxu0 0.0
    %263 = vmatpush1.msra.mxu0 0.0
    %264 = vmatprep.subr.mxu0 0.0
    %265 = vmatpush1.msra.mxu0 0.0
    %266 = vmatprep.subr.mxu0 0.0
    %267 = vmatpush1.msra.mxu0 0.0
    %268 = vmatprep.subr.mxu0 0.0
    %269 = vmatpush1.msra.mxu0 0.0
    %270 = vmatprep.subr.mxu0 0.0
    %271 = vmatpush1.msra.mxu0 0.0
    %272 = vmatprep.subr.mxu0 0.0
    %273 = vmatpush1.msra.mxu0 0.0
    %274 = vmatprep.subr.mxu0 0.0
    %275 = vmatpush1.msra.mxu0 0.0
    %276 = vmatprep.subr.mxu0 0.0
    %277 = vmatpush1.msra.mxu0 0.0
    %278 = vmatprep.subr.mxu0 0.0
    %279 = vmatpush1.msra.mxu0 0.0
    %280 = vmatprep.subr.mxu0 0.0
    %281 = vmatpush1.msra.mxu0 0.0
    %282 = vmatprep.subr.mxu0 0.0
    %283 = vmatpush1.msra.mxu0 0.0
    %284 = vmatprep.subr.mxu0 0.0
    %285 = vmatpush1.msra.mxu0 0.0
    %286 = vmatprep.subr.mxu0 0.0
    %287 = vmatpush1.msra.mxu0 0.0
    %288 = vmatprep.subr.mxu0 0.0
    %289 = vmatpush1.msra.mxu0 0.0
    %290 = vmatprep.subr.mxu0 0.0
    %291 = vmatpush1.msra.mxu0 0.0
    %292 = vmatprep.subr.mxu0 0.0
    %293 = vmatpush1.msra.mxu0 0.0
    %294 = vmatprep.subr.mxu0 0.0
    %295 = vmatpush1.msra.mxu0 0.0
    %296 = vmatprep.mubr.f32.mxu0 0.0
    %297 = vmatmul.mubr.f32.gmra.mrb[0].mxu0 %v227
    %v298 = vpop.f32.mrb[0].mxu0
    %v299 = vadd.f32 0.0, %v298
    %v300 = vpop.f32.mrb[0].mxu0
    %301 = vmatprep.mubr.f32.mxu0 0.0
    %302 = vmatmul.mubr.f32.gmra.mrb[0].mxu0 %v230
    %v303 = vpop.f32.mrb[0].mxu0
    %v304 = vadd.f32 0.0, %v303
    %v305 = vpop.f32.mrb[0].mxu0
    %306 = vdwg.mxu0
    %307 = vmatprep.subr.mxu0 0.0
    %308 = vmatpush1.msra.mxu0 %v178
    %309 = vmatprep.subr.mxu0 0.0
    %310 = vmatpush1.msra.mxu0 %v179
    %311 = vmatprep.subr.mxu0 0.0
    %312 = vmatpush1.msra.mxu0 %v180
    %313 = vmatprep.subr.mxu0 0.0
    %314 = vmatpush1.msra.mxu0 %v181
    %315 = vmatprep.subr.mxu0 0.0
    %316 = vmatpush1.msra.mxu0 0.0
    %317 = vmatprep.subr.mxu0 0.0
    %318 = vmatpush1.msra.mxu0 0.0
    %319 = vmatprep.subr.mxu0 0.0
    %320 = vmatpush1.msra.mxu0 0.0
    %321 = vmatprep.subr.mxu0 0.0
    %322 = vmatpush1.msra.mxu0 0.0
    %323 = vmatprep.subr.mxu0 0.0
    %324 = vmatpush1.msra.mxu0 0.0
    %325 = vmatprep.subr.mxu0 0.0
    %326 = vmatpush1.msra.mxu0 0.0
    %327 = vmatprep.subr.mxu0 0.0
    %328 = vmatpush1.msra.mxu0 0.0
    %329 = vmatprep.subr.mxu0 0.0
    %330 = vmatpush1.msra.mxu0 0.0
    %331 = vmatprep.subr.mxu0 0.0
    %332 = vmatpush1.msra.mxu0 0.0
    %333 = vmatprep.subr.mxu0 0.0
    %334 = vmatpush1.msra.mxu0 0.0
    %335 = vmatprep.subr.mxu0 0.0
    %336 = vmatpush1.msra.mxu0 0.0
    %337 = vmatprep.subr.mxu0 0.0
    %338 = vmatpush1.msra.mxu0 0.0
    %339 = vmatprep.subr.mxu0 0.0
    %340 = vmatpush1.msra.mxu0 0.0
    %341 = vmatprep.subr.mxu0 0.0
    %342 = vmatpush1.msra.mxu0 0.0
    %343 = vmatprep.subr.mxu0 0.0
    %344 = vmatpush1.msra.mxu0 0.0
    %345 = vmatprep.subr.mxu0 0.0
    %346 = vmatpush1.msra.mxu0 0.0
    %347 = vmatprep.subr.mxu0 0.0
    %348 = vmatpush1.msra.mxu0 0.0
    %349 = vmatprep.subr.mxu0 0.0
    %350 = vmatpush1.msra.mxu0 0.0
    %351 = vmatprep.subr.mxu0 0.0
    %352 = vmatpush1.msra.mxu0 0.0
    %353 = vmatprep.subr.mxu0 0.0
    %354 = vmatpush1.msra.mxu0 0.0
    %355 = vmatprep.subr.mxu0 0.0
    %356 = vmatpush1.msra.mxu0 0.0
    %357 = vmatprep.subr.mxu0 0.0
    %358 = vmatpush1.msra.mxu0 0.0
    %359 = vmatprep.subr.mxu0 0.0
    %360 = vmatpush1.msra.mxu0 0.0
    %361 = vmatprep.subr.mxu0 0.0
    %362 = vmatpush1.msra.mxu0 0.0
    %363 = vmatprep.subr.mxu0 0.0
    %364 = vmatpush1.msra.mxu0 0.0
    %365 = vmatprep.subr.mxu0 0.0
    %366 = vmatpush1.msra.mxu0 0.0
    %367 = vmatprep.subr.mxu0 0.0
    %368 = vmatpush1.msra.mxu0 0.0
    %369 = vmatprep.subr.mxu0 0.0
    %370 = vmatpush1.msra.mxu0 0.0
    %371 = vmatprep.mubr.f32.mxu0 0.0
    %372 = vmatmul.mubr.f32.gmra.mrb[0].mxu0 %v227
    %v373 = vpop.f32.mrb[0].mxu0
    %v374 = vadd.f32 0.0, %v373
    %v375 = vpop.f32.mrb[0].mxu0
    %376 = vmatprep.mubr.f32.mxu0 0.0
    %377 = vmatmul.mubr.f32.gmra.mrb[0].mxu0 %v230
    %v378 = vpop.f32.mrb[0].mxu0
    %v379 = vadd.f32 0.0, %v378
    %v380 = vpop.f32.mrb[0].mxu0
    %381 = vdwg.mxu0
    %382 = vmatprep.subr.mxu0 0.0
    %383 = vmatpush1.msra.mxu0 %v183
    %384 = vmatprep.subr.mxu0 0.0
    %385 = vmatpush1.msra.mxu0 %v184
    %386 = vmatprep.subr.mxu0 0.0
    %387 = vmatpush1.msra.mxu0 %v185
    %388 = vmatprep.subr.mxu0 0.0
    %389 = vmatpush1.msra.mxu0 %v186
    %390 = vmatprep.subr.mxu0 0.0
    %391 = vmatpush1.msra.mxu0 0.0
    %392 = vmatprep.subr.mxu0 0.0
    %393 = vmatpush1.msra.mxu0 0.0
    %394 = vmatprep.subr.mxu0 0.0
    %395 = vmatpush1.msra.mxu0 0.0
    %396 = vmatprep.subr.mxu0 0.0
    %397 = vmatpush1.msra.mxu0 0.0
    %398 = vmatprep.subr.mxu0 0.0
    %399 = vmatpush1.msra.mxu0 0.0
    %400 = vmatprep.subr.mxu0 0.0
    %401 = vmatpush1.msra.mxu0 0.0
    %402 = vmatprep.subr.mxu0 0.0
    %403 = vmatpush1.msra.mxu0 0.0
    %404 = vmatprep.subr.mxu0 0.0
    %405 = vmatpush1.msra.mxu0 0.0
    %406 = vmatprep.subr.mxu0 0.0
    %407 = vmatpush1.msra.mxu0 0.0
    %408 = vmatprep.subr.mxu0 0.0
    %409 = vmatpush1.msra.mxu0 0.0
    %410 = vmatprep.subr.mxu0 0.0
    %411 = vmatpush1.msra.mxu0 0.0
    %412 = vmatprep.subr.mxu0 0.0
    %413 = vmatpush1.msra.mxu0 0.0
    %414 = vmatprep.subr.mxu0 0.0
    %415 = vmatpush1.msra.mxu0 0.0
    %416 = vmatprep.subr.mxu0 0.0
    %417 = vmatpush1.msra.mxu0 0.0
    %418 = vmatprep.subr.mxu0 0.0
    %419 = vmatpush1.msra.mxu0 0.0
    %420 = vmatprep.subr.mxu0 0.0
    %421 = vmatpush1.msra.mxu0 0.0
    %422 = vmatprep.subr.mxu0 0.0
    %423 = vmatpush1.msra.mxu0 0.0
    %424 = vmatprep.subr.mxu0 0.0
    %425 = vmatpush1.msra.mxu0 0.0
    %426 = vmatprep.subr.mxu0 0.0
    %427 = vmatpush1.msra.mxu0 0.0
    %428 = vmatprep.subr.mxu0 0.0
    %429 = vmatpush1.msra.mxu0 0.0
    %430 = vmatprep.subr.mxu0 0.0
    %431 = vmatpush1.msra.mxu0 0.0
    %432 = vmatprep.subr.mxu0 0.0
    %433 = vmatpush1.msra.mxu0 0.0
    %434 = vmatprep.subr.mxu0 0.0
    %435 = vmatpush1.msra.mxu0 0.0
    %436 = vmatprep.subr.mxu0 0.0
    %437 = vmatpush1.msra.mxu0 0.0
    %438 = vmatprep.subr.mxu0 0.0
    %439 = vmatpush1.msra.mxu0 0.0
    %440 = vmatprep.subr.mxu0 0.0
    %441 = vmatpush1.msra.mxu0 0.0
    %442 = vmatprep.subr.mxu0 0.0
    %443 = vmatpush1.msra.mxu0 0.0
    %444 = vmatprep.subr.mxu0 0.0
    %445 = vmatpush1.msra.mxu0 0.0
    %446 = vmatprep.mubr.f32.mxu0 0.0
    %447 = vmatmul.mubr.f32.gmra.mrb[0].mxu0 %v227
    %v448 = vpop.f32.mrb[0].mxu0
    %v449 = vadd.f32 0.0, %v448
    %v450 = vpop.f32.mrb[0].mxu0
    %451 = vmatprep.mubr.f32.mxu0 0.0
    %452 = vmatmul.mubr.f32.gmra.mrb[0].mxu0 %v230
    %v453 = vpop.f32.mrb[0].mxu0
    %v454 = vadd.f32 0.0, %v453
    %v455 = vpop.f32.mrb[0].mxu0
    %456 = vdwg.mxu0
    %v457 = vld [vmem:[#allocation6] sm:$0xff]
    %v458 = vld [vmem:[#allocation6 + $0x8] sm:$0xff]
    %s459 = scalar_lea.vmem [#allocation6], 16
    %v460 = vld [vmem:[%s459] sm:$0xff]
    %v461 = vld [vmem:[%s459 + $0x8] sm:$0xff]
    %vm462 = vcmask 130048
    %v464 = vsel %vm462, %v460, 0
    %v467 = vsel %vm462, %v461, 0
    %469 = vmatprep.subr.mxu0 0.0
    %470 = vmatpush1.msra.mxu0 %v374
    %471 = vmatprep.subr.mxu0 0.0
    %472 = vmatpush1.msra.mxu0 %v379
    %473 = vmatprep.subr.mxu0 0.0
    %474 = vmatpush1.msra.mxu0 0.0
    %475 = vmatprep.subr.mxu0 0.0
    %476 = vmatpush1.msra.mxu0 0.0
    %477 = vmatprep.subr.mxu0 0.0
    %478 = vmatpush1.msra.mxu0 0.0
    %479 = vmatprep.subr.mxu0 0.0
    %480 = vmatpush1.msra.mxu0 0.0
    %481 = vmatprep.subr.mxu0 0.0
    %482 = vmatpush1.msra.mxu0 0.0
    %483 = vmatprep.subr.mxu0 0.0
    %484 = vmatpush1.msra.mxu0 0.0
    %485 = vmatprep.subr.mxu0 0.0
    %486 = vmatpush1.msra.mxu0 0.0
    %487 = vmatprep.subr.mxu0 0.0
    %488 = vmatpush1.msra.mxu0 0.0
    %489 = vmatprep.subr.mxu0 0.0
    %490 = vmatpush1.msra.mxu0 0.0
    %491 = vmatprep.subr.mxu0 0.0
    %492 = vmatpush1.msra.mxu0 0.0
    %493 = vmatprep.subr.mxu0 0.0
    %494 = vmatpush1.msra.mxu0 0.0
    %495 = vmatprep.subr.mxu0 0.0
    %496 = vmatpush1.msra.mxu0 0.0
    %497 = vmatprep.subr.mxu0 0.0
    %498 = vmatpush1.msra.mxu0 0.0
    %499 = vmatprep.subr.mxu0 0.0
    %500 = vmatpush1.msra.mxu0 0.0
    %501 = vmatprep.subr.mxu0 0.0
    %502 = vmatpush1.msra.mxu0 0.0
    %503 = vmatprep.subr.mxu0 0.0
    %504 = vmatpush1.msra.mxu0 0.0
    %505 = vmatprep.subr.mxu0 0.0
    %506 = vmatpush1.msra.mxu0 0.0
    %507 = vmatprep.subr.mxu0 0.0
    %508 = vmatpush1.msra.mxu0 0.0
    %509 = vmatprep.subr.mxu0 0.0
    %510 = vmatpush1.msra.mxu0 0.0
    %511 = vmatprep.subr.mxu0 0.0
    %512 = vmatpush1.msra.mxu0 0.0
    %513 = vmatprep.subr.mxu0 0.0
    %514 = vmatpush1.msra.mxu0 0.0
    %515 = vmatprep.subr.mxu0 0.0
    %516 = vmatpush1.msra.mxu0 0.0
    %517 = vmatprep.subr.mxu0 0.0
    %518 = vmatpush1.msra.mxu0 0.0
    %519 = vmatprep.subr.mxu0 0.0
    %520 = vmatpush1.msra.mxu0 0.0
    %521 = vmatprep.subr.mxu0 0.0
    %522 = vmatpush1.msra.mxu0 0.0
    %523 = vmatprep.subr.mxu0 0.0
    %524 = vmatpush1.msra.mxu0 0.0
    %525 = vmatprep.subr.mxu0 0.0
    %526 = vmatpush1.msra.mxu0 0.0
    %527 = vmatprep.subr.mxu0 0.0
    %528 = vmatpush1.msra.mxu0 0.0
    %529 = vmatprep.subr.mxu0 0.0
    %530 = vmatpush1.msra.mxu0 0.0
    %531 = vmatprep.subr.mxu0 0.0
    %532 = vmatpush1.msra.mxu0 0.0
    %533 = vmatprep.mubr.f32.mxu0 0.0
    %534 = vmatmul.mubr.f32.gmra.mrb[0].mxu0 %v464
    %v535 = vpop.f32.mrb[0].mxu0
    %v536 = vadd.f32 0.0, %v535
    %v537 = vpop.f32.mrb[0].mxu0
    %538 = vmatprep.mubr.f32.mxu0 0.0
    %539 = vmatmul.mubr.f32.gmra.mrb[0].mxu0 %v467
    %v540 = vpop.f32.mrb[0].mxu0
    %v541 = vadd.f32 0.0, %v540
    %v542 = vpop.f32.mrb[0].mxu0
    %543 = vdwg.mxu0
    %v545 = vsel %vm462, %v457, 0
    %v548 = vsel %vm462, %v458, 0
    %550 = vmatprep.subr.mxu0 0.0
    %551 = vmatpush1.msra.mxu0 %v299
    %552 = vmatprep.subr.mxu0 0.0
    %553 = vmatpush1.msra.mxu0 %v304
    %554 = vmatprep.subr.mxu0 0.0
    %555 = vmatpush1.msra.mxu0 0.0
    %556 = vmatprep.subr.mxu0 0.0
    %557 = vmatpush1.msra.mxu0 0.0
    %558 = vmatprep.subr.mxu0 0.0
    %559 = vmatpush1.msra.mxu0 0.0
    %560 = vmatprep.subr.mxu0 0.0
    %561 = vmatpush1.msra.mxu0 0.0
    %562 = vmatprep.subr.mxu0 0.0
    %563 = vmatpush1.msra.mxu0 0.0
    %564 = vmatprep.subr.mxu0 0.0
    %565 = vmatpush1.msra.mxu0 0.0
    %566 = vmatprep.subr.mxu0 0.0
    %567 = vmatpush1.msra.mxu0 0.0
    %568 = vmatprep.subr.mxu0 0.0
    %569 = vmatpush1.msra.mxu0 0.0
    %570 = vmatprep.subr.mxu0 0.0
    %571 = vmatpush1.msra.mxu0 0.0
    %572 = vmatprep.subr.mxu0 0.0
    %573 = vmatpush1.msra.mxu0 0.0
    %574 = vmatprep.subr.mxu0 0.0
    %575 = vmatpush1.msra.mxu0 0.0
    %576 = vmatprep.subr.mxu0 0.0
    %577 = vmatpush1.msra.mxu0 0.0
    %578 = vmatprep.subr.mxu0 0.0
    %579 = vmatpush1.msra.mxu0 0.0
    %580 = vmatprep.subr.mxu0 0.0
    %581 = vmatpush1.msra.mxu0 0.0
    %582 = vmatprep.subr.mxu0 0.0
    %583 = vmatpush1.msra.mxu0 0.0
    %584 = vmatprep.subr.mxu0 0.0
    %585 = vmatpush1.msra.mxu0 0.0
    %586 = vmatprep.subr.mxu0 0.0
    %587 = vmatpush1.msra.mxu0 0.0
    %588 = vmatprep.subr.mxu0 0.0
    %589 = vmatpush1.msra.mxu0 0.0
    %590 = vmatprep.subr.mxu0 0.0
    %591 = vmatpush1.msra.mxu0 0.0
    %592 = vmatprep.subr.mxu0 0.0
    %593 = vmatpush1.msra.mxu0 0.0
    %594 = vmatprep.subr.mxu0 0.0
    %595 = vmatpush1.msra.mxu0 0.0
    %596 = vmatprep.subr.mxu0 0.0
    %597 = vmatpush1.msra.mxu0 0.0
    %598 = vmatprep.subr.mxu0 0.0
    %599 = vmatpush1.msra.mxu0 0.0
    %600 = vmatprep.subr.mxu0 0.0
    %601 = vmatpush1.msra.mxu0 0.0
    %602 = vmatprep.subr.mxu0 0.0
    %603 = vmatpush1.msra.mxu0 0.0
    %604 = vmatprep.subr.mxu0 0.0
    %605 = vmatpush1.msra.mxu0 0.0
    %606 = vmatprep.subr.mxu0 0.0
    %607 = vmatpush1.msra.mxu0 0.0
    %608 = vmatprep.subr.mxu0 0.0
    %609 = vmatpush1.msra.mxu0 0.0
    %610 = vmatprep.subr.mxu0 0.0
    %611 = vmatpush1.msra.mxu0 0.0
    %612 = vmatprep.subr.mxu0 0.0
    %613 = vmatpush1.msra.mxu0 0.0
    %614 = vmatprep.mubr.f32.mxu0 0.0
    %615 = vmatmul.mubr.f32.gmra.mrb[0].mxu0 %v545
    %v616 = vpop.f32.mrb[0].mxu0
    %v617 = vadd.f32 %v536, %v616
    %v618 = vpop.f32.mrb[0].mxu0
    %619 = vmatprep.mubr.f32.mxu0 0.0
    %620 = vmatmul.mubr.f32.gmra.mrb[0].mxu0 %v548
    %v621 = vpop.f32.mrb[0].mxu0
    %v622 = vadd.f32 %v541, %v621
    %v623 = vpop.f32.mrb[0].mxu0
    %624 = vdwg.mxu0
    %s625 = scalar_lea.vmem [#allocation6], 32
    %v626 = vld [vmem:[%s625] sm:$0xff]
    %v627 = vld [vmem:[%s625 + $0x8] sm:$0xff]
    %v629 = vsel %vm462, %v626, 0
    %v632 = vsel %vm462, %v627, 0
    %634 = vmatprep.subr.mxu0 0.0
    %635 = vmatpush1.msra.mxu0 %v449
    %636 = vmatprep.subr.mxu0 0.0
    %637 = vmatpush1.msra.mxu0 %v454
    %638 = vmatprep.subr.mxu0 0.0
    %639 = vmatpush1.msra.mxu0 0.0
    %640 = vmatprep.subr.mxu0 0.0
    %641 = vmatpush1.msra.mxu0 0.0
    %642 = vmatprep.subr.mxu0 0.0
    %643 = vmatpush1.msra.mxu0 0.0
    %644 = vmatprep.subr.mxu0 0.0
    %645 = vmatpush1.msra.mxu0 0.0
    %646 = vmatprep.subr.mxu0 0.0
    %647 = vmatpush1.msra.mxu0 0.0
    %648 = vmatprep.subr.mxu0 0.0
    %649 = vmatpush1.msra.mxu0 0.0
    %650 = vmatprep.subr.mxu0 0.0
    %651 = vmatpush1.msra.mxu0 0.0
    %652 = vmatprep.subr.mxu0 0.0
    %653 = vmatpush1.msra.mxu0 0.0
    %654 = vmatprep.subr.mxu0 0.0
    %655 = vmatpush1.msra.mxu0 0.0
    %656 = vmatprep.subr.mxu0 0.0
    %657 = vmatpush1.msra.mxu0 0.0
    %658 = vmatprep.subr.mxu0 0.0
    %659 = vmatpush1.msra.mxu0 0.0
    %660 = vmatprep.subr.mxu0 0.0
    %661 = vmatpush1.msra.mxu0 0.0
    %662 = vmatprep.subr.mxu0 0.0
    %663 = vmatpush1.msra.mxu0 0.0
    %664 = vmatprep.subr.mxu0 0.0
    %665 = vmatpush1.msra.mxu0 0.0
    %666 = vmatprep.subr.mxu0 0.0
    %667 = vmatpush1.msra.mxu0 0.0
    %668 = vmatprep.subr.mxu0 0.0
    %669 = vmatpush1.msra.mxu0 0.0
    %670 = vmatprep.subr.mxu0 0.0
    %671 = vmatpush1.msra.mxu0 0.0
    %672 = vmatprep.subr.mxu0 0.0
    %673 = vmatpush1.msra.mxu0 0.0
    %674 = vmatprep.subr.mxu0 0.0
    %675 = vmatpush1.msra.mxu0 0.0
    %676 = vmatprep.subr.mxu0 0.0
    %677 = vmatpush1.msra.mxu0 0.0
    %678 = vmatprep.subr.mxu0 0.0
    %679 = vmatpush1.msra.mxu0 0.0
    %680 = vmatprep.subr.mxu0 0.0
    %681 = vmatpush1.msra.mxu0 0.0
    %682 = vmatprep.subr.mxu0 0.0
    %683 = vmatpush1.msra.mxu0 0.0
    %684 = vmatprep.subr.mxu0 0.0
    %685 = vmatpush1.msra.mxu0 0.0
    %686 = vmatprep.subr.mxu0 0.0
    %687 = vmatpush1.msra.mxu0 0.0
    %688 = vmatprep.subr.mxu0 0.0
    %689 = vmatpush1.msra.mxu0 0.0
    %690 = vmatprep.subr.mxu0 0.0
    %691 = vmatpush1.msra.mxu0 0.0
    %692 = vmatprep.subr.mxu0 0.0
    %693 = vmatpush1.msra.mxu0 0.0
    %694 = vmatprep.subr.mxu0 0.0
    %695 = vmatpush1.msra.mxu0 0.0
    %696 = vmatprep.subr.mxu0 0.0
    %697 = vmatpush1.msra.mxu0 0.0
    %698 = vmatprep.mubr.f32.mxu0 0.0
    %699 = vmatmul.mubr.f32.gmra.mrb[0].mxu0 %v629
    %v700 = vpop.f32.mrb[0].mxu0
    %v701 = vadd.f32 0.0, %v700
    %v702 = vpop.f32.mrb[0].mxu0
    %703 = vmatprep.mubr.f32.mxu0 0.0
    %704 = vmatmul.mubr.f32.gmra.mrb[0].mxu0 %v632
    %v705 = vpop.f32.mrb[0].mxu0
    %v706 = vadd.f32 0.0, %v705
    %v707 = vpop.f32.mrb[0].mxu0
    %708 = vdwg.mxu0
    %v709 = vadd.f32 %v617, %v701
    %v710 = vadd.f32 %v622, %v706
    %s711 = sld [smem:[#allocation14]]
    %v712 = vstv %s711
    %v713 = vadd.f32 %v709, %v712
    %v714 = vadd.f32 %v710, %v712
    %v716 = vsel %vm225, %v713, 0
    %v719 = vsel %vm225, %v714, 0
    %721 = vmatprep.subr.mxu0 0.0
    %722 = vmatpush1.msra.mxu0 %v173
    %723 = vmatprep.subr.mxu0 0.0
    %724 = vmatpush1.msra.mxu0 %v174
    %725 = vmatprep.subr.mxu0 0.0
    %726 = vmatpush1.msra.mxu0 %v175
    %727 = vmatprep.subr.mxu0 0.0
    %728 = vmatpush1.msra.mxu0 %v176
    %729 = vmatprep.subr.mxu0 0.0
    %730 = vmatpush1.msra.mxu0 0.0
    %731 = vmatprep.subr.mxu0 0.0
    %732 = vmatpush1.msra.mxu0 0.0
    %733 = vmatprep.subr.mxu0 0.0
    %734 = vmatpush1.msra.mxu0 0.0
    %735 = vmatprep.subr.mxu0 0.0
    %736 = vmatpush1.msra.mxu0 0.0
    %737 = vmatprep.subr.mxu0 0.0
    %738 = vmatpush1.msra.mxu0 0.0
    %739 = vmatprep.subr.mxu0 0.0
    %740 = vmatpush1.msra.mxu0 0.0
    %741 = vmatprep.subr.mxu0 0.0
    %742 = vmatpush1.msra.mxu0 0.0
    %743 = vmatprep.subr.mxu0 0.0
    %744 = vmatpush1.msra.mxu0 0.0
    %745 = vmatprep.subr.mxu0 0.0
    %746 = vmatpush1.msra.mxu0 0.0
    %747 = vmatprep.subr.mxu0 0.0
    %748 = vmatpush1.msra.mxu0 0.0
    %749 = vmatprep.subr.mxu0 0.0
    %750 = vmatpush1.msra.mxu0 0.0
    %751 = vmatprep.subr.mxu0 0.0
    %752 = vmatpush1.msra.mxu0 0.0
    %753 = vmatprep.subr.mxu0 0.0
    %754 = vmatpush1.msra.mxu0 0.0
    %755 = vmatprep.subr.mxu0 0.0
    %756 = vmatpush1.msra.mxu0 0.0
    %757 = vmatprep.subr.mxu0 0.0
    %758 = vmatpush1.msra.mxu0 0.0
    %759 = vmatprep.subr.mxu0 0.0
    %760 = vmatpush1.msra.mxu0 0.0
    %761 = vmatprep.subr.mxu0 0.0
    %762 = vmatpush1.msra.mxu0 0.0
    %763 = vmatprep.subr.mxu0 0.0
    %764 = vmatpush1.msra.mxu0 0.0
    %765 = vmatprep.subr.mxu0 0.0
    %766 = vmatpush1.msra.mxu0 0.0
    %767 = vmatprep.subr.mxu0 0.0
    %768 = vmatpush1.msra.mxu0 0.0
    %769 = vmatprep.subr.mxu0 0.0
    %770 = vmatpush1.msra.mxu0 0.0
    %771 = vmatprep.subr.mxu0 0.0
    %772 = vmatpush1.msra.mxu0 0.0
    %773 = vmatprep.subr.mxu0 0.0
    %774 = vmatpush1.msra.mxu0 0.0
    %775 = vmatprep.subr.mxu0 0.0
    %776 = vmatpush1.msra.mxu0 0.0
    %777 = vmatprep.subr.mxu0 0.0
    %778 = vmatpush1.msra.mxu0 0.0
    %779 = vmatprep.subr.mxu0 0.0
    %780 = vmatpush1.msra.mxu0 0.0
    %781 = vmatprep.subr.mxu0 0.0
    %782 = vmatpush1.msra.mxu0 0.0
    %783 = vmatprep.subr.mxu0 0.0
    %784 = vmatpush1.msra.mxu0 0.0
    %785 = vmatprep.mubr.f32.mxu0 0.0
    %786 = vmatmul.mubr.f32.gmra.mrb[0].mxu0 %v716
    %v787 = vpop.f32.mrb[0].mxu0
    %v788 = vadd.f32 0.0, %v787
    %v789 = vpop.f32.mrb[0].mxu0
    %790 = vmatprep.mubr.f32.mxu0 0.0
    %791 = vmatmul.mubr.f32.gmra.mrb[0].mxu0 %v719
    %v792 = vpop.f32.mrb[0].mxu0
    %v793 = vadd.f32 0.0, %v792
    %v794 = vpop.f32.mrb[0].mxu0
    %795 = vdwg.mxu0
    %796 = vmatprep.subr.mxu0 0.0
    %797 = vmatpush1.msra.mxu0 %v178
    %798 = vmatprep.subr.mxu0 0.0
    %799 = vmatpush1.msra.mxu0 %v179
    %800 = vmatprep.subr.mxu0 0.0
    %801 = vmatpush1.msra.mxu0 %v180
    %802 = vmatprep.subr.mxu0 0.0
    %803 = vmatpush1.msra.mxu0 %v181
    %804 = vmatprep.subr.mxu0 0.0
    %805 = vmatpush1.msra.mxu0 0.0
    %806 = vmatprep.subr.mxu0 0.0
    %807 = vmatpush1.msra.mxu0 0.0
    %808 = vmatprep.subr.mxu0 0.0
    %809 = vmatpush1.msra.mxu0 0.0
    %810 = vmatprep.subr.mxu0 0.0
    %811 = vmatpush1.msra.mxu0 0.0
    %812 = vmatprep.subr.mxu0 0.0
    %813 = vmatpush1.msra.mxu0 0.0
    %814 = vmatprep.subr.mxu0 0.0
    %815 = vmatpush1.msra.mxu0 0.0
    %816 = vmatprep.subr.mxu0 0.0
    %817 = vmatpush1.msra.mxu0 0.0
    %818 = vmatprep.subr.mxu0 0.0
    %819 = vmatpush1.msra.mxu0 0.0
    %820 = vmatprep.subr.mxu0 0.0
    %821 = vmatpush1.msra.mxu0 0.0
    %822 = vmatprep.subr.mxu0 0.0
    %823 = vmatpush1.msra.mxu0 0.0
    %824 = vmatprep.subr.mxu0 0.0
    %825 = vmatpush1.msra.mxu0 0.0
    %826 = vmatprep.subr.mxu0 0.0
    %827 = vmatpush1.msra.mxu0 0.0
    %828 = vmatprep.subr.mxu0 0.0
    %829 = vmatpush1.msra.mxu0 0.0
    %830 = vmatprep.subr.mxu0 0.0
    %831 = vmatpush1.msra.mxu0 0.0
    %832 = vmatprep.subr.mxu0 0.0
    %833 = vmatpush1.msra.mxu0 0.0
    %834 = vmatprep.subr.mxu0 0.0
    %835 = vmatpush1.msra.mxu0 0.0
    %836 = vmatprep.subr.mxu0 0.0
    %837 = vmatpush1.msra.mxu0 0.0
    %838 = vmatprep.subr.mxu0 0.0
    %839 = vmatpush1.msra.mxu0 0.0
    %840 = vmatprep.subr.mxu0 0.0
    %841 = vmatpush1.msra.mxu0 0.0
    %842 = vmatprep.subr.mxu0 0.0
    %843 = vmatpush1.msra.mxu0 0.0
    %844 = vmatprep.subr.mxu0 0.0
    %845 = vmatpush1.msra.mxu0 0.0
    %846 = vmatprep.subr.mxu0 0.0
    %847 = vmatpush1.msra.mxu0 0.0
    %848 = vmatprep.subr.mxu0 0.0
    %849 = vmatpush1.msra.mxu0 0.0
    %850 = vmatprep.subr.mxu0 0.0
    %851 = vmatpush1.msra.mxu0 0.0
    %852 = vmatprep.subr.mxu0 0.0
    %853 = vmatpush1.msra.mxu0 0.0
    %854 = vmatprep.subr.mxu0 0.0
    %855 = vmatpush1.msra.mxu0 0.0
    %856 = vmatprep.subr.mxu0 0.0
    %857 = vmatpush1.msra.mxu0 0.0
    %858 = vmatprep.subr.mxu0 0.0
    %859 = vmatpush1.msra.mxu0 0.0
    %860 = vmatprep.mubr.f32.mxu0 0.0
    %861 = vmatmul.mubr.f32.gmra.mrb[0].mxu0 %v716
    %v862 = vpop.f32.mrb[0].mxu0
    %v863 = vadd.f32 0.0, %v862
    %v864 = vpop.f32.mrb[0].mxu0
    %865 = vmatprep.mubr.f32.mxu0 0.0
    %866 = vmatmul.mubr.f32.gmra.mrb[0].mxu0 %v719
    %v867 = vpop.f32.mrb[0].mxu0
    %v868 = vadd.f32 0.0, %v867
    %v869 = vpop.f32.mrb[0].mxu0
    %870 = vdwg.mxu0
    %871 = vmatprep.subr.mxu0 0.0
    %872 = vmatpush1.msra.mxu0 %v183
    %873 = vmatprep.subr.mxu0 0.0
    %874 = vmatpush1.msra.mxu0 %v184
    %875 = vmatprep.subr.mxu0 0.0
    %876 = vmatpush1.msra.mxu0 %v185
    %877 = vmatprep.subr.mxu0 0.0
    %878 = vmatpush1.msra.mxu0 %v186
    %879 = vmatprep.subr.mxu0 0.0
    %880 = vmatpush1.msra.mxu0 0.0
    %881 = vmatprep.subr.mxu0 0.0
    %882 = vmatpush1.msra.mxu0 0.0
    %883 = vmatprep.subr.mxu0 0.0
    %884 = vmatpush1.msra.mxu0 0.0
    %885 = vmatprep.subr.mxu0 0.0
    %886 = vmatpush1.msra.mxu0 0.0
    %887 = vmatprep.subr.mxu0 0.0
    %888 = vmatpush1.msra.mxu0 0.0
    %889 = vmatprep.subr.mxu0 0.0
    %890 = vmatpush1.msra.mxu0 0.0
    %891 = vmatprep.subr.mxu0 0.0
    %892 = vmatpush1.msra.mxu0 0.0
    %893 = vmatprep.subr.mxu0 0.0
    %894 = vmatpush1.msra.mxu0 0.0
    %895 = vmatprep.subr.mxu0 0.0
    %896 = vmatpush1.msra.mxu0 0.0
    %897 = vmatprep.subr.mxu0 0.0
    %898 = vmatpush1.msra.mxu0 0.0
    %899 = vmatprep.subr.mxu0 0.0
    %900 = vmatpush1.msra.mxu0 0.0
    %901 = vmatprep.subr.mxu0 0.0
    %902 = vmatpush1.msra.mxu0 0.0
    %903 = vmatprep.subr.mxu0 0.0
    %904 = vmatpush1.msra.mxu0 0.0
    %905 = vmatprep.subr.mxu0 0.0
    %906 = vmatpush1.msra.mxu0 0.0
    %907 = vmatprep.subr.mxu0 0.0
    %908 = vmatpush1.msra.mxu0 0.0
    %909 = vmatprep.subr.mxu0 0.0
    %910 = vmatpush1.msra.mxu0 0.0
    %911 = vmatprep.subr.mxu0 0.0
    %912 = vmatpush1.msra.mxu0 0.0
    %913 = vmatprep.subr.mxu0 0.0
    %914 = vmatpush1.msra.mxu0 0.0
    %915 = vmatprep.subr.mxu0 0.0
    %916 = vmatpush1.msra.mxu0 0.0
    %917 = vmatprep.subr.mxu0 0.0
    %918 = vmatpush1.msra.mxu0 0.0
    %919 = vmatprep.subr.mxu0 0.0
    %920 = vmatpush1.msra.mxu0 0.0
    %921 = vmatprep.subr.mxu0 0.0
    %922 = vmatpush1.msra.mxu0 0.0
    %923 = vmatprep.subr.mxu0 0.0
    %924 = vmatpush1.msra.mxu0 0.0
    %925 = vmatprep.subr.mxu0 0.0
    %926 = vmatpush1.msra.mxu0 0.0
    %927 = vmatprep.subr.mxu0 0.0
    %928 = vmatpush1.msra.mxu0 0.0
    %929 = vmatprep.subr.mxu0 0.0
    %930 = vmatpush1.msra.mxu0 0.0
    %931 = vmatprep.subr.mxu0 0.0
    %932 = vmatpush1.msra.mxu0 0.0
    %933 = vmatprep.subr.mxu0 0.0
    %934 = vmatpush1.msra.mxu0 0.0
    %935 = vmatprep.mubr.f32.mxu0 0.0
    %936 = vmatmul.mubr.f32.gmra.mrb[0].mxu0 %v716
    %v937 = vpop.f32.mrb[0].mxu0
    %v938 = vadd.f32 0.0, %v937
    %v939 = vpop.f32.mrb[0].mxu0
    %940 = vmatprep.mubr.f32.mxu0 0.0
    %941 = vmatmul.mubr.f32.gmra.mrb[0].mxu0 %v719
    %v942 = vpop.f32.mrb[0].mxu0
    %v943 = vadd.f32 0.0, %v942
    %v944 = vpop.f32.mrb[0].mxu0
    %945 = vdwg.mxu0
    %v946 = vld [vmem:[#allocation11] sm:$0xff]
    %v947 = vld [vmem:[#allocation11 + $0x8] sm:$0xff]
    %vm948 = vcmp.gt.f32.partialorder %v946, 0.5
    %vm949 = vcmp.gt.f32.partialorder %v947, 0.5
    %v950 = vsel %vm948, %v788, -1e+30
    %v951 = vsel %vm949, %v793, -1e+30
    %v952 = vld [vmem:[%s11] sm:$0xff]
    %v953 = vld [vmem:[%s11 + $0x8] sm:$0xff]
    %vm954 = vcmp.gt.f32.partialorder %v952, 0.5
    %vm955 = vcmp.gt.f32.partialorder %v953, 0.5
    %v956 = vsel %vm954, %v938, -1e+30
    %v957 = vsel %vm955, %v943, -1e+30
    %v958 = vmax.f32 %v863, %v956
    %v959 = vmax.f32 %v868, %v957
    %v960 = vmax.f32 %v950, %v958
    %v961 = vmax.f32 %v951, %v959
    %v963 = vsel %vm225, %v960, 0
    %v966 = vsel %vm225, %v961, 0
    %968 = vmatprep.subr.mxu0 0.0
    %969 = vmatpush1.msra.mxu0 %v200
    %970 = vmatprep.subr.mxu0 0.0
    %971 = vmatpush1.msra.mxu0 %v201
    %972 = vmatprep.subr.mxu0 0.0
    %973 = vmatpush1.msra.mxu0 %v202
    %974 = vmatprep.subr.mxu0 0.0
    %975 = vmatpush1.msra.mxu0 %v203
    %976 = vmatprep.subr.mxu0 0.0
    %977 = vmatpush1.msra.mxu0 0.0
    %978 = vmatprep.subr.mxu0 0.0
    %979 = vmatpush1.msra.mxu0 0.0
    %980 = vmatprep.subr.mxu0 0.0
    %981 = vmatpush1.msra.mxu0 0.0
    %982 = vmatprep.subr.mxu0 0.0
    %983 = vmatpush1.msra.mxu0 0.0
    %984 = vmatprep.subr.mxu0 0.0
    %985 = vmatpush1.msra.mxu0 0.0
    %986 = vmatprep.subr.mxu0 0.0
    %987 = vmatpush1.msra.mxu0 0.0
    %988 = vmatprep.subr.mxu0 0.0
    %989 = vmatpush1.msra.mxu0 0.0
    %990 = vmatprep.subr.mxu0 0.0
    %991 = vmatpush1.msra.mxu0 0.0
    %992 = vmatprep.subr.mxu0 0.0
    %993 = vmatpush1.msra.mxu0 0.0
    %994 = vmatprep.subr.mxu0 0.0
    %995 = vmatpush1.msra.mxu0 0.0
    %996 = vmatprep.subr.mxu0 0.0
    %997 = vmatpush1.msra.mxu0 0.0
    %998 = vmatprep.subr.mxu0 0.0
    %999 = vmatpush1.msra.mxu0 0.0
    %1000 = vmatprep.subr.mxu0 0.0
    %1001 = vmatpush1.msra.mxu0 0.0
    %1002 = vmatprep.subr.mxu0 0.0
    %1003 = vmatpush1.msra.mxu0 0.0
    %1004 = vmatprep.subr.mxu0 0.0
    %1005 = vmatpush1.msra.mxu0 0.0
    %1006 = vmatprep.subr.mxu0 0.0
    %1007 = vmatpush1.msra.mxu0 0.0
    %1008 = vmatprep.subr.mxu0 0.0
    %1009 = vmatpush1.msra.mxu0 0.0
    %1010 = vmatprep.subr.mxu0 0.0
    %1011 = vmatpush1.msra.mxu0 0.0
    %1012 = vmatprep.subr.mxu0 0.0
    %1013 = vmatpush1.msra.mxu0 0.0
    %1014 = vmatprep.subr.mxu0 0.0
    %1015 = vmatpush1.msra.mxu0 0.0
    %1016 = vmatprep.subr.mxu0 0.0
    %1017 = vmatpush1.msra.mxu0 0.0
    %1018 = vmatprep.subr.mxu0 0.0
    %1019 = vmatpush1.msra.mxu0 0.0
    %1020 = vmatprep.subr.mxu0 0.0
    %1021 = vmatpush1.msra.mxu0 0.0
    %1022 = vmatprep.subr.mxu0 0.0
    %1023 = vmatpush1.msra.mxu0 0.0
    %1024 = vmatprep.subr.mxu0 0.0
    %1025 = vmatpush1.msra.mxu0 0.0
    %1026 = vmatprep.subr.mxu0 0.0
    %1027 = vmatpush1.msra.mxu0 0.0
    %1028 = vmatprep.subr.mxu0 0.0
    %1029 = vmatpush1.msra.mxu0 0.0
    %1030 = vmatprep.subr.mxu0 0.0
    %1031 = vmatpush1.msra.mxu0 0.0
    %1032 = vmatprep.mubr.f32.mxu0 0.0
    %1033 = vmatmul.mubr.f32.gmra.mrb[0].mxu0 %v963
    %v1034 = vpop.f32.mrb[0].mxu0
    %v1035 = vadd.f32 0.0, %v1034
    %v1036 = vpop.f32.mrb[0].mxu0
    %1037 = vmatprep.mubr.f32.mxu0 0.0
    %1038 = vmatmul.mubr.f32.gmra.mrb[0].mxu0 %v966
    %v1039 = vpop.f32.mrb[0].mxu0
    %v1040 = vadd.f32 0.0, %v1039
    %v1041 = vpop.f32.mrb[0].mxu0
    %1042 = vdwg.mxu0
    %v1044 = vsel %vm462, %v209, 0
    %1046 = vmatprep.subr.mxu0 0.0
    %1047 = vmatpush1.msra.mxu0 %v1035
    %1048 = vmatprep.subr.mxu0 0.0
    %1049 = vmatpush1.msra.mxu0 %v1040
    %1050 = vmatprep.subr.mxu0 0.0
    %1051 = vmatpush1.msra.mxu0 0.0
    %1052 = vmatprep.subr.mxu0 0.0
    %1053 = vmatpush1.msra.mxu0 0.0
    %1054 = vmatprep.subr.mxu0 0.0
    %1055 = vmatpush1.msra.mxu0 0.0
    %1056 = vmatprep.subr.mxu0 0.0
    %1057 = vmatpush1.msra.mxu0 0.0
    %1058 = vmatprep.subr.mxu0 0.0
    %1059 = vmatpush1.msra.mxu0 0.0
    %1060 = vmatprep.subr.mxu0 0.0
    %1061 = vmatpush1.msra.mxu0 0.0
    %1062 = vmatprep.subr.mxu0 0.0
    %1063 = vmatpush1.msra.mxu0 0.0
    %1064 = vmatprep.subr.mxu0 0.0
    %1065 = vmatpush1.msra.mxu0 0.0
    %1066 = vmatprep.subr.mxu0 0.0
    %1067 = vmatpush1.msra.mxu0 0.0
    %1068 = vmatprep.subr.mxu0 0.0
    %1069 = vmatpush1.msra.mxu0 0.0
    %1070 = vmatprep.subr.mxu0 0.0
    %1071 = vmatpush1.msra.mxu0 0.0
    %1072 = vmatprep.subr.mxu0 0.0
    %1073 = vmatpush1.msra.mxu0 0.0
    %1074 = vmatprep.subr.mxu0 0.0
    %1075 = vmatpush1.msra.mxu0 0.0
    %1076 = vmatprep.subr.mxu0 0.0
    %1077 = vmatpush1.msra.mxu0 0.0
    %1078 = vmatprep.subr.mxu0 0.0
    %1079 = vmatpush1.msra.mxu0 0.0
    %1080 = vmatprep.subr.mxu0 0.0
    %1081 = vmatpush1.msra.mxu0 0.0
    %1082 = vmatprep.subr.mxu0 0.0
    %1083 = vmatpush1.msra.mxu0 0.0
    %1084 = vmatprep.subr.mxu0 0.0
    %1085 = vmatpush1.msra.mxu0 0.0
    %1086 = vmatprep.subr.mxu0 0.0
    %1087 = vmatpush1.msra.mxu0 0.0
    %1088 = vmatprep.subr.mxu0 0.0
    %1089 = vmatpush1.msra.mxu0 0.0
    %1090 = vmatprep.subr.mxu0 0.0
    %1091 = vmatpush1.msra.mxu0 0.0
    %1092 = vmatprep.subr.mxu0 0.0
    %1093 = vmatpush1.msra.mxu0 0.0
    %1094 = vmatprep.subr.mxu0 0.0
    %1095 = vmatpush1.msra.mxu0 0.0
    %1096 = vmatprep.subr.mxu0 0.0
    %1097 = vmatpush1.msra.mxu0 0.0
    %1098 = vmatprep.subr.mxu0 0.0
    %1099 = vmatpush1.msra.mxu0 0.0
    %1100 = vmatprep.subr.mxu0 0.0
    %1101 = vmatpush1.msra.mxu0 0.0
    %1102 = vmatprep.subr.mxu0 0.0
    %1103 = vmatpush1.msra.mxu0 0.0
    %1104 = vmatprep.subr.mxu0 0.0
    %1105 = vmatpush1.msra.mxu0 0.0
    %1106 = vmatprep.subr.mxu0 0.0
    %1107 = vmatpush1.msra.mxu0 0.0
    %1108 = vmatprep.subr.mxu0 0.0
    %1109 = vmatpush1.msra.mxu0 0.0
    %1110 = vmatprep.mubr.f32.mxu0 0.0
    %1111 = vmatmul.mubr.f32.gmra.mrb[0].mxu0 %v1044
    %v1112 = vpop.f32.mrb[0].mxu0
    %v1113 = vadd.f32 0.0, %v1112
    %v1114 = vpop.f32.mrb[0].mxu0
    %1115 = vdwg.mxu0
    %v1117 = vsel %vm462, %v211, 0
    %1119 = vmatprep.subr.mxu0 0.0
    %1120 = vmatpush1.msra.mxu0 %v1035
    %1121 = vmatprep.subr.mxu0 0.0
    %1122 = vmatpush1.msra.mxu0 %v1040
    %1123 = vmatprep.subr.mxu0 0.0
    %1124 = vmatpush1.msra.mxu0 0.0
    %1125 = vmatprep.subr.mxu0 0.0
    %1126 = vmatpush1.msra.mxu0 0.0
    %1127 = vmatprep.subr.mxu0 0.0
    %1128 = vmatpush1.msra.mxu0 0.0
    %1129 = vmatprep.subr.mxu0 0.0
    %1130 = vmatpush1.msra.mxu0 0.0
    %1131 = vmatprep.subr.mxu0 0.0
    %1132 = vmatpush1.msra.mxu0 0.0
    %1133 = vmatprep.subr.mxu0 0.0
    %1134 = vmatpush1.msra.mxu0 0.0
    %1135 = vmatprep.subr.mxu0 0.0
    %1136 = vmatpush1.msra.mxu0 0.0
    %1137 = vmatprep.subr.mxu0 0.0
    %1138 = vmatpush1.msra.mxu0 0.0
    %1139 = vmatprep.subr.mxu0 0.0
    %1140 = vmatpush1.msra.mxu0 0.0
    %1141 = vmatprep.subr.mxu0 0.0
    %1142 = vmatpush1.msra.mxu0 0.0
    %1143 = vmatprep.subr.mxu0 0.0
    %1144 = vmatpush1.msra.mxu0 0.0
    %1145 = vmatprep.subr.mxu0 0.0
    %1146 = vmatpush1.msra.mxu0 0.0
    %1147 = vmatprep.subr.mxu0 0.0
    %1148 = vmatpush1.msra.mxu0 0.0
    %1149 = vmatprep.subr.mxu0 0.0
    %1150 = vmatpush1.msra.mxu0 0.0
    %1151 = vmatprep.subr.mxu0 0.0
    %1152 = vmatpush1.msra.mxu0 0.0
    %1153 = vmatprep.subr.mxu0 0.0
    %1154 = vmatpush1.msra.mxu0 0.0
    %1155 = vmatprep.subr.mxu0 0.0
    %1156 = vmatpush1.msra.mxu0 0.0
    %1157 = vmatprep.subr.mxu0 0.0
    %1158 = vmatpush1.msra.mxu0 0.0
    %1159 = vmatprep.subr.mxu0 0.0
    %1160 = vmatpush1.msra.mxu0 0.0
    %1161 = vmatprep.subr.mxu0 0.0
    %1162 = vmatpush1.msra.mxu0 0.0
    %1163 = vmatprep.subr.mxu0 0.0
    %1164 = vmatpush1.msra.mxu0 0.0
    %1165 = vmatprep.subr.mxu0 0.0
    %1166 = vmatpush1.msra.mxu0 0.0
    %1167 = vmatprep.subr.mxu0 0.0
    %1168 = vmatpush1.msra.mxu0 0.0
    %1169 = vmatprep.subr.mxu0 0.0
    %1170 = vmatpush1.msra.mxu0 0.0
    %1171 = vmatprep.subr.mxu0 0.0
    %1172 = vmatpush1.msra.mxu0 0.0
    %1173 = vmatprep.subr.mxu0 0.0
    %1174 = vmatpush1.msra.mxu0 0.0
    %1175 = vmatprep.subr.mxu0 0.0
    %1176 = vmatpush1.msra.mxu0 0.0
    %1177 = vmatprep.subr.mxu0 0.0
    %1178 = vmatpush1.msra.mxu0 0.0
    %1179 = vmatprep.subr.mxu0 0.0
    %1180 = vmatpush1.msra.mxu0 0.0
    %1181 = vmatprep.subr.mxu0 0.0
    %1182 = vmatpush1.msra.mxu0 0.0
    %1183 = vmatprep.mubr.f32.mxu0 0.0
    %1184 = vmatmul.mubr.f32.gmra.mrb[0].mxu0 %v1117
    %v1185 = vpop.f32.mrb[0].mxu0
    %v1186 = vadd.f32 0.0, %v1185
    %v1187 = vpop.f32.mrb[0].mxu0
    %1188 = vdwg.mxu0
    %v1190 = vsel %vm462, %v213, 0
    %1192 = vmatprep.subr.mxu0 0.0
    %1193 = vmatpush1.msra.mxu0 %v1035
    %1194 = vmatprep.subr.mxu0 0.0
    %1195 = vmatpush1.msra.mxu0 %v1040
    %1196 = vmatprep.subr.mxu0 0.0
    %1197 = vmatpush1.msra.mxu0 0.0
    %1198 = vmatprep.subr.mxu0 0.0
    %1199 = vmatpush1.msra.mxu0 0.0
    %1200 = vmatprep.subr.mxu0 0.0
    %1201 = vmatpush1.msra.mxu0 0.0
    %1202 = vmatprep.subr.mxu0 0.0
    %1203 = vmatpush1.msra.mxu0 0.0
    %1204 = vmatprep.subr.mxu0 0.0
    %1205 = vmatpush1.msra.mxu0 0.0
    %1206 = vmatprep.subr.mxu0 0.0
    %1207 = vmatpush1.msra.mxu0 0.0
    %1208 = vmatprep.subr.mxu0 0.0
    %1209 = vmatpush1.msra.mxu0 0.0
    %1210 = vmatprep.subr.mxu0 0.0
    %1211 = vmatpush1.msra.mxu0 0.0
    %1212 = vmatprep.subr.mxu0 0.0
    %1213 = vmatpush1.msra.mxu0 0.0
    %1214 = vmatprep.subr.mxu0 0.0
    %1215 = vmatpush1.msra.mxu0 0.0
    %1216 = vmatprep.subr.mxu0 0.0
    %1217 = vmatpush1.msra.mxu0 0.0
    %1218 = vmatprep.subr.mxu0 0.0
    %1219 = vmatpush1.msra.mxu0 0.0
    %1220 = vmatprep.subr.mxu0 0.0
    %1221 = vmatpush1.msra.mxu0 0.0
    %1222 = vmatprep.subr.mxu0 0.0
    %1223 = vmatpush1.msra.mxu0 0.0
    %1224 = vmatprep.subr.mxu0 0.0
    %1225 = vmatpush1.msra.mxu0 0.0
    %1226 = vmatprep.subr.mxu0 0.0
    %1227 = vmatpush1.msra.mxu0 0.0
    %1228 = vmatprep.subr.mxu0 0.0
    %1229 = vmatpush1.msra.mxu0 0.0
    %1230 = vmatprep.subr.mxu0 0.0
    %1231 = vmatpush1.msra.mxu0 0.0
    %1232 = vmatprep.subr.mxu0 0.0
    %1233 = vmatpush1.msra.mxu0 0.0
    %1234 = vmatprep.subr.mxu0 0.0
    %1235 = vmatpush1.msra.mxu0 0.0
    %1236 = vmatprep.subr.mxu0 0.0
    %1237 = vmatpush1.msra.mxu0 0.0
    %1238 = vmatprep.subr.mxu0 0.0
    %1239 = vmatpush1.msra.mxu0 0.0
    %1240 = vmatprep.subr.mxu0 0.0
    %1241 = vmatpush1.msra.mxu0 0.0
    %1242 = vmatprep.subr.mxu0 0.0
    %1243 = vmatpush1.msra.mxu0 0.0
    %1244 = vmatprep.subr.mxu0 0.0
    %1245 = vmatpush1.msra.mxu0 0.0
    %1246 = vmatprep.subr.mxu0 0.0
    %1247 = vmatpush1.msra.mxu0 0.0
    %1248 = vmatprep.subr.mxu0 0.0
    %1249 = vmatpush1.msra.mxu0 0.0
    %1250 = vmatprep.subr.mxu0 0.0
    %1251 = vmatpush1.msra.mxu0 0.0
    %1252 = vmatprep.subr.mxu0 0.0
    %1253 = vmatpush1.msra.mxu0 0.0
    %1254 = vmatprep.subr.mxu0 0.0
    %1255 = vmatpush1.msra.mxu0 0.0
    %1256 = vmatprep.mubr.f32.mxu0 0.0
    %1257 = vmatmul.mubr.f32.gmra.mrb[0].mxu0 %v1190
    %v1258 = vpop.f32.mrb[0].mxu0
    %v1259 = vadd.f32 0.0, %v1258
    %v1260 = vpop.f32.mrb[0].mxu0
    %1261 = vdwg.mxu0
    %v1262 = vld [vmem:[#allocation12] sm:$0xff]
    %vm1263 = vcmp.gt.f32.partialorder %v1262, 0.5
    %v1264 = vsel %vm1263, %v1113, -1e+30
    %v1265 = vmax.f32 %v1186, %v1259
    %v1266 = vmax.f32 %v1264, %v1265
    %v1268 = vsel %vm462, %v1266, 0
    %1270 = vmatprep.subr.mxu0 0.0
    %1271 = vmatpush1.msra.mxu0 %v187
    %1272 = vmatprep.subr.mxu0 0.0
    %1273 = vmatpush1.msra.mxu0 %v188
    %1274 = vmatprep.subr.mxu0 0.0
    %1275 = vmatpush1.msra.mxu0 0.0
    %1276 = vmatprep.subr.mxu0 0.0
    %1277 = vmatpush1.msra.mxu0 0.0
    %1278 = vmatprep.subr.mxu0 0.0
    %1279 = vmatpush1.msra.mxu0 0.0
    %1280 = vmatprep.subr.mxu0 0.0
    %1281 = vmatpush1.msra.mxu0 0.0
    %1282 = vmatprep.subr.mxu0 0.0
    %1283 = vmatpush1.msra.mxu0 0.0
    %1284 = vmatprep.subr.mxu0 0.0
    %1285 = vmatpush1.msra.mxu0 0.0
    %1286 = vmatprep.subr.mxu0 0.0
    %1287 = vmatpush1.msra.mxu0 0.0
    %1288 = vmatprep.subr.mxu0 0.0
    %1289 = vmatpush1.msra.mxu0 0.0
    %1290 = vmatprep.subr.mxu0 0.0
    %1291 = vmatpush1.msra.mxu0 0.0
    %1292 = vmatprep.subr.mxu0 0.0
    %1293 = vmatpush1.msra.mxu0 0.0
    %1294 = vmatprep.subr.mxu0 0.0
    %1295 = vmatpush1.msra.mxu0 0.0
    %1296 = vmatprep.subr.mxu0 0.0
    %1297 = vmatpush1.msra.mxu0 0.0
    %1298 = vmatprep.subr.mxu0 0.0
    %1299 = vmatpush1.msra.mxu0 0.0
    %1300 = vmatprep.subr.mxu0 0.0
    %1301 = vmatpush1.msra.mxu0 0.0
    %1302 = vmatprep.subr.mxu0 0.0
    %1303 = vmatpush1.msra.mxu0 0.0
    %1304 = vmatprep.subr.mxu0 0.0
    %1305 = vmatpush1.msra.mxu0 0.0
    %1306 = vmatprep.subr.mxu0 0.0
    %1307 = vmatpush1.msra.mxu0 0.0
    %1308 = vmatprep.subr.mxu0 0.0
    %1309 = vmatpush1.msra.mxu0 0.0
    %1310 = vmatprep.subr.mxu0 0.0
    %1311 = vmatpush1.msra.mxu0 0.0
    %1312 = vmatprep.subr.mxu0 0.0
    %1313 = vmatpush1.msra.mxu0 0.0
    %1314 = vmatprep.subr.mxu0 0.0
    %1315 = vmatpush1.msra.mxu0 0.0
    %1316 = vmatprep.subr.mxu0 0.0
    %1317 = vmatpush1.msra.mxu0 0.0
    %1318 = vmatprep.subr.mxu0 0.0
    %1319 = vmatpush1.msra.mxu0 0.0
    %1320 = vmatprep.subr.mxu0 0.0
    %1321 = vmatpush1.msra.mxu0 0.0
    %1322 = vmatprep.subr.mxu0 0.0
    %1323 = vmatpush1.msra.mxu0 0.0
    %1324 = vmatprep.subr.mxu0 0.0
    %1325 = vmatpush1.msra.mxu0 0.0
    %1326 = vmatprep.subr.mxu0 0.0
    %1327 = vmatpush1.msra.mxu0 0.0
    %1328 = vmatprep.subr.mxu0 0.0
    %1329 = vmatpush1.msra.mxu0 0.0
    %1330 = vmatprep.subr.mxu0 0.0
    %1331 = vmatpush1.msra.mxu0 0.0
    %1332 = vmatprep.subr.mxu0 0.0
    %1333 = vmatpush1.msra.mxu0 0.0
    %1334 = vmatprep.mubr.f32.mxu0 0.0
    %1335 = vmatmul.mubr.f32.gmra.mrb[0].mxu0 %v1268
    %v1336 = vpop.f32.mrb[0].mxu0
    %v1337 = vadd.f32 0.0, %v1336
    %v1338 = vpop.f32.mrb[0].mxu0
    %1339 = vdwg.mxu0
    %1340 = vmatprep.subr.mxu0 0.0
    %1341 = vmatpush1.msra.mxu0 %v190
    %1342 = vmatprep.subr.mxu0 0.0
    %1343 = vmatpush1.msra.mxu0 %v191
    %1344 = vmatprep.subr.mxu0 0.0
    %1345 = vmatpush1.msra.mxu0 0.0
    %1346 = vmatprep.subr.mxu0 0.0
    %1347 = vmatpush1.msra.mxu0 0.0
    %1348 = vmatprep.subr.mxu0 0.0
    %1349 = vmatpush1.msra.mxu0 0.0
    %1350 = vmatprep.subr.mxu0 0.0
    %1351 = vmatpush1.msra.mxu0 0.0
    %1352 = vmatprep.subr.mxu0 0.0
    %1353 = vmatpush1.msra.mxu0 0.0
    %1354 = vmatprep.subr.mxu0 0.0
    %1355 = vmatpush1.msra.mxu0 0.0
    %1356 = vmatprep.subr.mxu0 0.0
    %1357 = vmatpush1.msra.mxu0 0.0
    %1358 = vmatprep.subr.mxu0 0.0
    %1359 = vmatpush1.msra.mxu0 0.0
    %1360 = vmatprep.subr.mxu0 0.0
    %1361 = vmatpush1.msra.mxu0 0.0
    %1362 = vmatprep.subr.mxu0 0.0
    %1363 = vmatpush1.msra.mxu0 0.0
    %1364 = vmatprep.subr.mxu0 0.0
    %1365 = vmatpush1.msra.mxu0 0.0
    %1366 = vmatprep.subr.mxu0 0.0
    %1367 = vmatpush1.msra.mxu0 0.0
    %1368 = vmatprep.subr.mxu0 0.0
    %1369 = vmatpush1.msra.mxu0 0.0
    %1370 = vmatprep.subr.mxu0 0.0
    %1371 = vmatpush1.msra.mxu0 0.0
    %1372 = vmatprep.subr.mxu0 0.0
    %1373 = vmatpush1.msra.mxu0 0.0
    %1374 = vmatprep.subr.mxu0 0.0
    %1375 = vmatpush1.msra.mxu0 0.0
    %1376 = vmatprep.subr.mxu0 0.0
    %1377 = vmatpush1.msra.mxu0 0.0
    %1378 = vmatprep.subr.mxu0 0.0
    %1379 = vmatpush1.msra.mxu0 0.0
    %1380 = vmatprep.subr.mxu0 0.0
    %1381 = vmatpush1.msra.mxu0 0.0
    %1382 = vmatprep.subr.mxu0 0.0
    %1383 = vmatpush1.msra.mxu0 0.0
    %1384 = vmatprep.subr.mxu0 0.0
    %1385 = vmatpush1.msra.mxu0 0.0
    %1386 = vmatprep.subr.mxu0 0.0
    %1387 = vmatpush1.msra.mxu0 0.0
    %1388 = vmatprep.subr.mxu0 0.0
    %1389 = vmatpush1.msra.mxu0 0.0
    %1390 = vmatprep.subr.mxu0 0.0
    %1391 = vmatpush1.msra.mxu0 0.0
    %1392 = vmatprep.subr.mxu0 0.0
    %1393 = vmatpush1.msra.mxu0 0.0
    %1394 = vmatprep.subr.mxu0 0.0
    %1395 = vmatpush1.msra.mxu0 0.0
    %1396 = vmatprep.subr.mxu0 0.0
    %1397 = vmatpush1.msra.mxu0 0.0
    %1398 = vmatprep.subr.mxu0 0.0
    %1399 = vmatpush1.msra.mxu0 0.0
    %1400 = vmatprep.subr.mxu0 0.0
    %1401 = vmatpush1.msra.mxu0 0.0
    %1402 = vmatprep.subr.mxu0 0.0
    %1403 = vmatpush1.msra.mxu0 0.0
    %1404 = vmatprep.mubr.f32.mxu0 0.0
    %1405 = vmatmul.mubr.f32.gmra.mrb[0].mxu0 %v1268
    %v1406 = vpop.f32.mrb[0].mxu0
    %v1407 = vadd.f32 0.0, %v1406
    %v1408 = vpop.f32.mrb[0].mxu0
    %1409 = vdwg.mxu0
    %1410 = vmatprep.subr.mxu0 0.0
    %1411 = vmatpush1.msra.mxu0 %v193
    %1412 = vmatprep.subr.mxu0 0.0
    %1413 = vmatpush1.msra.mxu0 %v194
    %1414 = vmatprep.subr.mxu0 0.0
    %1415 = vmatpush1.msra.mxu0 0.0
    %1416 = vmatprep.subr.mxu0 0.0
    %1417 = vmatpush1.msra.mxu0 0.0
    %1418 = vmatprep.subr.mxu0 0.0
    %1419 = vmatpush1.msra.mxu0 0.0
    %1420 = vmatprep.subr.mxu0 0.0
    %1421 = vmatpush1.msra.mxu0 0.0
    %1422 = vmatprep.subr.mxu0 0.0
    %1423 = vmatpush1.msra.mxu0 0.0
    %1424 = vmatprep.subr.mxu0 0.0
    %1425 = vmatpush1.msra.mxu0 0.0
    %1426 = vmatprep.subr.mxu0 0.0
    %1427 = vmatpush1.msra.mxu0 0.0
    %1428 = vmatprep.subr.mxu0 0.0
    %1429 = vmatpush1.msra.mxu0 0.0
    %1430 = vmatprep.subr.mxu0 0.0
    %1431 = vmatpush1.msra.mxu0 0.0
    %1432 = vmatprep.subr.mxu0 0.0
    %1433 = vmatpush1.msra.mxu0 0.0
    %1434 = vmatprep.subr.mxu0 0.0
    %1435 = vmatpush1.msra.mxu0 0.0
    %1436 = vmatprep.subr.mxu0 0.0
    %1437 = vmatpush1.msra.mxu0 0.0
    %1438 = vmatprep.subr.mxu0 0.0
    %1439 = vmatpush1.msra.mxu0 0.0
    %1440 = vmatprep.subr.mxu0 0.0
    %1441 = vmatpush1.msra.mxu0 0.0
    %1442 = vmatprep.subr.mxu0 0.0
    %1443 = vmatpush1.msra.mxu0 0.0
    %1444 = vmatprep.subr.mxu0 0.0
    %1445 = vmatpush1.msra.mxu0 0.0
    %1446 = vmatprep.subr.mxu0 0.0
    %1447 = vmatpush1.msra.mxu0 0.0
    %1448 = vmatprep.subr.mxu0 0.0
    %1449 = vmatpush1.msra.mxu0 0.0
    %1450 = vmatprep.subr.mxu0 0.0
    %1451 = vmatpush1.msra.mxu0 0.0
    %1452 = vmatprep.subr.mxu0 0.0
    %1453 = vmatpush1.msra.mxu0 0.0
    %1454 = vmatprep.subr.mxu0 0.0
    %1455 = vmatpush1.msra.mxu0 0.0
    %1456 = vmatprep.subr.mxu0 0.0
    %1457 = vmatpush1.msra.mxu0 0.0
    %1458 = vmatprep.subr.mxu0 0.0
    %1459 = vmatpush1.msra.mxu0 0.0
    %1460 = vmatprep.subr.mxu0 0.0
    %1461 = vmatpush1.msra.mxu0 0.0
    %1462 = vmatprep.subr.mxu0 0.0
    %1463 = vmatpush1.msra.mxu0 0.0
    %1464 = vmatprep.subr.mxu0 0.0
    %1465 = vmatpush1.msra.mxu0 0.0
    %1466 = vmatprep.subr.mxu0 0.0
    %1467 = vmatpush1.msra.mxu0 0.0
    %1468 = vmatprep.subr.mxu0 0.0
    %1469 = vmatpush1.msra.mxu0 0.0
    %1470 = vmatprep.subr.mxu0 0.0
    %1471 = vmatpush1.msra.mxu0 0.0
    %1472 = vmatprep.subr.mxu0 0.0
    %1473 = vmatpush1.msra.mxu0 0.0
    %1474 = vmatprep.mubr.f32.mxu0 0.0
    %1475 = vmatmul.mubr.f32.gmra.mrb[0].mxu0 %v1268
    %v1476 = vpop.f32.mrb[0].mxu0
    %v1477 = vadd.f32 0.0, %v1476
    %v1478 = vpop.f32.mrb[0].mxu0
    %1479 = vdwg.mxu0
    %s1480 = scalar_lea.vmem [#allocation8], 24
    %v1481 = vld [vmem:[%s1480] sm:$0xff]
    %s1482 = scalar_lea.vmem [#allocation8], 32
    %v1483 = vld [vmem:[%s1482] sm:$0xff]
    %vm1484 = vcmask 64512
    %v1486 = vsel %vm1484, %v1483, 0
    %1488 = vmatprep.subr.mxu0 0.0
    %1489 = vmatpush1.msra.mxu0 %v1407
    %1490 = vmatprep.subr.mxu0 0.0
    %1491 = vmatpush1.msra.mxu0 0.0
    %1492 = vmatprep.subr.mxu0 0.0
    %1493 = vmatpush1.msra.mxu0 0.0
    %1494 = vmatprep.subr.mxu0 0.0
    %1495 = vmatpush1.msra.mxu0 0.0
    %1496 = vmatprep.subr.mxu0 0.0
    %1497 = vmatpush1.msra.mxu0 0.0
    %1498 = vmatprep.subr.mxu0 0.0
    %1499 = vmatpush1.msra.mxu0 0.0
    %1500 = vmatprep.subr.mxu0 0.0
    %1501 = vmatpush1.msra.mxu0 0.0
    %1502 = vmatprep.subr.mxu0 0.0
    %1503 = vmatpush1.msra.mxu0 0.0
    %1504 = vmatprep.subr.mxu0 0.0
    %1505 = vmatpush1.msra.mxu0 0.0
    %1506 = vmatprep.subr.mxu0 0.0
    %1507 = vmatpush1.msra.mxu0 0.0
    %1508 = vmatprep.subr.mxu0 0.0
    %1509 = vmatpush1.msra.mxu0 0.0
    %1510 = vmatprep.subr.mxu0 0.0
    %1511 = vmatpush1.msra.mxu0 0.0
    %1512 = vmatprep.subr.mxu0 0.0
    %1513 = vmatpush1.msra.mxu0 0.0
    %1514 = vmatprep.subr.mxu0 0.0
    %1515 = vmatpush1.msra.mxu0 0.0
    %1516 = vmatprep.subr.mxu0 0.0
    %1517 = vmatpush1.msra.mxu0 0.0
    %1518 = vmatprep.subr.mxu0 0.0
    %1519 = vmatpush1.msra.mxu0 0.0
    %1520 = vmatprep.subr.mxu0 0.0
    %1521 = vmatpush1.msra.mxu0 0.0
    %1522 = vmatprep.subr.mxu0 0.0
    %1523 = vmatpush1.msra.mxu0 0.0
    %1524 = vmatprep.subr.mxu0 0.0
    %1525 = vmatpush1.msra.mxu0 0.0
    %1526 = vmatprep.subr.mxu0 0.0
    %1527 = vmatpush1.msra.mxu0 0.0
    %1528 = vmatprep.subr.mxu0 0.0
    %1529 = vmatpush1.msra.mxu0 0.0
    %1530 = vmatprep.subr.mxu0 0.0
    %1531 = vmatpush1.msra.mxu0 0.0
    %1532 = vmatprep.subr.mxu0 0.0
    %1533 = vmatpush1.msra.mxu0 0.0
    %1534 = vmatprep.subr.mxu0 0.0
    %1535 = vmatpush1.msra.mxu0 0.0
    %1536 = vmatprep.subr.mxu0 0.0
    %1537 = vmatpush1.msra.mxu0 0.0
    %1538 = vmatprep.subr.mxu0 0.0
    %1539 = vmatpush1.msra.mxu0 0.0
    %1540 = vmatprep.subr.mxu0 0.0
    %1541 = vmatpush1.msra.mxu0 0.0
    %1542 = vmatprep.subr.mxu0 0.0
    %1543 = vmatpush1.msra.mxu0 0.0
    %1544 = vmatprep.subr.mxu0 0.0
    %1545 = vmatpush1.msra.mxu0 0.0
    %1546 = vmatprep.subr.mxu0 0.0
    %1547 = vmatpush1.msra.mxu0 0.0
    %1548 = vmatprep.subr.mxu0 0.0
    %1549 = vmatpush1.msra.mxu0 0.0
    %1550 = vmatprep.subr.mxu0 0.0
    %1551 = vmatpush1.msra.mxu0 0.0
    %1552 = vmatprep.mubr.f32.mxu0 0.0
    %1553 = vmatmul.mubr.f32.gmra.mrb[0].mxu0 %v1486
    %v1554 = vpop.f32.mrb[0].mxu0
    %v1555 = vadd.f32 0.0, %v1554
    %v1556 = vpop.f32.mrb[0].mxu0
    %1557 = vdwg.mxu0
    %v1559 = vsel %vm1484, %v1481, 0
    %1561 = vmatprep.subr.mxu0 0.0
    %1562 = vmatpush1.msra.mxu0 %v1337
    %1563 = vmatprep.subr.mxu0 0.0
    %1564 = vmatpush1.msra.mxu0 0.0
    %1565 = vmatprep.subr.mxu0 0.0
    %1566 = vmatpush1.msra.mxu0 0.0
    %1567 = vmatprep.subr.mxu0 0.0
    %1568 = vmatpush1.msra.mxu0 0.0
    %1569 = vmatprep.subr.mxu0 0.0
    %1570 = vmatpush1.msra.mxu0 0.0
    %1571 = vmatprep.subr.mxu0 0.0
    %1572 = vmatpush1.msra.mxu0 0.0
    %1573 = vmatprep.subr.mxu0 0.0
    %1574 = vmatpush1.msra.mxu0 0.0
    %1575 = vmatprep.subr.mxu0 0.0
    %1576 = vmatpush1.msra.mxu0 0.0
    %1577 = vmatprep.subr.mxu0 0.0
    %1578 = vmatpush1.msra.mxu0 0.0
    %1579 = vmatprep.subr.mxu0 0.0
    %1580 = vmatpush1.msra.mxu0 0.0
    %1581 = vmatprep.subr.mxu0 0.0
    %1582 = vmatpush1.msra.mxu0 0.0
    %1583 = vmatprep.subr.mxu0 0.0
    %1584 = vmatpush1.msra.mxu0 0.0
    %1585 = vmatprep.subr.mxu0 0.0
    %1586 = vmatpush1.msra.mxu0 0.0
    %1587 = vmatprep.subr.mxu0 0.0
    %1588 = vmatpush1.msra.mxu0 0.0
    %1589 = vmatprep.subr.mxu0 0.0
    %1590 = vmatpush1.msra.mxu0 0.0
    %1591 = vmatprep.subr.mxu0 0.0
    %1592 = vmatpush1.msra.mxu0 0.0
    %1593 = vmatprep.subr.mxu0 0.0
    %1594 = vmatpush1.msra.mxu0 0.0
    %1595 = vmatprep.subr.mxu0 0.0
    %1596 = vmatpush1.msra.mxu0 0.0
    %1597 = vmatprep.subr.mxu0 0.0
    %1598 = vmatpush1.msra.mxu0 0.0
    %1599 = vmatprep.subr.mxu0 0.0
    %1600 = vmatpush1.msra.mxu0 0.0
    %1601 = vmatprep.subr.mxu0 0.0
    %1602 = vmatpush1.msra.mxu0 0.0
    %1603 = vmatprep.subr.mxu0 0.0
    %1604 = vmatpush1.msra.mxu0 0.0
    %1605 = vmatprep.subr.mxu0 0.0
    %1606 = vmatpush1.msra.mxu0 0.0
    %1607 = vmatprep.subr.mxu0 0.0
    %1608 = vmatpush1.msra.mxu0 0.0
    %1609 = vmatprep.subr.mxu0 0.0
    %1610 = vmatpush1.msra.mxu0 0.0
    %1611 = vmatprep.subr.mxu0 0.0
    %1612 = vmatpush1.msra.mxu0 0.0
    %1613 = vmatprep.subr.mxu0 0.0
    %1614 = vmatpush1.msra.mxu0 0.0
    %1615 = vmatprep.subr.mxu0 0.0
    %1616 = vmatpush1.msra.mxu0 0.0
    %1617 = vmatprep.subr.mxu0 0.0
    %1618 = vmatpush1.msra.mxu0 0.0
    %1619 = vmatprep.subr.mxu0 0.0
    %1620 = vmatpush1.msra.mxu0 0.0
    %1621 = vmatprep.subr.mxu0 0.0
    %1622 = vmatpush1.msra.mxu0 0.0
    %1623 = vmatprep.subr.mxu0 0.0
    %1624 = vmatpush1.msra.mxu0 0.0
    %1625 = vmatprep.mubr.f32.mxu0 0.0
    %1626 = vmatmul.mubr.f32.gmra.mrb[0].mxu0 %v1559
    %v1627 = vpop.f32.mrb[0].mxu0
    %v1628 = vadd.f32 %v1555, %v1627
    %v1629 = vpop.f32.mrb[0].mxu0
    %1630 = vdwg.mxu0
    %s1631 = scalar_lea.vmem [#allocation8], 40
    %v1632 = vld [vmem:[%s1631] sm:$0xff]
    %v1634 = vsel %vm1484, %v1632, 0
    %1636 = vmatprep.subr.mxu0 0.0
    %1637 = vmatpush1.msra.mxu0 %v1477
    %1638 = vmatprep.subr.mxu0 0.0
    %1639 = vmatpush1.msra.mxu0 0.0
    %1640 = vmatprep.subr.mxu0 0.0
    %1641 = vmatpush1.msra.mxu0 0.0
    %1642 = vmatprep.subr.mxu0 0.0
    %1643 = vmatpush1.msra.mxu0 0.0
    %1644 = vmatprep.subr.mxu0 0.0
    %1645 = vmatpush1.msra.mxu0 0.0
    %1646 = vmatprep.subr.mxu0 0.0
    %1647 = vmatpush1.msra.mxu0 0.0
    %1648 = vmatprep.subr.mxu0 0.0
    %1649 = vmatpush1.msra.mxu0 0.0
    %1650 = vmatprep.subr.mxu0 0.0
    %1651 = vmatpush1.msra.mxu0 0.0
    %1652 = vmatprep.subr.mxu0 0.0
    %1653 = vmatpush1.msra.mxu0 0.0
    %1654 = vmatprep.subr.mxu0 0.0
    %1655 = vmatpush1.msra.mxu0 0.0
    %1656 = vmatprep.subr.mxu0 0.0
    %1657 = vmatpush1.msra.mxu0 0.0
    %1658 = vmatprep.subr.mxu0 0.0
    %1659 = vmatpush1.msra.mxu0 0.0
    %1660 = vmatprep.subr.mxu0 0.0
    %1661 = vmatpush1.msra.mxu0 0.0
    %1662 = vmatprep.subr.mxu0 0.0
    %1663 = vmatpush1.msra.mxu0 0.0
    %1664 = vmatprep.subr.mxu0 0.0
    %1665 = vmatpush1.msra.mxu0 0.0
    %1666 = vmatprep.subr.mxu0 0.0
    %1667 = vmatpush1.msra.mxu0 0.0
    %1668 = vmatprep.subr.mxu0 0.0
    %1669 = vmatpush1.msra.mxu0 0.0
    %1670 = vmatprep.subr.mxu0 0.0
    %1671 = vmatpush1.msra.mxu0 0.0
    %1672 = vmatprep.subr.mxu0 0.0
    %1673 = vmatpush1.msra.mxu0 0.0
    %1674 = vmatprep.subr.mxu0 0.0
    %1675 = vmatpush1.msra.mxu0 0.0
    %1676 = vmatprep.subr.mxu0 0.0
    %1677 = vmatpush1.msra.mxu0 0.0
    %1678 = vmatprep.subr.mxu0 0.0
    %1679 = vmatpush1.msra.mxu0 0.0
    %1680 = vmatprep.subr.mxu0 0.0
    %1681 = vmatpush1.msra.mxu0 0.0
    %1682 = vmatprep.subr.mxu0 0.0
    %1683 = vmatpush1.msra.mxu0 0.0
    %1684 = vmatprep.subr.mxu0 0.0
    %1685 = vmatpush1.msra.mxu0 0.0
    %1686 = vmatprep.subr.mxu0 0.0
    %1687 = vmatpush1.msra.mxu0 0.0
    %1688 = vmatprep.subr.mxu0 0.0
    %1689 = vmatpush1.msra.mxu0 0.0
    %1690 = vmatprep.subr.mxu0 0.0
    %1691 = vmatpush1.msra.mxu0 0.0
    %1692 = vmatprep.subr.mxu0 0.0
    %1693 = vmatpush1.msra.mxu0 0.0
    %1694 = vmatprep.subr.mxu0 0.0
    %1695 = vmatpush1.msra.mxu0 0.0
    %1696 = vmatprep.subr.mxu0 0.0
    %1697 = vmatpush1.msra.mxu0 0.0
    %1698 = vmatprep.subr.mxu0 0.0
    %1699 = vmatpush1.msra.mxu0 0.0
    %1700 = vmatprep.mubr.f32.mxu0 0.0
    %1701 = vmatmul.mubr.f32.gmra.mrb[0].mxu0 %v1634
    %v1702 = vpop.f32.mrb[0].mxu0
    %v1703 = vadd.f32 0.0, %v1702
    %v1704 = vpop.f32.mrb[0].mxu0
    %1705 = vdwg.mxu0
    %v1706 = vadd.f32 %v1628, %v1703
    %v1707 = vsel %vm462, %v1706, 0.0
    %1708 = vadd.xlane.f32.xlu0 %v1707
    %v1709 = vpop.xlane.xlu0 %1708
    %v1710 = vrot.slane %v1709, 4
    %v1711 = vadd.f32 %v1709, %v1710
    %v1712 = vrot.slane %v1711, 2
    %v1713 = vadd.f32 %v1711, %v1712
    %v1714 = vrot.slane %v1713, 1
    %v1715 = vadd.f32 %v1713, %v1714
    %s1716 = vtos %v1715
    %v1717 = vstv %s1716
    %v1718 = vmul.f32 %v1706, %v1706
    %v1719 = vsel %vm462, %v1718, 0.0
    %1720 = vadd.xlane.f32.xlu0 %v1719
    %v1721 = vpop.xlane.xlu0 %1720
    %v1722 = vrot.slane %v1721, 4
    %v1723 = vadd.f32 %v1721, %v1722
    %v1724 = vrot.slane %v1723, 2
    %v1725 = vadd.f32 %v1723, %v1724
    %v1726 = vrot.slane %v1725, 1
    %v1727 = vadd.f32 %v1725, %v1726
    %s1728 = vtos %v1727
    %v1729 = vstv %s1728
    %v1730 = vrcp.pop 128.0
    %v1731 = vmul.f32 %v1717, %v1730
    %v1732 = vmul.f32 %v1729, %v1730
    %v1733 = vmul.f32 %v1731, %v1731
    %v1734 = vsub.f32 %v1732, %v1733
    %v1735 = vmax.f32 %v1734, 0.0
    %s1736 = sld [smem:[#allocation15]]
    %v1737 = vadd.f32 %v1735, 1e-05
    %v1738 = vrsqrt.pop %v1737
    %v1739 = vstv %s1736
    %v1740 = vmul.f32 %v1739, %v1738
    %s1741 = sld [smem:[#allocation17]]
    %v1742 = vmul.f32 %v1731, %v1740
    %v1743 = vstv %s1741
    %v1744 = vsub.f32 %v1743, %v1742
    %v1745 = vmul.f32 %v1706, %v1740
    %v1746 = vadd.f32 %v1745, %v1744
    %s1747 = scalar_lea.vmem [#allocation6], 96
    %v1748 = vld [vmem:[%s1747] sm:$0xff]
    %v1749 = vld [vmem:[%s1747 + $0x8] sm:$0xff]
    %s1750 = scalar_lea.vmem [#allocation6], 112
    %v1751 = vld [vmem:[%s1750] sm:$0xff]
    %v1752 = vld [vmem:[%s1750 + $0x8] sm:$0xff]
    %v1754 = vsel %vm462, %v1751, 0
    %v1757 = vsel %vm462, %v1752, 0
    %1759 = vmatprep.subr.mxu0 0.0
    %1760 = vmatpush1.msra.mxu0 %v374
    %1761 = vmatprep.subr.mxu0 0.0
    %1762 = vmatpush1.msra.mxu0 %v379
    %1763 = vmatprep.subr.mxu0 0.0
    %1764 = vmatpush1.msra.mxu0 0.0
    %1765 = vmatprep.subr.mxu0 0.0
    %1766 = vmatpush1.msra.mxu0 0.0
    %1767 = vmatprep.subr.mxu0 0.0
    %1768 = vmatpush1.msra.mxu0 0.0
    %1769 = vmatprep.subr.mxu0 0.0
    %1770 = vmatpush1.msra.mxu0 0.0
    %1771 = vmatprep.subr.mxu0 0.0
    %1772 = vmatpush1.msra.mxu0 0.0
    %1773 = vmatprep.subr.mxu0 0.0
    %1774 = vmatpush1.msra.mxu0 0.0
    %1775 = vmatprep.subr.mxu0 0.0
    %1776 = vmatpush1.msra.mxu0 0.0
    %1777 = vmatprep.subr.mxu0 0.0
    %1778 = vmatpush1.msra.mxu0 0.0
    %1779 = vmatprep.subr.mxu0 0.0
    %1780 = vmatpush1.msra.mxu0 0.0
    %1781 = vmatprep.subr.mxu0 0.0
    %1782 = vmatpush1.msra.mxu0 0.0
    %1783 = vmatprep.subr.mxu0 0.0
    %1784 = vmatpush1.msra.mxu0 0.0
    %1785 = vmatprep.subr.mxu0 0.0
    %1786 = vmatpush1.msra.mxu0 0.0
    %1787 = vmatprep.subr.mxu0 0.0
    %1788 = vmatpush1.msra.mxu0 0.0
    %1789 = vmatprep.subr.mxu0 0.0
    %1790 = vmatpush1.msra.mxu0 0.0
    %1791 = vmatprep.subr.mxu0 0.0
    %1792 = vmatpush1.msra.mxu0 0.0
    %1793 = vmatprep.subr.mxu0 0.0
    %1794 = vmatpush1.msra.mxu0 0.0
    %1795 = vmatprep.subr.mxu0 0.0
    %1796 = vmatpush1.msra.mxu0 0.0
    %1797 = vmatprep.subr.mxu0 0.0
    %1798 = vmatpush1.msra.mxu0 0.0
    %1799 = vmatprep.subr.mxu0 0.0
    %1800 = vmatpush1.msra.mxu0 0.0
    %1801 = vmatprep.subr.mxu0 0.0
    %1802 = vmatpush1.msra.mxu0 0.0
    %1803 = vmatprep.subr.mxu0 0.0
    %1804 = vmatpush1.msra.mxu0 0.0
    %1805 = vmatprep.subr.mxu0 0.0
    %1806 = vmatpush1.msra.mxu0 0.0
    %1807 = vmatprep.subr.mxu0 0.0
    %1808 = vmatpush1.msra.mxu0 0.0
    %1809 = vmatprep.subr.mxu0 0.0
    %1810 = vmatpush1.msra.mxu0 0.0
    %1811 = vmatprep.subr.mxu0 0.0
    %1812 = vmatpush1.msra.mxu0 0.0
    %1813 = vmatprep.subr.mxu0 0.0
    %1814 = vmatpush1.msra.mxu0 0.0
    %1815 = vmatprep.subr.mxu0 0.0
    %1816 = vmatpush1.msra.mxu0 0.0
    %1817 = vmatprep.subr.mxu0 0.0
    %1818 = vmatpush1.msra.mxu0 0.0
    %1819 = vmatprep.subr.mxu0 0.0
    %1820 = vmatpush1.msra.mxu0 0.0
    %1821 = vmatprep.subr.mxu0 0.0
    %1822 = vmatpush1.msra.mxu0 0.0
    %1823 = vmatprep.mubr.f32.mxu0 0.0
    %1824 = vmatmul.mubr.f32.gmra.mrb[0].mxu0 %v1754
    %v1825 = vpop.f32.mrb[0].mxu0
    %v1826 = vadd.f32 0.0, %v1825
    %v1827 = vpop.f32.mrb[0].mxu0
    %1828 = vmatprep.mubr.f32.mxu0 0.0
    %1829 = vmatmul.mubr.f32.gmra.mrb[0].mxu0 %v1757
    %v1830 = vpop.f32.mrb[0].mxu0
    %v1831 = vadd.f32 0.0, %v1830
    %v1832 = vpop.f32.mrb[0].mxu0
    %1833 = vdwg.mxu0
    %v1835 = vsel %vm462, %v1748, 0
    %v1838 = vsel %vm462, %v1749, 0
    %1840 = vmatprep.subr.mxu0 0.0
    %1841 = vmatpush1.msra.mxu0 %v299
    %1842 = vmatprep.subr.mxu0 0.0
    %1843 = vmatpush1.msra.mxu0 %v304
    %1844 = vmatprep.subr.mxu0 0.0
    %1845 = vmatpush1.msra.mxu0 0.0
    %1846 = vmatprep.subr.mxu0 0.0
    %1847 = vmatpush1.msra.mxu0 0.0
    %1848 = vmatprep.subr.mxu0 0.0
    %1849 = vmatpush1.msra.mxu0 0.0
    %1850 = vmatprep.subr.mxu0 0.0
    %1851 = vmatpush1.msra.mxu0 0.0
    %1852 = vmatprep.subr.mxu0 0.0
    %1853 = vmatpush1.msra.mxu0 0.0
    %1854 = vmatprep.subr.mxu0 0.0
    %1855 = vmatpush1.msra.mxu0 0.0
    %1856 = vmatprep.subr.mxu0 0.0
    %1857 = vmatpush1.msra.mxu0 0.0
    %1858 = vmatprep.subr.mxu0 0.0
    %1859 = vmatpush1.msra.mxu0 0.0
    %1860 = vmatprep.subr.mxu0 0.0
    %1861 = vmatpush1.msra.mxu0 0.0
    %1862 = vmatprep.subr.mxu0 0.0
    %1863 = vmatpush1.msra.mxu0 0.0
    %1864 = vmatprep.subr.mxu0 0.0
    %1865 = vmatpush1.msra.mxu0 0.0
    %1866 = vmatprep.subr.mxu0 0.0
    %1867 = vmatpush1.msra.mxu0 0.0
    %1868 = vmatprep.subr.mxu0 0.0
    %1869 = vmatpush1.msra.mxu0 0.0
    %1870 = vmatprep.subr.mxu0 0.0
    %1871 = vmatpush1.msra.mxu0 0.0
    %1872 = vmatprep.subr.mxu0 0.0
    %1873 = vmatpush1.msra.mxu0 0.0
    %1874 = vmatprep.subr.mxu0 0.0
    %1875 = vmatpush1.msra.mxu0 0.0
    %1876 = vmatprep.subr.mxu0 0.0
    %1877 = vmatpush1.msra.mxu0 0.0
    %1878 = vmatprep.subr.mxu0 0.0
    %1879 = vmatpush1.msra.mxu0 0.0
    %1880 = vmatprep.subr.mxu0 0.0
    %1881 = vmatpush1.msra.mxu0 0.0
    %1882 = vmatprep.subr.mxu0 0.0
    %1883 = vmatpush1.msra.mxu0 0.0
    %1884 = vmatprep.subr.mxu0 0.0
    %1885 = vmatpush1.msra.mxu0 0.0
    %1886 = vmatprep.subr.mxu0 0.0
    %1887 = vmatpush1.msra.mxu0 0.0
    %1888 = vmatprep.subr.mxu0 0.0
    %1889 = vmatpush1.msra.mxu0 0.0
    %1890 = vmatprep.subr.mxu0 0.0
    %1891 = vmatpush1.msra.mxu0 0.0
    %1892 = vmatprep.subr.mxu0 0.0
    %1893 = vmatpush1.msra.mxu0 0.0
    %1894 = vmatprep.subr.mxu0 0.0
    %1895 = vmatpush1.msra.mxu0 0.0
    %1896 = vmatprep.subr.mxu0 0.0
    %1897 = vmatpush1.msra.mxu0 0.0
    %1898 = vmatprep.subr.mxu0 0.0
    %1899 = vmatpush1.msra.mxu0 0.0
    %1900 = vmatprep.subr.mxu0 0.0
    %1901 = vmatpush1.msra.mxu0 0.0
    %1902 = vmatprep.subr.mxu0 0.0
    %1903 = vmatpush1.msra.mxu0 0.0
    %1904 = vmatprep.mubr.f32.mxu0 0.0
    %1905 = vmatmul.mubr.f32.gmra.mrb[0].mxu0 %v1835
    %v1906 = vpop.f32.mrb[0].mxu0
    %v1907 = vadd.f32 %v1826, %v1906
    %v1908 = vpop.f32.mrb[0].mxu0
    %1909 = vmatprep.mubr.f32.mxu0 0.0
    %1910 = vmatmul.mubr.f32.gmra.mrb[0].mxu0 %v1838
    %v1911 = vpop.f32.mrb[0].mxu0
    %v1912 = vadd.f32 %v1831, %v1911
    %v1913 = vpop.f32.mrb[0].mxu0
    %1914 = vdwg.mxu0
    %s1915 = scalar_lea.vmem [#allocation6], 128
    %v1916 = vld [vmem:[%s1915] sm:$0xff]
    %v1917 = vld [vmem:[%s1915 + $0x8] sm:$0xff]
    %v1919 = vsel %vm462, %v1916, 0
    %v1922 = vsel %vm462, %v1917, 0
    %1924 = vmatprep.subr.mxu0 0.0
    %1925 = vmatpush1.msra.mxu0 %v449
    %1926 = vmatprep.subr.mxu0 0.0
    %1927 = vmatpush1.msra.mxu0 %v454
    %1928 = vmatprep.subr.mxu0 0.0
    %1929 = vmatpush1.msra.mxu0 0.0
    %1930 = vmatprep.subr.mxu0 0.0
    %1931 = vmatpush1.msra.mxu0 0.0
    %1932 = vmatprep.subr.mxu0 0.0
    %1933 = vmatpush1.msra.mxu0 0.0
    %1934 = vmatprep.subr.mxu0 0.0
    %1935 = vmatpush1.msra.mxu0 0.0
    %1936 = vmatprep.subr.mxu0 0.0
    %1937 = vmatpush1.msra.mxu0 0.0
    %1938 = vmatprep.subr.mxu0 0.0
    %1939 = vmatpush1.msra.mxu0 0.0
    %1940 = vmatprep.subr.mxu0 0.0
    %1941 = vmatpush1.msra.mxu0 0.0
    %1942 = vmatprep.subr.mxu0 0.0
    %1943 = vmatpush1.msra.mxu0 0.0
    %1944 = vmatprep.subr.mxu0 0.0
    %1945 = vmatpush1.msra.mxu0 0.0
    %1946 = vmatprep.subr.mxu0 0.0
    %1947 = vmatpush1.msra.mxu0 0.0
    %1948 = vmatprep.subr.mxu0 0.0
    %1949 = vmatpush1.msra.mxu0 0.0
    %1950 = vmatprep.subr.mxu0 0.0
    %1951 = vmatpush1.msra.mxu0 0.0
    %1952 = vmatprep.subr.mxu0 0.0
    %1953 = vmatpush1.msra.mxu0 0.0
    %1954 = vmatprep.subr.mxu0 0.0
    %1955 = vmatpush1.msra.mxu0 0.0
    %1956 = vmatprep.subr.mxu0 0.0
    %1957 = vmatpush1.msra.mxu0 0.0
    %1958 = vmatprep.subr.mxu0 0.0
    %1959 = vmatpush1.msra.mxu0 0.0
    %1960 = vmatprep.subr.mxu0 0.0
    %1961 = vmatpush1.msra.mxu0 0.0
    %1962 = vmatprep.subr.mxu0 0.0
    %1963 = vmatpush1.msra.mxu0 0.0
    %1964 = vmatprep.subr.mxu0 0.0
    %1965 = vmatpush1.msra.mxu0 0.0
    %1966 = vmatprep.subr.mxu0 0.0
    %1967 = vmatpush1.msra.mxu0 0.0
    %1968 = vmatprep.subr.mxu0 0.0
    %1969 = vmatpush1.msra.mxu0 0.0
    %1970 = vmatprep.subr.mxu0 0.0
    %1971 = vmatpush1.msra.mxu0 0.0
    %1972 = vmatprep.subr.mxu0 0.0
    %1973 = vmatpush1.msra.mxu0 0.0
    %1974 = vmatprep.subr.mxu0 0.0
    %1975 = vmatpush1.msra.mxu0 0.0
    %1976 = vmatprep.subr.mxu0 0.0
    %1977 = vmatpush1.msra.mxu0 0.0
    %1978 = vmatprep.subr.mxu0 0.0
    %1979 = vmatpush1.msra.mxu0 0.0
    %1980 = vmatprep.subr.mxu0 0.0
    %1981 = vmatpush1.msra.mxu0 0.0
    %1982 = vmatprep.subr.mxu0 0.0
    %1983 = vmatpush1.msra.mxu0 0.0
    %1984 = vmatprep.subr.mxu0 0.0
    %1985 = vmatpush1.msra.mxu0 0.0
    %1986 = vmatprep.subr.mxu0 0.0
    %1987 = vmatpush1.msra.mxu0 0.0
    %1988 = vmatprep.mubr.f32.mxu0 0.0
    %1989 = vmatmul.mubr.f32.gmra.mrb[0].mxu0 %v1919
    %v1990 = vpop.f32.mrb[0].mxu0
    %v1991 = vadd.f32 0.0, %v1990
    %v1992 = vpop.f32.mrb[0].mxu0
    %1993 = vmatprep.mubr.f32.mxu0 0.0
    %1994 = vmatmul.mubr.f32.gmra.mrb[0].mxu0 %v1922
    %v1995 = vpop.f32.mrb[0].mxu0
    %v1996 = vadd.f32 0.0, %v1995
    %v1997 = vpop.f32.mrb[0].mxu0
    %1998 = vdwg.mxu0
    %v1999 = vadd.f32 %v1907, %v1991
    %v2000 = vadd.f32 %v1912, %v1996
    %s2001 = sld [smem:[#allocation14 + $0x2]]
    %v2002 = vstv %s2001
    %v2003 = vadd.f32 %v1999, %v2002
    %v2004 = vadd.f32 %v2000, %v2002
    %v2006 = vsel %vm225, %v2003, 0
    %v2009 = vsel %vm225, %v2004, 0
    %2011 = vmatprep.subr.mxu0 0.0
    %2012 = vmatpush1.msra.mxu0 %v195
    %2013 = vmatprep.subr.mxu0 0.0
    %2014 = vmatpush1.msra.mxu0 %v196
    %2015 = vmatprep.subr.mxu0 0.0
    %2016 = vmatpush1.msra.mxu0 %v197
    %2017 = vmatprep.subr.mxu0 0.0
    %2018 = vmatpush1.msra.mxu0 %v198
    %2019 = vmatprep.subr.mxu0 0.0
    %2020 = vmatpush1.msra.mxu0 0.0
    %2021 = vmatprep.subr.mxu0 0.0
    %2022 = vmatpush1.msra.mxu0 0.0
    %2023 = vmatprep.subr.mxu0 0.0
    %2024 = vmatpush1.msra.mxu0 0.0
    %2025 = vmatprep.subr.mxu0 0.0
    %2026 = vmatpush1.msra.mxu0 0.0
    %2027 = vmatprep.subr.mxu0 0.0
    %2028 = vmatpush1.msra.mxu0 0.0
    %2029 = vmatprep.subr.mxu0 0.0
    %2030 = vmatpush1.msra.mxu0 0.0
    %2031 = vmatprep.subr.mxu0 0.0
    %2032 = vmatpush1.msra.mxu0 0.0
    %2033 = vmatprep.subr.mxu0 0.0
    %2034 = vmatpush1.msra.mxu0 0.0
    %2035 = vmatprep.subr.mxu0 0.0
    %2036 = vmatpush1.msra.mxu0 0.0
    %2037 = vmatprep.subr.mxu0 0.0
    %2038 = vmatpush1.msra.mxu0 0.0
    %2039 = vmatprep.subr.mxu0 0.0
    %2040 = vmatpush1.msra.mxu0 0.0
    %2041 = vmatprep.subr.mxu0 0.0
    %2042 = vmatpush1.msra.mxu0 0.0
    %2043 = vmatprep.subr.mxu0 0.0
    %2044 = vmatpush1.msra.mxu0 0.0
    %2045 = vmatprep.subr.mxu0 0.0
    %2046 = vmatpush1.msra.mxu0 0.0
    %2047 = vmatprep.subr.mxu0 0.0
    %2048 = vmatpush1.msra.mxu0 0.0
    %2049 = vmatprep.subr.mxu0 0.0
    %2050 = vmatpush1.msra.mxu0 0.0
    %2051 = vmatprep.subr.mxu0 0.0
    %2052 = vmatpush1.msra.mxu0 0.0
    %2053 = vmatprep.subr.mxu0 0.0
    %2054 = vmatpush1.msra.mxu0 0.0
    %2055 = vmatprep.subr.mxu0 0.0
    %2056 = vmatpush1.msra.mxu0 0.0
    %2057 = vmatprep.subr.mxu0 0.0
    %2058 = vmatpush1.msra.mxu0 0.0
    %2059 = vmatprep.subr.mxu0 0.0
    %2060 = vmatpush1.msra.mxu0 0.0
    %2061 = vmatprep.subr.mxu0 0.0
    %2062 = vmatpush1.msra.mxu0 0.0
    %2063 = vmatprep.subr.mxu0 0.0
    %2064 = vmatpush1.msra.mxu0 0.0
    %2065 = vmatprep.subr.mxu0 0.0
    %2066 = vmatpush1.msra.mxu0 0.0
    %2067 = vmatprep.subr.mxu0 0.0
    %2068 = vmatpush1.msra.mxu0 0.0
    %2069 = vmatprep.subr.mxu0 0.0
    %2070 = vmatpush1.msra.mxu0 0.0
    %2071 = vmatprep.subr.mxu0 0.0
    %2072 = vmatpush1.msra.mxu0 0.0
    %2073 = vmatprep.subr.mxu0 0.0
    %2074 = vmatpush1.msra.mxu0 0.0
    %2075 = vmatprep.mubr.f32.mxu0 0.0
    %2076 = vmatmul.mubr.f32.gmra.mrb[0].mxu0 %v2006
    %v2077 = vpop.f32.mrb[0].mxu0
    %v2078 = vadd.f32 0.0, %v2077
    %v2079 = vpop.f32.mrb[0].mxu0
    %2080 = vmatprep.mubr.f32.mxu0 0.0
    %2081 = vmatmul.mubr.f32.gmra.mrb[0].mxu0 %v2009
    %v2082 = vpop.f32.mrb[0].mxu0
    %v2083 = vadd.f32 0.0, %v2082
    %v2084 = vpop.f32.mrb[0].mxu0
    %2085 = vdwg.mxu0
    %2086 = vmatprep.subr.mxu0 0.0
    %2087 = vmatpush1.msra.mxu0 %v200
    %2088 = vmatprep.subr.mxu0 0.0
    %2089 = vmatpush1.msra.mxu0 %v201
    %2090 = vmatprep.subr.mxu0 0.0
    %2091 = vmatpush1.msra.mxu0 %v202
    %2092 = vmatprep.subr.mxu0 0.0
    %2093 = vmatpush1.msra.mxu0 %v203
    %2094 = vmatprep.subr.mxu0 0.0
    %2095 = vmatpush1.msra.mxu0 0.0
    %2096 = vmatprep.subr.mxu0 0.0
    %2097 = vmatpush1.msra.mxu0 0.0
    %2098 = vmatprep.subr.mxu0 0.0
    %2099 = vmatpush1.msra.mxu0 0.0
    %2100 = vmatprep.subr.mxu0 0.0
    %2101 = vmatpush1.msra.mxu0 0.0
    %2102 = vmatprep.subr.mxu0 0.0
    %2103 = vmatpush1.msra.mxu0 0.0
    %2104 = vmatprep.subr.mxu0 0.0
    %2105 = vmatpush1.msra.mxu0 0.0
    %2106 = vmatprep.subr.mxu0 0.0
    %2107 = vmatpush1.msra.mxu0 0.0
    %2108 = vmatprep.subr.mxu0 0.0
    %2109 = vmatpush1.msra.mxu0 0.0
    %2110 = vmatprep.subr.mxu0 0.0
    %2111 = vmatpush1.msra.mxu0 0.0
    %2112 = vmatprep.subr.mxu0 0.0
    %2113 = vmatpush1.msra.mxu0 0.0
    %2114 = vmatprep.subr.mxu0 0.0
    %2115 = vmatpush1.msra.mxu0 0.0
    %2116 = vmatprep.subr.mxu0 0.0
    %2117 = vmatpush1.msra.mxu0 0.0
    %2118 = vmatprep.subr.mxu0 0.0
    %2119 = vmatpush1.msra.mxu0 0.0
    %2120 = vmatprep.subr.mxu0 0.0
    %2121 = vmatpush1.msra.mxu0 0.0
    %2122 = vmatprep.subr.mxu0 0.0
    %2123 = vmatpush1.msra.mxu0 0.0
    %2124 = vmatprep.subr.mxu0 0.0
    %2125 = vmatpush1.msra.mxu0 0.0
    %2126 = vmatprep.subr.mxu0 0.0
    %2127 = vmatpush1.msra.mxu0 0.0
    %2128 = vmatprep.subr.mxu0 0.0
    %2129 = vmatpush1.msra.mxu0 0.0
    %2130 = vmatprep.subr.mxu0 0.0
    %2131 = vmatpush1.msra.mxu0 0.0
    %2132 = vmatprep.subr.mxu0 0.0
    %2133 = vmatpush1.msra.mxu0 0.0
    %2134 = vmatprep.subr.mxu0 0.0
    %2135 = vmatpush1.msra.mxu0 0.0
    %2136 = vmatprep.subr.mxu0 0.0
    %2137 = vmatpush1.msra.mxu0 0.0
    %2138 = vmatprep.subr.mxu0 0.0
    %2139 = vmatpush1.msra.mxu0 0.0
    %2140 = vmatprep.subr.mxu0 0.0
    %2141 = vmatpush1.msra.mxu0 0.0
    %2142 = vmatprep.subr.mxu0 0.0
    %2143 = vmatpush1.msra.mxu0 0.0
    %2144 = vmatprep.subr.mxu0 0.0
    %2145 = vmatpush1.msra.mxu0 0.0
    %2146 = vmatprep.subr.mxu0 0.0
    %2147 = vmatpush1.msra.mxu0 0.0
    %2148 = vmatprep.subr.mxu0 0.0
    %2149 = vmatpush1.msra.mxu0 0.0
    %2150 = vmatprep.mubr.f32.mxu0 0.0
    %2151 = vmatmul.mubr.f32.gmra.mrb[0].mxu0 %v2006
    %v2152 = vpop.f32.mrb[0].mxu0
    %v2153 = vadd.f32 0.0, %v2152
    %v2154 = vpop.f32.mrb[0].mxu0
    %2155 = vmatprep.mubr.f32.mxu0 0.0
    %2156 = vmatmul.mubr.f32.gmra.mrb[0].mxu0 %v2009
    %v2157 = vpop.f32.mrb[0].mxu0
    %v2158 = vadd.f32 0.0, %v2157
    %v2159 = vpop.f32.mrb[0].mxu0
    %2160 = vdwg.mxu0
    %2161 = vmatprep.subr.mxu0 0.0
    %2162 = vmatpush1.msra.mxu0 %v205
    %2163 = vmatprep.subr.mxu0 0.0
    %2164 = vmatpush1.msra.mxu0 %v206
    %2165 = vmatprep.subr.mxu0 0.0
    %2166 = vmatpush1.msra.mxu0 %v207
    %2167 = vmatprep.subr.mxu0 0.0
    %2168 = vmatpush1.msra.mxu0 %v208
    %2169 = vmatprep.subr.mxu0 0.0
    %2170 = vmatpush1.msra.mxu0 0.0
    %2171 = vmatprep.subr.mxu0 0.0
    %2172 = vmatpush1.msra.mxu0 0.0
    %2173 = vmatprep.subr.mxu0 0.0
    %2174 = vmatpush1.msra.mxu0 0.0
    %2175 = vmatprep.subr.mxu0 0.0
    %2176 = vmatpush1.msra.mxu0 0.0
    %2177 = vmatprep.subr.mxu0 0.0
    %2178 = vmatpush1.msra.mxu0 0.0
    %2179 = vmatprep.subr.mxu0 0.0
    %2180 = vmatpush1.msra.mxu0 0.0
    %2181 = vmatprep.subr.mxu0 0.0
    %2182 = vmatpush1.msra.mxu0 0.0
    %2183 = vmatprep.subr.mxu0 0.0
    %2184 = vmatpush1.msra.mxu0 0.0
    %2185 = vmatprep.subr.mxu0 0.0
    %2186 = vmatpush1.msra.mxu0 0.0
    %2187 = vmatprep.subr.mxu0 0.0
    %2188 = vmatpush1.msra.mxu0 0.0
    %2189 = vmatprep.subr.mxu0 0.0
    %2190 = vmatpush1.msra.mxu0 0.0
    %2191 = vmatprep.subr.mxu0 0.0
    %2192 = vmatpush1.msra.mxu0 0.0
    %2193 = vmatprep.subr.mxu0 0.0
    %2194 = vmatpush1.msra.mxu0 0.0
    %2195 = vmatprep.subr.mxu0 0.0
    %2196 = vmatpush1.msra.mxu0 0.0
    %2197 = vmatprep.subr.mxu0 0.0
    %2198 = vmatpush1.msra.mxu0 0.0
    %2199 = vmatprep.subr.mxu0 0.0
    %2200 = vmatpush1.msra.mxu0 0.0
    %2201 = vmatprep.subr.mxu0 0.0
    %2202 = vmatpush1.msra.mxu0 0.0
    %2203 = vmatprep.subr.mxu0 0.0
    %2204 = vmatpush1.msra.mxu0 0.0
    %2205 = vmatprep.subr.mxu0 0.0
    %2206 = vmatpush1.msra.mxu0 0.0
    %2207 = vmatprep.subr.mxu0 0.0
    %2208 = vmatpush1.msra.mxu0 0.0
    %2209 = vmatprep.subr.mxu0 0.0
    %2210 = vmatpush1.msra.mxu0 0.0
    %2211 = vmatprep.subr.mxu0 0.0
    %2212 = vmatpush1.msra.mxu0 0.0
    %2213 = vmatprep.subr.mxu0 0.0
    %2214 = vmatpush1.msra.mxu0 0.0
    %2215 = vmatprep.subr.mxu0 0.0
    %2216 = vmatpush1.msra.mxu0 0.0
    %2217 = vmatprep.subr.mxu0 0.0
    %2218 = vmatpush1.msra.mxu0 0.0
    %2219 = vmatprep.subr.mxu0 0.0
    %2220 = vmatpush1.msra.mxu0 0.0
    %2221 = vmatprep.subr.mxu0 0.0
    %2222 = vmatpush1.msra.mxu0 0.0
    %2223 = vmatprep.subr.mxu0 0.0
    %2224 = vmatpush1.msra.mxu0 0.0
    %2225 = vmatprep.mubr.f32.mxu0 0.0
    %2226 = vmatmul.mubr.f32.gmra.mrb[0].mxu0 %v2006
    %v2227 = vpop.f32.mrb[0].mxu0
    %v2228 = vadd.f32 0.0, %v2227
    %v2229 = vpop.f32.mrb[0].mxu0
    %2230 = vmatprep.mubr.f32.mxu0 0.0
    %2231 = vmatmul.mubr.f32.gmra.mrb[0].mxu0 %v2009
    %v2232 = vpop.f32.mrb[0].mxu0
    %v2233 = vadd.f32 0.0, %v2232
    %v2234 = vpop.f32.mrb[0].mxu0
    %2235 = vdwg.mxu0
    %v2237 = vsel %vm462, %v216, 0
    %2239 = vmatprep.subr.mxu0 0.0
    %2240 = vmatpush1.msra.mxu0 %v2153
    %2241 = vmatprep.subr.mxu0 0.0
    %2242 = vmatpush1.msra.mxu0 %v2158
    %2243 = vmatprep.subr.mxu0 0.0
    %2244 = vmatpush1.msra.mxu0 0.0
    %2245 = vmatprep.subr.mxu0 0.0
    %2246 = vmatpush1.msra.mxu0 0.0
    %2247 = vmatprep.subr.mxu0 0.0
    %2248 = vmatpush1.msra.mxu0 0.0
    %2249 = vmatprep.subr.mxu0 0.0
    %2250 = vmatpush1.msra.mxu0 0.0
    %2251 = vmatprep.subr.mxu0 0.0
    %2252 = vmatpush1.msra.mxu0 0.0
    %2253 = vmatprep.subr.mxu0 0.0
    %2254 = vmatpush1.msra.mxu0 0.0
    %2255 = vmatprep.subr.mxu0 0.0
    %2256 = vmatpush1.msra.mxu0 0.0
    %2257 = vmatprep.subr.mxu0 0.0
    %2258 = vmatpush1.msra.mxu0 0.0
    %2259 = vmatprep.subr.mxu0 0.0
    %2260 = vmatpush1.msra.mxu0 0.0
    %2261 = vmatprep.subr.mxu0 0.0
    %2262 = vmatpush1.msra.mxu0 0.0
    %2263 = vmatprep.subr.mxu0 0.0
    %2264 = vmatpush1.msra.mxu0 0.0
    %2265 = vmatprep.subr.mxu0 0.0
    %2266 = vmatpush1.msra.mxu0 0.0
    %2267 = vmatprep.subr.mxu0 0.0
    %2268 = vmatpush1.msra.mxu0 0.0
    %2269 = vmatprep.subr.mxu0 0.0
    %2270 = vmatpush1.msra.mxu0 0.0
    %2271 = vmatprep.subr.mxu0 0.0
    %2272 = vmatpush1.msra.mxu0 0.0
    %2273 = vmatprep.subr.mxu0 0.0
    %2274 = vmatpush1.msra.mxu0 0.0
    %2275 = vmatprep.subr.mxu0 0.0
    %2276 = vmatpush1.msra.mxu0 0.0
    %2277 = vmatprep.subr.mxu0 0.0
    %2278 = vmatpush1.msra.mxu0 0.0
    %2279 = vmatprep.subr.mxu0 0.0
    %2280 = vmatpush1.msra.mxu0 0.0
    %2281 = vmatprep.subr.mxu0 0.0
    %2282 = vmatpush1.msra.mxu0 0.0
    %2283 = vmatprep.subr.mxu0 0.0
    %2284 = vmatpush1.msra.mxu0 0.0
    %2285 = vmatprep.subr.mxu0 0.0
    %2286 = vmatpush1.msra.mxu0 0.0
    %2287 = vmatprep.subr.mxu0 0.0
    %2288 = vmatpush1.msra.mxu0 0.0
    %2289 = vmatprep.subr.mxu0 0.0
    %2290 = vmatpush1.msra.mxu0 0.0
    %2291 = vmatprep.subr.mxu0 0.0
    %2292 = vmatpush1.msra.mxu0 0.0
    %2293 = vmatprep.subr.mxu0 0.0
    %2294 = vmatpush1.msra.mxu0 0.0
    %2295 = vmatprep.subr.mxu0 0.0
    %2296 = vmatpush1.msra.mxu0 0.0
    %2297 = vmatprep.subr.mxu0 0.0
    %2298 = vmatpush1.msra.mxu0 0.0
    %2299 = vmatprep.subr.mxu0 0.0
    %2300 = vmatpush1.msra.mxu0 0.0
    %2301 = vmatprep.subr.mxu0 0.0
    %2302 = vmatpush1.msra.mxu0 0.0
    %2303 = vmatprep.mubr.f32.mxu0 0.0
    %2304 = vmatmul.mubr.f32.gmra.mrb[0].mxu0 %v2237
    %v2305 = vpop.f32.mrb[0].mxu0
    %v2306 = vadd.f32 0.0, %v2305
    %v2307 = vpop.f32.mrb[0].mxu0
    %2308 = vdwg.mxu0
    %v2310 = vsel %vm462, %v214, 0
    %2312 = vmatprep.subr.mxu0 0.0
    %2313 = vmatpush1.msra.mxu0 %v2078
    %2314 = vmatprep.subr.mxu0 0.0
    %2315 = vmatpush1.msra.mxu0 %v2083
    %2316 = vmatprep.subr.mxu0 0.0
    %2317 = vmatpush1.msra.mxu0 0.0
    %2318 = vmatprep.subr.mxu0 0.0
    %2319 = vmatpush1.msra.mxu0 0.0
    %2320 = vmatprep.subr.mxu0 0.0
    %2321 = vmatpush1.msra.mxu0 0.0
    %2322 = vmatprep.subr.mxu0 0.0
    %2323 = vmatpush1.msra.mxu0 0.0
    %2324 = vmatprep.subr.mxu0 0.0
    %2325 = vmatpush1.msra.mxu0 0.0
    %2326 = vmatprep.subr.mxu0 0.0
    %2327 = vmatpush1.msra.mxu0 0.0
    %2328 = vmatprep.subr.mxu0 0.0
    %2329 = vmatpush1.msra.mxu0 0.0
    %2330 = vmatprep.subr.mxu0 0.0
    %2331 = vmatpush1.msra.mxu0 0.0
    %2332 = vmatprep.subr.mxu0 0.0
    %2333 = vmatpush1.msra.mxu0 0.0
    %2334 = vmatprep.subr.mxu0 0.0
    %2335 = vmatpush1.msra.mxu0 0.0
    %2336 = vmatprep.subr.mxu0 0.0
    %2337 = vmatpush1.msra.mxu0 0.0
    %2338 = vmatprep.subr.mxu0 0.0
    %2339 = vmatpush1.msra.mxu0 0.0
    %2340 = vmatprep.subr.mxu0 0.0
    %2341 = vmatpush1.msra.mxu0 0.0
    %2342 = vmatprep.subr.mxu0 0.0
    %2343 = vmatpush1.msra.mxu0 0.0
    %2344 = vmatprep.subr.mxu0 0.0
    %2345 = vmatpush1.msra.mxu0 0.0
    %2346 = vmatprep.subr.mxu0 0.0
    %2347 = vmatpush1.msra.mxu0 0.0
    %2348 = vmatprep.subr.mxu0 0.0
    %2349 = vmatpush1.msra.mxu0 0.0
    %2350 = vmatprep.subr.mxu0 0.0
    %2351 = vmatpush1.msra.mxu0 0.0
    %2352 = vmatprep.subr.mxu0 0.0
    %2353 = vmatpush1.msra.mxu0 0.0
    %2354 = vmatprep.subr.mxu0 0.0
    %2355 = vmatpush1.msra.mxu0 0.0
    %2356 = vmatprep.subr.mxu0 0.0
    %2357 = vmatpush1.msra.mxu0 0.0
    %2358 = vmatprep.subr.mxu0 0.0
    %2359 = vmatpush1.msra.mxu0 0.0
    %2360 = vmatprep.subr.mxu0 0.0
    %2361 = vmatpush1.msra.mxu0 0.0
    %2362 = vmatprep.subr.mxu0 0.0
    %2363 = vmatpush1.msra.mxu0 0.0
    %2364 = vmatprep.subr.mxu0 0.0
    %2365 = vmatpush1.msra.mxu0 0.0
    %2366 = vmatprep.subr.mxu0 0.0
    %2367 = vmatpush1.msra.mxu0 0.0
    %2368 = vmatprep.subr.mxu0 0.0
    %2369 = vmatpush1.msra.mxu0 0.0
    %2370 = vmatprep.subr.mxu0 0.0
    %2371 = vmatpush1.msra.mxu0 0.0
    %2372 = vmatprep.subr.mxu0 0.0
    %2373 = vmatpush1.msra.mxu0 0.0
    %2374 = vmatprep.subr.mxu0 0.0
    %2375 = vmatpush1.msra.mxu0 0.0
    %2376 = vmatprep.mubr.f32.mxu0 0.0
    %2377 = vmatmul.mubr.f32.gmra.mrb[0].mxu0 %v2310
    %v2378 = vpop.f32.mrb[0].mxu0
    %v2379 = vadd.f32 %v2306, %v2378
    %v2380 = vpop.f32.mrb[0].mxu0
    %2381 = vdwg.mxu0
    %v2383 = vsel %vm462, %v218, 0
    %2385 = vmatprep.subr.mxu0 0.0
    %2386 = vmatpush1.msra.mxu0 %v2228
    %2387 = vmatprep.subr.mxu0 0.0
    %2388 = vmatpush1.msra.mxu0 %v2233
    %2389 = vmatprep.subr.mxu0 0.0
    %2390 = vmatpush1.msra.mxu0 0.0
    %2391 = vmatprep.subr.mxu0 0.0
    %2392 = vmatpush1.msra.mxu0 0.0
    %2393 = vmatprep.subr.mxu0 0.0
    %2394 = vmatpush1.msra.mxu0 0.0
    %2395 = vmatprep.subr.mxu0 0.0
    %2396 = vmatpush1.msra.mxu0 0.0
    %2397 = vmatprep.subr.mxu0 0.0
    %2398 = vmatpush1.msra.mxu0 0.0
    %2399 = vmatprep.subr.mxu0 0.0
    %2400 = vmatpush1.msra.mxu0 0.0
    %2401 = vmatprep.subr.mxu0 0.0
    %2402 = vmatpush1.msra.mxu0 0.0
    %2403 = vmatprep.subr.mxu0 0.0
    %2404 = vmatpush1.msra.mxu0 0.0
    %2405 = vmatprep.subr.mxu0 0.0
    %2406 = vmatpush1.msra.mxu0 0.0
    %2407 = vmatprep.subr.mxu0 0.0
    %2408 = vmatpush1.msra.mxu0 0.0
    %2409 = vmatprep.subr.mxu0 0.0
    %2410 = vmatpush1.msra.mxu0 0.0
    %2411 = vmatprep.subr.mxu0 0.0
    %2412 = vmatpush1.msra.mxu0 0.0
    %2413 = vmatprep.subr.mxu0 0.0
    %2414 = vmatpush1.msra.mxu0 0.0
    %2415 = vmatprep.subr.mxu0 0.0
    %2416 = vmatpush1.msra.mxu0 0.0
    %2417 = vmatprep.subr.mxu0 0.0
    %2418 = vmatpush1.msra.mxu0 0.0
    %2419 = vmatprep.subr.mxu0 0.0
    %2420 = vmatpush1.msra.mxu0 0.0
    %2421 = vmatprep.subr.mxu0 0.0
    %2422 = vmatpush1.msra.mxu0 0.0
    %2423 = vmatprep.subr.mxu0 0.0
    %2424 = vmatpush1.msra.mxu0 0.0
    %2425 = vmatprep.subr.mxu0 0.0
    %2426 = vmatpush1.msra.mxu0 0.0
    %2427 = vmatprep.subr.mxu0 0.0
    %2428 = vmatpush1.msra.mxu0 0.0
    %2429 = vmatprep.subr.mxu0 0.0
    %2430 = vmatpush1.msra.mxu0 0.0
    %2431 = vmatprep.subr.mxu0 0.0
    %2432 = vmatpush1.msra.mxu0 0.0
    %2433 = vmatprep.subr.mxu0 0.0
    %2434 = vmatpush1.msra.mxu0 0.0
    %2435 = vmatprep.subr.mxu0 0.0
    %2436 = vmatpush1.msra.mxu0 0.0
    %2437 = vmatprep.subr.mxu0 0.0
    %2438 = vmatpush1.msra.mxu0 0.0
    %2439 = vmatprep.subr.mxu0 0.0
    %2440 = vmatpush1.msra.mxu0 0.0
    %2441 = vmatprep.subr.mxu0 0.0
    %2442 = vmatpush1.msra.mxu0 0.0
    %2443 = vmatprep.subr.mxu0 0.0
    %2444 = vmatpush1.msra.mxu0 0.0
    %2445 = vmatprep.subr.mxu0 0.0
    %2446 = vmatpush1.msra.mxu0 0.0
    %2447 = vmatprep.subr.mxu0 0.0
    %2448 = vmatpush1.msra.mxu0 0.0
    %2449 = vmatprep.mubr.f32.mxu0 0.0
    %2450 = vmatmul.mubr.f32.gmra.mrb[0].mxu0 %v2383
    %v2451 = vpop.f32.mrb[0].mxu0
    %v2452 = vadd.f32 0.0, %v2451
    %v2453 = vpop.f32.mrb[0].mxu0
    %2454 = vdwg.mxu0
    %v2455 = vadd.f32 %v2379, %v2452
    %s2456 = sld [smem:[#allocation14 + $0x3]]
    %v2457 = vstv %s2456
    %v2458 = vadd.f32 %v2455, %v2457
    %v2460 = vsel %vm462, %v2458, 0
    %2462 = vmatprep.subr.mxu0 0.0
    %2463 = vmatpush1.msra.mxu0 %v187
    %2464 = vmatprep.subr.mxu0 0.0
    %2465 = vmatpush1.msra.mxu0 %v188
    %2466 = vmatprep.subr.mxu0 0.0
    %2467 = vmatpush1.msra.mxu0 0.0
    %2468 = vmatprep.subr.mxu0 0.0
    %2469 = vmatpush1.msra.mxu0 0.0
    %2470 = vmatprep.subr.mxu0 0.0
    %2471 = vmatpush1.msra.mxu0 0.0
    %2472 = vmatprep.subr.mxu0 0.0
    %2473 = vmatpush1.msra.mxu0 0.0
    %2474 = vmatprep.subr.mxu0 0.0
    %2475 = vmatpush1.msra.mxu0 0.0
    %2476 = vmatprep.subr.mxu0 0.0
    %2477 = vmatpush1.msra.mxu0 0.0
    %2478 = vmatprep.subr.mxu0 0.0
    %2479 = vmatpush1.msra.mxu0 0.0
    %2480 = vmatprep.subr.mxu0 0.0
    %2481 = vmatpush1.msra.mxu0 0.0
    %2482 = vmatprep.subr.mxu0 0.0
    %2483 = vmatpush1.msra.mxu0 0.0
    %2484 = vmatprep.subr.mxu0 0.0
    %2485 = vmatpush1.msra.mxu0 0.0
    %2486 = vmatprep.subr.mxu0 0.0
    %2487 = vmatpush1.msra.mxu0 0.0
    %2488 = vmatprep.subr.mxu0 0.0
    %2489 = vmatpush1.msra.mxu0 0.0
    %2490 = vmatprep.subr.mxu0 0.0
    %2491 = vmatpush1.msra.mxu0 0.0
    %2492 = vmatprep.subr.mxu0 0.0
    %2493 = vmatpush1.msra.mxu0 0.0
    %2494 = vmatprep.subr.mxu0 0.0
    %2495 = vmatpush1.msra.mxu0 0.0
    %2496 = vmatprep.subr.mxu0 0.0
    %2497 = vmatpush1.msra.mxu0 0.0
    %2498 = vmatprep.subr.mxu0 0.0
    %2499 = vmatpush1.msra.mxu0 0.0
    %2500 = vmatprep.subr.mxu0 0.0
    %2501 = vmatpush1.msra.mxu0 0.0
    %2502 = vmatprep.subr.mxu0 0.0
    %2503 = vmatpush1.msra.mxu0 0.0
    %2504 = vmatprep.subr.mxu0 0.0
    %2505 = vmatpush1.msra.mxu0 0.0
    %2506 = vmatprep.subr.mxu0 0.0
    %2507 = vmatpush1.msra.mxu0 0.0
    %2508 = vmatprep.subr.mxu0 0.0
    %2509 = vmatpush1.msra.mxu0 0.0
    %2510 = vmatprep.subr.mxu0 0.0
    %2511 = vmatpush1.msra.mxu0 0.0
    %2512 = vmatprep.subr.mxu0 0.0
    %2513 = vmatpush1.msra.mxu0 0.0
    %2514 = vmatprep.subr.mxu0 0.0
    %2515 = vmatpush1.msra.mxu0 0.0
    %2516 = vmatprep.subr.mxu0 0.0
    %2517 = vmatpush1.msra.mxu0 0.0
    %2518 = vmatprep.subr.mxu0 0.0
    %2519 = vmatpush1.msra.mxu0 0.0
    %2520 = vmatprep.subr.mxu0 0.0
    %2521 = vmatpush1.msra.mxu0 0.0
    %2522 = vmatprep.subr.mxu0 0.0
    %2523 = vmatpush1.msra.mxu0 0.0
    %2524 = vmatprep.subr.mxu0 0.0
    %2525 = vmatpush1.msra.mxu0 0.0
    %2526 = vmatprep.mubr.f32.mxu0 0.0
    %2527 = vmatmul.mubr.f32.gmra.mrb[0].mxu0 %v2460
    %v2528 = vpop.f32.mrb[0].mxu0
    %v2529 = vadd.f32 0.0, %v2528
    %v2530 = vpop.f32.mrb[0].mxu0
    %2531 = vdwg.mxu0
    %2532 = vmatprep.subr.mxu0 0.0
    %2533 = vmatpush1.msra.mxu0 %v190
    %2534 = vmatprep.subr.mxu0 0.0
    %2535 = vmatpush1.msra.mxu0 %v191
    %2536 = vmatprep.subr.mxu0 0.0
    %2537 = vmatpush1.msra.mxu0 0.0
    %2538 = vmatprep.subr.mxu0 0.0
    %2539 = vmatpush1.msra.mxu0 0.0
    %2540 = vmatprep.subr.mxu0 0.0
    %2541 = vmatpush1.msra.mxu0 0.0
    %2542 = vmatprep.subr.mxu0 0.0
    %2543 = vmatpush1.msra.mxu0 0.0
    %2544 = vmatprep.subr.mxu0 0.0
    %2545 = vmatpush1.msra.mxu0 0.0
    %2546 = vmatprep.subr.mxu0 0.0
    %2547 = vmatpush1.msra.mxu0 0.0
    %2548 = vmatprep.subr.mxu0 0.0
    %2549 = vmatpush1.msra.mxu0 0.0
    %2550 = vmatprep.subr.mxu0 0.0
    %2551 = vmatpush1.msra.mxu0 0.0
    %2552 = vmatprep.subr.mxu0 0.0
    %2553 = vmatpush1.msra.mxu0 0.0
    %2554 = vmatprep.subr.mxu0 0.0
    %2555 = vmatpush1.msra.mxu0 0.0
    %2556 = vmatprep.subr.mxu0 0.0
    %2557 = vmatpush1.msra.mxu0 0.0
    %2558 = vmatprep.subr.mxu0 0.0
    %2559 = vmatpush1.msra.mxu0 0.0
    %2560 = vmatprep.subr.mxu0 0.0
    %2561 = vmatpush1.msra.mxu0 0.0
    %2562 = vmatprep.subr.mxu0 0.0
    %2563 = vmatpush1.msra.mxu0 0.0
    %2564 = vmatprep.subr.mxu0 0.0
    %2565 = vmatpush1.msra.mxu0 0.0
    %2566 = vmatprep.subr.mxu0 0.0
    %2567 = vmatpush1.msra.mxu0 0.0
    %2568 = vmatprep.subr.mxu0 0.0
    %2569 = vmatpush1.msra.mxu0 0.0
    %2570 = vmatprep.subr.mxu0 0.0
    %2571 = vmatpush1.msra.mxu0 0.0
    %2572 = vmatprep.subr.mxu0 0.0
    %2573 = vmatpush1.msra.mxu0 0.0
    %2574 = vmatprep.subr.mxu0 0.0
    %2575 = vmatpush1.msra.mxu0 0.0
    %2576 = vmatprep.subr.mxu0 0.0
    %2577 = vmatpush1.msra.mxu0 0.0
    %2578 = vmatprep.subr.mxu0 0.0
    %2579 = vmatpush1.msra.mxu0 0.0
    %2580 = vmatprep.subr.mxu0 0.0
    %2581 = vmatpush1.msra.mxu0 0.0
    %2582 = vmatprep.subr.mxu0 0.0
    %2583 = vmatpush1.msra.mxu0 0.0
    %2584 = vmatprep.subr.mxu0 0.0
    %2585 = vmatpush1.msra.mxu0 0.0
    %2586 = vmatprep.subr.mxu0 0.0
    %2587 = vmatpush1.msra.mxu0 0.0
    %2588 = vmatprep.subr.mxu0 0.0
    %2589 = vmatpush1.msra.mxu0 0.0
    %2590 = vmatprep.subr.mxu0 0.0
    %2591 = vmatpush1.msra.mxu0 0.0
    %2592 = vmatprep.subr.mxu0 0.0
    %2593 = vmatpush1.msra.mxu0 0.0
    %2594 = vmatprep.subr.mxu0 0.0
    %2595 = vmatpush1.msra.mxu0 0.0
    %2596 = vmatprep.mubr.f32.mxu0 0.0
    %2597 = vmatmul.mubr.f32.gmra.mrb[0].mxu0 %v2460
    %v2598 = vpop.f32.mrb[0].mxu0
    %v2599 = vadd.f32 0.0, %v2598
    %v2600 = vpop.f32.mrb[0].mxu0
    %2601 = vdwg.mxu0
    %2602 = vmatprep.subr.mxu0 0.0
    %2603 = vmatpush1.msra.mxu0 %v193
    %2604 = vmatprep.subr.mxu0 0.0
    %2605 = vmatpush1.msra.mxu0 %v194
    %2606 = vmatprep.subr.mxu0 0.0
    %2607 = vmatpush1.msra.mxu0 0.0
    %2608 = vmatprep.subr.mxu0 0.0
    %2609 = vmatpush1.msra.mxu0 0.0
    %2610 = vmatprep.subr.mxu0 0.0
    %2611 = vmatpush1.msra.mxu0 0.0
    %2612 = vmatprep.subr.mxu0 0.0
    %2613 = vmatpush1.msra.mxu0 0.0
    %2614 = vmatprep.subr.mxu0 0.0
    %2615 = vmatpush1.msra.mxu0 0.0
    %2616 = vmatprep.subr.mxu0 0.0
    %2617 = vmatpush1.msra.mxu0 0.0
    %2618 = vmatprep.subr.mxu0 0.0
    %2619 = vmatpush1.msra.mxu0 0.0
    %2620 = vmatprep.subr.mxu0 0.0
    %2621 = vmatpush1.msra.mxu0 0.0
    %2622 = vmatprep.subr.mxu0 0.0
    %2623 = vmatpush1.msra.mxu0 0.0
    %2624 = vmatprep.subr.mxu0 0.0
    %2625 = vmatpush1.msra.mxu0 0.0
    %2626 = vmatprep.subr.mxu0 0.0
    %2627 = vmatpush1.msra.mxu0 0.0
    %2628 = vmatprep.subr.mxu0 0.0
    %2629 = vmatpush1.msra.mxu0 0.0
    %2630 = vmatprep.subr.mxu0 0.0
    %2631 = vmatpush1.msra.mxu0 0.0
    %2632 = vmatprep.subr.mxu0 0.0
    %2633 = vmatpush1.msra.mxu0 0.0
    %2634 = vmatprep.subr.mxu0 0.0
    %2635 = vmatpush1.msra.mxu0 0.0
    %2636 = vmatprep.subr.mxu0 0.0
    %2637 = vmatpush1.msra.mxu0 0.0
    %2638 = vmatprep.subr.mxu0 0.0
    %2639 = vmatpush1.msra.mxu0 0.0
    %2640 = vmatprep.subr.mxu0 0.0
    %2641 = vmatpush1.msra.mxu0 0.0
    %2642 = vmatprep.subr.mxu0 0.0
    %2643 = vmatpush1.msra.mxu0 0.0
    %2644 = vmatprep.subr.mxu0 0.0
    %2645 = vmatpush1.msra.mxu0 0.0
    %2646 = vmatprep.subr.mxu0 0.0
    %2647 = vmatpush1.msra.mxu0 0.0
    %2648 = vmatprep.subr.mxu0 0.0
    %2649 = vmatpush1.msra.mxu0 0.0
    %2650 = vmatprep.subr.mxu0 0.0
    %2651 = vmatpush1.msra.mxu0 0.0
    %2652 = vmatprep.subr.mxu0 0.0
    %2653 = vmatpush1.msra.mxu0 0.0
    %2654 = vmatprep.subr.mxu0 0.0
    %2655 = vmatpush1.msra.mxu0 0.0
    %2656 = vmatprep.subr.mxu0 0.0
    %2657 = vmatpush1.msra.mxu0 0.0
    %2658 = vmatprep.subr.mxu0 0.0
    %2659 = vmatpush1.msra.mxu0 0.0
    %2660 = vmatprep.subr.mxu0 0.0
    %2661 = vmatpush1.msra.mxu0 0.0
    %2662 = vmatprep.subr.mxu0 0.0
    %2663 = vmatpush1.msra.mxu0 0.0
    %2664 = vmatprep.subr.mxu0 0.0
    %2665 = vmatpush1.msra.mxu0 0.0
    %2666 = vmatprep.mubr.f32.mxu0 0.0
    %2667 = vmatmul.mubr.f32.gmra.mrb[0].mxu0 %v2460
    %v2668 = vpop.f32.mrb[0].mxu0
    %v2669 = vadd.f32 0.0, %v2668
    %v2670 = vpop.f32.mrb[0].mxu0
    %2671 = vdwg.mxu0
    %s2672 = scalar_lea.vmem [#allocation8], 96
    %v2673 = vld [vmem:[%s2672] sm:$0xff]
    %s2674 = scalar_lea.vmem [#allocation8], 104
    %v2675 = vld [vmem:[%s2674] sm:$0xff]
    %v2677 = vsel %vm1484, %v2675, 0
    %2679 = vmatprep.subr.mxu0 0.0
    %2680 = vmatpush1.msra.mxu0 %v2599
    %2681 = vmatprep.subr.mxu0 0.0
    %2682 = vmatpush1.msra.mxu0 0.0
    %2683 = vmatprep.subr.mxu0 0.0
    %2684 = vmatpush1.msra.mxu0 0.0
    %2685 = vmatprep.subr.mxu0 0.0
    %2686 = vmatpush1.msra.mxu0 0.0
    %2687 = vmatprep.subr.mxu0 0.0
    %2688 = vmatpush1.msra.mxu0 0.0
    %2689 = vmatprep.subr.mxu0 0.0
    %2690 = vmatpush1.msra.mxu0 0.0
    %2691 = vmatprep.subr.mxu0 0.0
    %2692 = vmatpush1.msra.mxu0 0.0
    %2693 = vmatprep.subr.mxu0 0.0
    %2694 = vmatpush1.msra.mxu0 0.0
    %2695 = vmatprep.subr.mxu0 0.0
    %2696 = vmatpush1.msra.mxu0 0.0
    %2697 = vmatprep.subr.mxu0 0.0
    %2698 = vmatpush1.msra.mxu0 0.0
    %2699 = vmatprep.subr.mxu0 0.0
    %2700 = vmatpush1.msra.mxu0 0.0
    %2701 = vmatprep.subr.mxu0 0.0
    %2702 = vmatpush1.msra.mxu0 0.0
    %2703 = vmatprep.subr.mxu0 0.0
    %2704 = vmatpush1.msra.mxu0 0.0
    %2705 = vmatprep.subr.mxu0 0.0
    %2706 = vmatpush1.msra.mxu0 0.0
    %2707 = vmatprep.subr.mxu0 0.0
    %2708 = vmatpush1.msra.mxu0 0.0
    %2709 = vmatprep.subr.mxu0 0.0
    %2710 = vmatpush1.msra.mxu0 0.0
    %2711 = vmatprep.subr.mxu0 0.0
    %2712 = vmatpush1.msra.mxu0 0.0
    %2713 = vmatprep.subr.mxu0 0.0
    %2714 = vmatpush1.msra.mxu0 0.0
    %2715 = vmatprep.subr.mxu0 0.0
    %2716 = vmatpush1.msra.mxu0 0.0
    %2717 = vmatprep.subr.mxu0 0.0
    %2718 = vmatpush1.msra.mxu0 0.0
    %2719 = vmatprep.subr.mxu0 0.0
    %2720 = vmatpush1.msra.mxu0 0.0
    %2721 = vmatprep.subr.mxu0 0.0
    %2722 = vmatpush1.msra.mxu0 0.0
    %2723 = vmatprep.subr.mxu0 0.0
    %2724 = vmatpush1.msra.mxu0 0.0
    %2725 = vmatprep.subr.mxu0 0.0
    %2726 = vmatpush1.msra.mxu0 0.0
    %2727 = vmatprep.subr.mxu0 0.0
    %2728 = vmatpush1.msra.mxu0 0.0
    %2729 = vmatprep.subr.mxu0 0.0
    %2730 = vmatpush1.msra.mxu0 0.0
    %2731 = vmatprep.subr.mxu0 0.0
    %2732 = vmatpush1.msra.mxu0 0.0
    %2733 = vmatprep.subr.mxu0 0.0
    %2734 = vmatpush1.msra.mxu0 0.0
    %2735 = vmatprep.subr.mxu0 0.0
    %2736 = vmatpush1.msra.mxu0 0.0
    %2737 = vmatprep.subr.mxu0 0.0
    %2738 = vmatpush1.msra.mxu0 0.0
    %2739 = vmatprep.subr.mxu0 0.0
    %2740 = vmatpush1.msra.mxu0 0.0
    %2741 = vmatprep.subr.mxu0 0.0
    %2742 = vmatpush1.msra.mxu0 0.0
    %2743 = vmatprep.mubr.f32.mxu0 0.0
    %2744 = vmatmul.mubr.f32.gmra.mrb[0].mxu0 %v2677
    %v2745 = vpop.f32.mrb[0].mxu0
    %v2746 = vadd.f32 0.0, %v2745
    %v2747 = vpop.f32.mrb[0].mxu0
    %2748 = vdwg.mxu0
    %v2750 = vsel %vm1484, %v2673, 0
    %2752 = vmatprep.subr.mxu0 0.0
    %2753 = vmatpush1.msra.mxu0 %v2529
    %2754 = vmatprep.subr.mxu0 0.0
    %2755 = vmatpush1.msra.mxu0 0.0
    %2756 = vmatprep.subr.mxu0 0.0
    %2757 = vmatpush1.msra.mxu0 0.0
    %2758 = vmatprep.subr.mxu0 0.0
    %2759 = vmatpush1.msra.mxu0 0.0
    %2760 = vmatprep.subr.mxu0 0.0
    %2761 = vmatpush1.msra.mxu0 0.0
    %2762 = vmatprep.subr.mxu0 0.0
    %2763 = vmatpush1.msra.mxu0 0.0
    %2764 = vmatprep.subr.mxu0 0.0
    %2765 = vmatpush1.msra.mxu0 0.0
    %2766 = vmatprep.subr.mxu0 0.0
    %2767 = vmatpush1.msra.mxu0 0.0
    %2768 = vmatprep.subr.mxu0 0.0
    %2769 = vmatpush1.msra.mxu0 0.0
    %2770 = vmatprep.subr.mxu0 0.0
    %2771 = vmatpush1.msra.mxu0 0.0
    %2772 = vmatprep.subr.mxu0 0.0
    %2773 = vmatpush1.msra.mxu0 0.0
    %2774 = vmatprep.subr.mxu0 0.0
    %2775 = vmatpush1.msra.mxu0 0.0
    %2776 = vmatprep.subr.mxu0 0.0
    %2777 = vmatpush1.msra.mxu0 0.0
    %2778 = vmatprep.subr.mxu0 0.0
    %2779 = vmatpush1.msra.mxu0 0.0
    %2780 = vmatprep.subr.mxu0 0.0
    %2781 = vmatpush1.msra.mxu0 0.0
    %2782 = vmatprep.subr.mxu0 0.0
    %2783 = vmatpush1.msra.mxu0 0.0
    %2784 = vmatprep.subr.mxu0 0.0
    %2785 = vmatpush1.msra.mxu0 0.0
    %2786 = vmatprep.subr.mxu0 0.0
    %2787 = vmatpush1.msra.mxu0 0.0
    %2788 = vmatprep.subr.mxu0 0.0
    %2789 = vmatpush1.msra.mxu0 0.0
    %2790 = vmatprep.subr.mxu0 0.0
    %2791 = vmatpush1.msra.mxu0 0.0
    %2792 = vmatprep.subr.mxu0 0.0
    %2793 = vmatpush1.msra.mxu0 0.0
    %2794 = vmatprep.subr.mxu0 0.0
    %2795 = vmatpush1.msra.mxu0 0.0
    %2796 = vmatprep.subr.mxu0 0.0
    %2797 = vmatpush1.msra.mxu0 0.0
    %2798 = vmatprep.subr.mxu0 0.0
    %2799 = vmatpush1.msra.mxu0 0.0
    %2800 = vmatprep.subr.mxu0 0.0
    %2801 = vmatpush1.msra.mxu0 0.0
    %2802 = vmatprep.subr.mxu0 0.0
    %2803 = vmatpush1.msra.mxu0 0.0
    %2804 = vmatprep.subr.mxu0 0.0
    %2805 = vmatpush1.msra.mxu0 0.0
    %2806 = vmatprep.subr.mxu0 0.0
    %2807 = vmatpush1.msra.mxu0 0.0
    %2808 = vmatprep.subr.mxu0 0.0
    %2809 = vmatpush1.msra.mxu0 0.0
    %2810 = vmatprep.subr.mxu0 0.0
    %2811 = vmatpush1.msra.mxu0 0.0
    %2812 = vmatprep.subr.mxu0 0.0
    %2813 = vmatpush1.msra.mxu0 0.0
    %2814 = vmatprep.subr.mxu0 0.0
    %2815 = vmatpush1.msra.mxu0 0.0
    %2816 = vmatprep.mubr.f32.mxu0 0.0
    %2817 = vmatmul.mubr.f32.gmra.mrb[0].mxu0 %v2750
    %v2818 = vpop.f32.mrb[0].mxu0
    %v2819 = vadd.f32 %v2746, %v2818
    %v2820 = vpop.f32.mrb[0].mxu0
    %2821 = vdwg.mxu0
    %s2822 = scalar_lea.vmem [#allocation8], 112
    %v2823 = vld [vmem:[%s2822] sm:$0xff]
    %v2825 = vsel %vm1484, %v2823, 0
    %2827 = vmatprep.subr.mxu0 0.0
    %2828 = vmatpush1.msra.mxu0 %v2669
    %2829 = vmatprep.subr.mxu0 0.0
    %2830 = vmatpush1.msra.mxu0 0.0
    %2831 = vmatprep.subr.mxu0 0.0
    %2832 = vmatpush1.msra.mxu0 0.0
    %2833 = vmatprep.subr.mxu0 0.0
    %2834 = vmatpush1.msra.mxu0 0.0
    %2835 = vmatprep.subr.mxu0 0.0
    %2836 = vmatpush1.msra.mxu0 0.0
    %2837 = vmatprep.subr.mxu0 0.0
    %2838 = vmatpush1.msra.mxu0 0.0
    %2839 = vmatprep.subr.mxu0 0.0
    %2840 = vmatpush1.msra.mxu0 0.0
    %2841 = vmatprep.subr.mxu0 0.0
    %2842 = vmatpush1.msra.mxu0 0.0
    %2843 = vmatprep.subr.mxu0 0.0
    %2844 = vmatpush1.msra.mxu0 0.0
    %2845 = vmatprep.subr.mxu0 0.0
    %2846 = vmatpush1.msra.mxu0 0.0
    %2847 = vmatprep.subr.mxu0 0.0
    %2848 = vmatpush1.msra.mxu0 0.0
    %2849 = vmatprep.subr.mxu0 0.0
    %2850 = vmatpush1.msra.mxu0 0.0
    %2851 = vmatprep.subr.mxu0 0.0
    %2852 = vmatpush1.msra.mxu0 0.0
    %2853 = vmatprep.subr.mxu0 0.0
    %2854 = vmatpush1.msra.mxu0 0.0
    %2855 = vmatprep.subr.mxu0 0.0
    %2856 = vmatpush1.msra.mxu0 0.0
    %2857 = vmatprep.subr.mxu0 0.0
    %2858 = vmatpush1.msra.mxu0 0.0
    %2859 = vmatprep.subr.mxu0 0.0
    %2860 = vmatpush1.msra.mxu0 0.0
    %2861 = vmatprep.subr.mxu0 0.0
    %2862 = vmatpush1.msra.mxu0 0.0
    %2863 = vmatprep.subr.mxu0 0.0
    %2864 = vmatpush1.msra.mxu0 0.0
    %2865 = vmatprep.subr.mxu0 0.0
    %2866 = vmatpush1.msra.mxu0 0.0
    %2867 = vmatprep.subr.mxu0 0.0
    %2868 = vmatpush1.msra.mxu0 0.0
    %2869 = vmatprep.subr.mxu0 0.0
    %2870 = vmatpush1.msra.mxu0 0.0
    %2871 = vmatprep.subr.mxu0 0.0
    %2872 = vmatpush1.msra.mxu0 0.0
    %2873 = vmatprep.subr.mxu0 0.0
    %2874 = vmatpush1.msra.mxu0 0.0
    %2875 = vmatprep.subr.mxu0 0.0
    %2876 = vmatpush1.msra.mxu0 0.0
    %2877 = vmatprep.subr.mxu0 0.0
    %2878 = vmatpush1.msra.mxu0 0.0
    %2879 = vmatprep.subr.mxu0 0.0
    %2880 = vmatpush1.msra.mxu0 0.0
    %2881 = vmatprep.subr.mxu0 0.0
    %2882 = vmatpush1.msra.mxu0 0.0
    %2883 = vmatprep.subr.mxu0 0.0
    %2884 = vmatpush1.msra.mxu0 0.0
    %2885 = vmatprep.subr.mxu0 0.0
    %2886 = vmatpush1.msra.mxu0 0.0
    %2887 = vmatprep.subr.mxu0 0.0
    %2888 = vmatpush1.msra.mxu0 0.0
    %2889 = vmatprep.subr.mxu0 0.0
    %2890 = vmatpush1.msra.mxu0 0.0
    %2891 = vmatprep.mubr.f32.mxu0 0.0
    %2892 = vmatmul.mubr.f32.gmra.mrb[0].mxu0 %v2825
    %v2893 = vpop.f32.mrb[0].mxu0
    %v2894 = vadd.f32 0.0, %v2893
    %v2895 = vpop.f32.mrb[0].mxu0
    %2896 = vdwg.mxu0
    %v2897 = vadd.f32 %v2819, %v2894
    %v2898 = vsel %vm462, %v2897, 0.0
    %2899 = vadd.xlane.f32.xlu0 %v2898
    %v2900 = vpop.xlane.xlu0 %2899
    %v2901 = vrot.slane %v2900, 4
    %v2902 = vadd.f32 %v2900, %v2901
    %v2903 = vrot.slane %v2902, 2
    %v2904 = vadd.f32 %v2902, %v2903
    %v2905 = vrot.slane %v2904, 1
    %v2906 = vadd.f32 %v2904, %v2905
    %s2907 = vtos %v2906
    %v2908 = vstv %s2907
    %v2909 = vmul.f32 %v2897, %v2897
    %v2910 = vsel %vm462, %v2909, 0.0
    %2911 = vadd.xlane.f32.xlu0 %v2910
    %v2912 = vpop.xlane.xlu0 %2911
    %v2913 = vrot.slane %v2912, 4
    %v2914 = vadd.f32 %v2912, %v2913
    %v2915 = vrot.slane %v2914, 2
    %v2916 = vadd.f32 %v2914, %v2915
    %v2917 = vrot.slane %v2916, 1
    %v2918 = vadd.f32 %v2916, %v2917
    %s2919 = vtos %v2918
    %v2920 = vstv %s2919
    %v2921 = vmul.f32 %v2908, %v1730
    %v2922 = vmul.f32 %v2920, %v1730
    %v2923 = vmul.f32 %v2921, %v2921
    %v2924 = vsub.f32 %v2922, %v2923
    %v2925 = vmax.f32 %v2924, 0.0
    %s2926 = sld [smem:[#allocation15 + $0x1]]
    %v2927 = vadd.f32 %v2925, 1e-05
    %v2928 = vrsqrt.pop %v2927
    %v2929 = vstv %s2926
    %v2930 = vmul.f32 %v2929, %v2928
    %s2931 = sld [smem:[#allocation17 + $0x1]]
    %v2932 = vmul.f32 %v2921, %v2930
    %v2933 = vstv %s2931
    %v2934 = vsub.f32 %v2933, %v2932
    %v2935 = vmul.f32 %v2897, %v2930
    %v2936 = vadd.f32 %v2935, %v2934
    %v2937 = vadd.f32 %v1746, %v2936
    %v2938 = vsub.f32 0.0, %v2937
    %v2939 = vmul.f32 %v2938, 1.442695
    %v2940 = vpow.pop %v2939
    %v2941 = vadd.f32 %v2940, 1.0
    %v2942 = vrcp.pop %v2941
    %v2943 = vmul.f32 1.0, %v2942
    %2944 = vst.msk [vmem:[#allocation18] sm:$0xff] %vm462, %v2943
    %v2946 = vsel %vm462, %v2943, 0
    %2948 = vmatprep.subr.mxu0 0.0
    %2949 = vmatpush1.msra.mxu0 %v187
    %2950 = vmatprep.subr.mxu0 0.0
    %2951 = vmatpush1.msra.mxu0 %v188
    %2952 = vmatprep.subr.mxu0 0.0
    %2953 = vmatpush1.msra.mxu0 0.0
    %2954 = vmatprep.subr.mxu0 0.0
    %2955 = vmatpush1.msra.mxu0 0.0
    %2956 = vmatprep.subr.mxu0 0.0
    %2957 = vmatpush1.msra.mxu0 0.0
    %2958 = vmatprep.subr.mxu0 0.0
    %2959 = vmatpush1.msra.mxu0 0.0
    %2960 = vmatprep.subr.mxu0 0.0
    %2961 = vmatpush1.msra.mxu0 0.0
    %2962 = vmatprep.subr.mxu0 0.0
    %2963 = vmatpush1.msra.mxu0 0.0
    %2964 = vmatprep.subr.mxu0 0.0
    %2965 = vmatpush1.msra.mxu0 0.0
    %2966 = vmatprep.subr.mxu0 0.0
    %2967 = vmatpush1.msra.mxu0 0.0
    %2968 = vmatprep.subr.mxu0 0.0
    %2969 = vmatpush1.msra.mxu0 0.0
    %2970 = vmatprep.subr.mxu0 0.0
    %2971 = vmatpush1.msra.mxu0 0.0
    %2972 = vmatprep.subr.mxu0 0.0
    %2973 = vmatpush1.msra.mxu0 0.0
    %2974 = vmatprep.subr.mxu0 0.0
    %2975 = vmatpush1.msra.mxu0 0.0
    %2976 = vmatprep.subr.mxu0 0.0
    %2977 = vmatpush1.msra.mxu0 0.0
    %2978 = vmatprep.subr.mxu0 0.0
    %2979 = vmatpush1.msra.mxu0 0.0
    %2980 = vmatprep.subr.mxu0 0.0
    %2981 = vmatpush1.msra.mxu0 0.0
    %2982 = vmatprep.subr.mxu0 0.0
    %2983 = vmatpush1.msra.mxu0 0.0
    %2984 = vmatprep.subr.mxu0 0.0
    %2985 = vmatpush1.msra.mxu0 0.0
    %2986 = vmatprep.subr.mxu0 0.0
    %2987 = vmatpush1.msra.mxu0 0.0
    %2988 = vmatprep.subr.mxu0 0.0
    %2989 = vmatpush1.msra.mxu0 0.0
    %2990 = vmatprep.subr.mxu0 0.0
    %2991 = vmatpush1.msra.mxu0 0.0
    %2992 = vmatprep.subr.mxu0 0.0
    %2993 = vmatpush1.msra.mxu0 0.0
    %2994 = vmatprep.subr.mxu0 0.0
    %2995 = vmatpush1.msra.mxu0 0.0
    %2996 = vmatprep.subr.mxu0 0.0
    %2997 = vmatpush1.msra.mxu0 0.0
    %2998 = vmatprep.subr.mxu0 0.0
    %2999 = vmatpush1.msra.mxu0 0.0
    %3000 = vmatprep.subr.mxu0 0.0
    %3001 = vmatpush1.msra.mxu0 0.0
    %3002 = vmatprep.subr.mxu0 0.0
    %3003 = vmatpush1.msra.mxu0 0.0
    %3004 = vmatprep.subr.mxu0 0.0
    %3005 = vmatpush1.msra.mxu0 0.0
    %3006 = vmatprep.subr.mxu0 0.0
    %3007 = vmatpush1.msra.mxu0 0.0
    %3008 = vmatprep.subr.mxu0 0.0
    %3009 = vmatpush1.msra.mxu0 0.0
    %3010 = vmatprep.subr.mxu0 0.0
    %3011 = vmatpush1.msra.mxu0 0.0
    %3012 = vmatprep.mubr.f32.mxu0 0.0
    %3013 = vmatmul.mubr.f32.gmra.mrb[0].mxu0 %v2946
    %v3014 = vpop.f32.mrb[0].mxu0
    %v3015 = vadd.f32 0.0, %v3014
    %v3016 = vpop.f32.mrb[0].mxu0
    %3017 = vdwg.mxu0
    %3018 = vmatprep.subr.mxu0 0.0
    %3019 = vmatpush1.msra.mxu0 %v190
    %3020 = vmatprep.subr.mxu0 0.0
    %3021 = vmatpush1.msra.mxu0 %v191
    %3022 = vmatprep.subr.mxu0 0.0
    %3023 = vmatpush1.msra.mxu0 0.0
    %3024 = vmatprep.subr.mxu0 0.0
    %3025 = vmatpush1.msra.mxu0 0.0
    %3026 = vmatprep.subr.mxu0 0.0
    %3027 = vmatpush1.msra.mxu0 0.0
    %3028 = vmatprep.subr.mxu0 0.0
    %3029 = vmatpush1.msra.mxu0 0.0
    %3030 = vmatprep.subr.mxu0 0.0
    %3031 = vmatpush1.msra.mxu0 0.0
    %3032 = vmatprep.subr.mxu0 0.0
    %3033 = vmatpush1.msra.mxu0 0.0
    %3034 = vmatprep.subr.mxu0 0.0
    %3035 = vmatpush1.msra.mxu0 0.0
    %3036 = vmatprep.subr.mxu0 0.0
    %3037 = vmatpush1.msra.mxu0 0.0
    %3038 = vmatprep.subr.mxu0 0.0
    %3039 = vmatpush1.msra.mxu0 0.0
    %3040 = vmatprep.subr.mxu0 0.0
    %3041 = vmatpush1.msra.mxu0 0.0
    %3042 = vmatprep.subr.mxu0 0.0
    %3043 = vmatpush1.msra.mxu0 0.0
    %3044 = vmatprep.subr.mxu0 0.0
    %3045 = vmatpush1.msra.mxu0 0.0
    %3046 = vmatprep.subr.mxu0 0.0
    %3047 = vmatpush1.msra.mxu0 0.0
    %3048 = vmatprep.subr.mxu0 0.0
    %3049 = vmatpush1.msra.mxu0 0.0
    %3050 = vmatprep.subr.mxu0 0.0
    %3051 = vmatpush1.msra.mxu0 0.0
    %3052 = vmatprep.subr.mxu0 0.0
    %3053 = vmatpush1.msra.mxu0 0.0
    %3054 = vmatprep.subr.mxu0 0.0
    %3055 = vmatpush1.msra.mxu0 0.0
    %3056 = vmatprep.subr.mxu0 0.0
    %3057 = vmatpush1.msra.mxu0 0.0
    %3058 = vmatprep.subr.mxu0 0.0
    %3059 = vmatpush1.msra.mxu0 0.0
    %3060 = vmatprep.subr.mxu0 0.0
    %3061 = vmatpush1.msra.mxu0 0.0
    %3062 = vmatprep.subr.mxu0 0.0
    %3063 = vmatpush1.msra.mxu0 0.0
    %3064 = vmatprep.subr.mxu0 0.0
    %3065 = vmatpush1.msra.mxu0 0.0
    %3066 = vmatprep.subr.mxu0 0.0
    %3067 = vmatpush1.msra.mxu0 0.0
    %3068 = vmatprep.subr.mxu0 0.0
    %3069 = vmatpush1.msra.mxu0 0.0
    %3070 = vmatprep.subr.mxu0 0.0
    %3071 = vmatpush1.msra.mxu0 0.0
    %3072 = vmatprep.subr.mxu0 0.0
    %3073 = vmatpush1.msra.mxu0 0.0
    %3074 = vmatprep.subr.mxu0 0.0
    %3075 = vmatpush1.msra.mxu0 0.0
    %3076 = vmatprep.subr.mxu0 0.0
    %3077 = vmatpush1.msra.mxu0 0.0
    %3078 = vmatprep.subr.mxu0 0.0
    %3079 = vmatpush1.msra.mxu0 0.0
    %3080 = vmatprep.subr.mxu0 0.0
    %3081 = vmatpush1.msra.mxu0 0.0
    %3082 = vmatprep.mubr.f32.mxu0 0.0
    %3083 = vmatmul.mubr.f32.gmra.mrb[0].mxu0 %v2946
    %v3084 = vpop.f32.mrb[0].mxu0
    %v3085 = vadd.f32 0.0, %v3084
    %v3086 = vpop.f32.mrb[0].mxu0
    %3087 = vdwg.mxu0
    %3088 = vmatprep.subr.mxu0 0.0
    %3089 = vmatpush1.msra.mxu0 %v193
    %3090 = vmatprep.subr.mxu0 0.0
    %3091 = vmatpush1.msra.mxu0 %v194
    %3092 = vmatprep.subr.mxu0 0.0
    %3093 = vmatpush1.msra.mxu0 0.0
    %3094 = vmatprep.subr.mxu0 0.0
    %3095 = vmatpush1.msra.mxu0 0.0
    %3096 = vmatprep.subr.mxu0 0.0
    %3097 = vmatpush1.msra.mxu0 0.0
    %3098 = vmatprep.subr.mxu0 0.0
    %3099 = vmatpush1.msra.mxu0 0.0
    %3100 = vmatprep.subr.mxu0 0.0
    %3101 = vmatpush1.msra.mxu0 0.0
    %3102 = vmatprep.subr.mxu0 0.0
    %3103 = vmatpush1.msra.mxu0 0.0
    %3104 = vmatprep.subr.mxu0 0.0
    %3105 = vmatpush1.msra.mxu0 0.0
    %3106 = vmatprep.subr.mxu0 0.0
    %3107 = vmatpush1.msra.mxu0 0.0
    %3108 = vmatprep.subr.mxu0 0.0
    %3109 = vmatpush1.msra.mxu0 0.0
    %3110 = vmatprep.subr.mxu0 0.0
    %3111 = vmatpush1.msra.mxu0 0.0
    %3112 = vmatprep.subr.mxu0 0.0
    %3113 = vmatpush1.msra.mxu0 0.0
    %3114 = vmatprep.subr.mxu0 0.0
    %3115 = vmatpush1.msra.mxu0 0.0
    %3116 = vmatprep.subr.mxu0 0.0
    %3117 = vmatpush1.msra.mxu0 0.0
    %3118 = vmatprep.subr.mxu0 0.0
    %3119 = vmatpush1.msra.mxu0 0.0
    %3120 = vmatprep.subr.mxu0 0.0
    %3121 = vmatpush1.msra.mxu0 0.0
    %3122 = vmatprep.subr.mxu0 0.0
    %3123 = vmatpush1.msra.mxu0 0.0
    %3124 = vmatprep.subr.mxu0 0.0
    %3125 = vmatpush1.msra.mxu0 0.0
    %3126 = vmatprep.subr.mxu0 0.0
    %3127 = vmatpush1.msra.mxu0 0.0
    %3128 = vmatprep.subr.mxu0 0.0
    %3129 = vmatpush1.msra.mxu0 0.0
    %3130 = vmatprep.subr.mxu0 0.0
    %3131 = vmatpush1.msra.mxu0 0.0
    %3132 = vmatprep.subr.mxu0 0.0
    %3133 = vmatpush1.msra.mxu0 0.0
    %3134 = vmatprep.subr.mxu0 0.0
    %3135 = vmatpush1.msra.mxu0 0.0
    %3136 = vmatprep.subr.mxu0 0.0
    %3137 = vmatpush1.msra.mxu0 0.0
    %3138 = vmatprep.subr.mxu0 0.0
    %3139 = vmatpush1.msra.mxu0 0.0
    %3140 = vmatprep.subr.mxu0 0.0
    %3141 = vmatpush1.msra.mxu0 0.0
    %3142 = vmatprep.subr.mxu0 0.0
    %3143 = vmatpush1.msra.mxu0 0.0
    %3144 = vmatprep.subr.mxu0 0.0
    %3145 = vmatpush1.msra.mxu0 0.0
    %3146 = vmatprep.subr.mxu0 0.0
    %3147 = vmatpush1.msra.mxu0 0.0
    %3148 = vmatprep.subr.mxu0 0.0
    %3149 = vmatpush1.msra.mxu0 0.0
    %3150 = vmatprep.subr.mxu0 0.0
    %3151 = vmatpush1.msra.mxu0 0.0
    %3152 = vmatprep.mubr.f32.mxu0 0.0
    %3153 = vmatmul.mubr.f32.gmra.mrb[0].mxu0 %v2946
    %v3154 = vpop.f32.mrb[0].mxu0
    %v3155 = vadd.f32 0.0, %v3154
    %v3156 = vpop.f32.mrb[0].mxu0
    %3157 = vdwg.mxu0
    %s3158 = scalar_lea.vmem [#allocation8], 120
    %v3159 = vld [vmem:[%s3158] sm:$0xff]
    %s3160 = scalar_lea.vmem [#allocation8], 128
    %v3161 = vld [vmem:[%s3160] sm:$0xff]
    %v3163 = vsel %vm1484, %v3161, 0
    %3165 = vmatprep.subr.mxu0 0.0
    %3166 = vmatpush1.msra.mxu0 %v3085
    %3167 = vmatprep.subr.mxu0 0.0
    %3168 = vmatpush1.msra.mxu0 0.0
    %3169 = vmatprep.subr.mxu0 0.0
    %3170 = vmatpush1.msra.mxu0 0.0
    %3171 = vmatprep.subr.mxu0 0.0
    %3172 = vmatpush1.msra.mxu0 0.0
    %3173 = vmatprep.subr.mxu0 0.0
    %3174 = vmatpush1.msra.mxu0 0.0
    %3175 = vmatprep.subr.mxu0 0.0
    %3176 = vmatpush1.msra.mxu0 0.0
    %3177 = vmatprep.subr.mxu0 0.0
    %3178 = vmatpush1.msra.mxu0 0.0
    %3179 = vmatprep.subr.mxu0 0.0
    %3180 = vmatpush1.msra.mxu0 0.0
    %3181 = vmatprep.subr.mxu0 0.0
    %3182 = vmatpush1.msra.mxu0 0.0
    %3183 = vmatprep.subr.mxu0 0.0
    %3184 = vmatpush1.msra.mxu0 0.0
    %3185 = vmatprep.subr.mxu0 0.0
    %3186 = vmatpush1.msra.mxu0 0.0
    %3187 = vmatprep.subr.mxu0 0.0
    %3188 = vmatpush1.msra.mxu0 0.0
    %3189 = vmatprep.subr.mxu0 0.0
    %3190 = vmatpush1.msra.mxu0 0.0
    %3191 = vmatprep.subr.mxu0 0.0
    %3192 = vmatpush1.msra.mxu0 0.0
    %3193 = vmatprep.subr.mxu0 0.0
    %3194 = vmatpush1.msra.mxu0 0.0
    %3195 = vmatprep.subr.mxu0 0.0
    %3196 = vmatpush1.msra.mxu0 0.0
    %3197 = vmatprep.subr.mxu0 0.0
    %3198 = vmatpush1.msra.mxu0 0.0
    %3199 = vmatprep.subr.mxu0 0.0
    %3200 = vmatpush1.msra.mxu0 0.0
    %3201 = vmatprep.subr.mxu0 0.0
    %3202 = vmatpush1.msra.mxu0 0.0
    %3203 = vmatprep.subr.mxu0 0.0
    %3204 = vmatpush1.msra.mxu0 0.0
    %3205 = vmatprep.subr.mxu0 0.0
    %3206 = vmatpush1.msra.mxu0 0.0
    %3207 = vmatprep.subr.mxu0 0.0
    %3208 = vmatpush1.msra.mxu0 0.0
    %3209 = vmatprep.subr.mxu0 0.0
    %3210 = vmatpush1.msra.mxu0 0.0
    %3211 = vmatprep.subr.mxu0 0.0
    %3212 = vmatpush1.msra.mxu0 0.0
    %3213 = vmatprep.subr.mxu0 0.0
    %3214 = vmatpush1.msra.mxu0 0.0
    %3215 = vmatprep.subr.mxu0 0.0
    %3216 = vmatpush1.msra.mxu0 0.0
    %3217 = vmatprep.subr.mxu0 0.0
    %3218 = vmatpush1.msra.mxu0 0.0
    %3219 = vmatprep.subr.mxu0 0.0
    %3220 = vmatpush1.msra.mxu0 0.0
    %3221 = vmatprep.subr.mxu0 0.0
    %3222 = vmatpush1.msra.mxu0 0.0
    %3223 = vmatprep.subr.mxu0 0.0
    %3224 = vmatpush1.msra.mxu0 0.0
    %3225 = vmatprep.subr.mxu0 0.0
    %3226 = vmatpush1.msra.mxu0 0.0
    %3227 = vmatprep.subr.mxu0 0.0
    %3228 = vmatpush1.msra.mxu0 0.0
    %3229 = vmatprep.mubr.f32.mxu0 0.0
    %3230 = vmatmul.mubr.f32.gmra.mrb[0].mxu0 %v3163
    %v3231 = vpop.f32.mrb[0].mxu0
    %v3232 = vadd.f32 0.0, %v3231
    %v3233 = vpop.f32.mrb[0].mxu0
    %3234 = vdwg.mxu0
    %v3236 = vsel %vm1484, %v3159, 0
    %3238 = vmatprep.subr.mxu0 0.0
    %3239 = vmatpush1.msra.mxu0 %v3015
    %3240 = vmatprep.subr.mxu0 0.0
    %3241 = vmatpush1.msra.mxu0 0.0
    %3242 = vmatprep.subr.mxu0 0.0
    %3243 = vmatpush1.msra.mxu0 0.0
    %3244 = vmatprep.subr.mxu0 0.0
    %3245 = vmatpush1.msra.mxu0 0.0
    %3246 = vmatprep.subr.mxu0 0.0
    %3247 = vmatpush1.msra.mxu0 0.0
    %3248 = vmatprep.subr.mxu0 0.0
    %3249 = vmatpush1.msra.mxu0 0.0
    %3250 = vmatprep.subr.mxu0 0.0
    %3251 = vmatpush1.msra.mxu0 0.0
    %3252 = vmatprep.subr.mxu0 0.0
    %3253 = vmatpush1.msra.mxu0 0.0
    %3254 = vmatprep.subr.mxu0 0.0
    %3255 = vmatpush1.msra.mxu0 0.0
    %3256 = vmatprep.subr.mxu0 0.0
    %3257 = vmatpush1.msra.mxu0 0.0
    %3258 = vmatprep.subr.mxu0 0.0
    %3259 = vmatpush1.msra.mxu0 0.0
    %3260 = vmatprep.subr.mxu0 0.0
    %3261 = vmatpush1.msra.mxu0 0.0
    %3262 = vmatprep.subr.mxu0 0.0
    %3263 = vmatpush1.msra.mxu0 0.0
    %3264 = vmatprep.subr.mxu0 0.0
    %3265 = vmatpush1.msra.mxu0 0.0
    %3266 = vmatprep.subr.mxu0 0.0
    %3267 = vmatpush1.msra.mxu0 0.0
    %3268 = vmatprep.subr.mxu0 0.0
    %3269 = vmatpush1.msra.mxu0 0.0
    %3270 = vmatprep.subr.mxu0 0.0
    %3271 = vmatpush1.msra.mxu0 0.0
    %3272 = vmatprep.subr.mxu0 0.0
    %3273 = vmatpush1.msra.mxu0 0.0
    %3274 = vmatprep.subr.mxu0 0.0
    %3275 = vmatpush1.msra.mxu0 0.0
    %3276 = vmatprep.subr.mxu0 0.0
    %3277 = vmatpush1.msra.mxu0 0.0
    %3278 = vmatprep.subr.mxu0 0.0
    %3279 = vmatpush1.msra.mxu0 0.0
    %3280 = vmatprep.subr.mxu0 0.0
    %3281 = vmatpush1.msra.mxu0 0.0
    %3282 = vmatprep.subr.mxu0 0.0
    %3283 = vmatpush1.msra.mxu0 0.0
    %3284 = vmatprep.subr.mxu0 0.0
    %3285 = vmatpush1.msra.mxu0 0.0
    %3286 = vmatprep.subr.mxu0 0.0
    %3287 = vmatpush1.msra.mxu0 0.0
    %3288 = vmatprep.subr.mxu0 0.0
    %3289 = vmatpush1.msra.mxu0 0.0
    %3290 = vmatprep.subr.mxu0 0.0
    %3291 = vmatpush1.msra.mxu0 0.0
    %3292 = vmatprep.subr.mxu0 0.0
    %3293 = vmatpush1.msra.mxu0 0.0
    %3294 = vmatprep.subr.mxu0 0.0
    %3295 = vmatpush1.msra.mxu0 0.0
    %3296 = vmatprep.subr.mxu0 0.0
    %3297 = vmatpush1.msra.mxu0 0.0
    %3298 = vmatprep.subr.mxu0 0.0
    %3299 = vmatpush1.msra.mxu0 0.0
    %3300 = vmatprep.subr.mxu0 0.0
    %3301 = vmatpush1.msra.mxu0 0.0
    %3302 = vmatprep.mubr.f32.mxu0 0.0
    %3303 = vmatmul.mubr.f32.gmra.mrb[0].mxu0 %v3236
    %v3304 = vpop.f32.mrb[0].mxu0
    %v3305 = vadd.f32 %v3232, %v3304
    %v3306 = vpop.f32.mrb[0].mxu0
    %3307 = vdwg.mxu0
    %s3308 = scalar_lea.vmem [#allocation8], 136
    %v3309 = vld [vmem:[%s3308] sm:$0xff]
    %v3311 = vsel %vm1484, %v3309, 0
    %3313 = vmatprep.subr.mxu0 0.0
    %3314 = vmatpush1.msra.mxu0 %v3155
    %3315 = vmatprep.subr.mxu0 0.0
    %3316 = vmatpush1.msra.mxu0 0.0
    %3317 = vmatprep.subr.mxu0 0.0
    %3318 = vmatpush1.msra.mxu0 0.0
    %3319 = vmatprep.subr.mxu0 0.0
    %3320 = vmatpush1.msra.mxu0 0.0
    %3321 = vmatprep.subr.mxu0 0.0
    %3322 = vmatpush1.msra.mxu0 0.0
    %3323 = vmatprep.subr.mxu0 0.0
    %3324 = vmatpush1.msra.mxu0 0.0
    %3325 = vmatprep.subr.mxu0 0.0
    %3326 = vmatpush1.msra.mxu0 0.0
    %3327 = vmatprep.subr.mxu0 0.0
    %3328 = vmatpush1.msra.mxu0 0.0
    %3329 = vmatprep.subr.mxu0 0.0
    %3330 = vmatpush1.msra.mxu0 0.0
    %3331 = vmatprep.subr.mxu0 0.0
    %3332 = vmatpush1.msra.mxu0 0.0
    %3333 = vmatprep.subr.mxu0 0.0
    %3334 = vmatpush1.msra.mxu0 0.0
    %3335 = vmatprep.subr.mxu0 0.0
    %3336 = vmatpush1.msra.mxu0 0.0
    %3337 = vmatprep.subr.mxu0 0.0
    %3338 = vmatpush1.msra.mxu0 0.0
    %3339 = vmatprep.subr.mxu0 0.0
    %3340 = vmatpush1.msra.mxu0 0.0
    %3341 = vmatprep.subr.mxu0 0.0
    %3342 = vmatpush1.msra.mxu0 0.0
    %3343 = vmatprep.subr.mxu0 0.0
    %3344 = vmatpush1.msra.mxu0 0.0
    %3345 = vmatprep.subr.mxu0 0.0
    %3346 = vmatpush1.msra.mxu0 0.0
    %3347 = vmatprep.subr.mxu0 0.0
    %3348 = vmatpush1.msra.mxu0 0.0
    %3349 = vmatprep.subr.mxu0 0.0
    %3350 = vmatpush1.msra.mxu0 0.0
    %3351 = vmatprep.subr.mxu0 0.0
    %3352 = vmatpush1.msra.mxu0 0.0
    %3353 = vmatprep.subr.mxu0 0.0
    %3354 = vmatpush1.msra.mxu0 0.0
    %3355 = vmatprep.subr.mxu0 0.0
    %3356 = vmatpush1.msra.mxu0 0.0
    %3357 = vmatprep.subr.mxu0 0.0
    %3358 = vmatpush1.msra.mxu0 0.0
    %3359 = vmatprep.subr.mxu0 0.0
    %3360 = vmatpush1.msra.mxu0 0.0
    %3361 = vmatprep.subr.mxu0 0.0
    %3362 = vmatpush1.msra.mxu0 0.0
    %3363 = vmatprep.subr.mxu0 0.0
    %3364 = vmatpush1.msra.mxu0 0.0
    %3365 = vmatprep.subr.mxu0 0.0
    %3366 = vmatpush1.msra.mxu0 0.0
    %3367 = vmatprep.subr.mxu0 0.0
    %3368 = vmatpush1.msra.mxu0 0.0
    %3369 = vmatprep.subr.mxu0 0.0
    %3370 = vmatpush1.msra.mxu0 0.0
    %3371 = vmatprep.subr.mxu0 0.0
    %3372 = vmatpush1.msra.mxu0 0.0
    %3373 = vmatprep.subr.mxu0 0.0
    %3374 = vmatpush1.msra.mxu0 0.0
    %3375 = vmatprep.subr.mxu0 0.0
    %3376 = vmatpush1.msra.mxu0 0.0
    %3377 = vmatprep.mubr.f32.mxu0 0.0
    %3378 = vmatmul.mubr.f32.gmra.mrb[0].mxu0 %v3311
    %v3379 = vpop.f32.mrb[0].mxu0
    %v3380 = vadd.f32 0.0, %v3379
    %v3381 = vpop.f32.mrb[0].mxu0
    %3382 = vdwg.mxu0
    %v3383 = vadd.f32 %v3305, %v3380
    %s3384 = sld [smem:[#allocation14 + $0x5]]
    %v3385 = vstv %s3384
    %v3386 = vadd.f32 %v3383, %v3385
    %v3388 = vsel %vm462, %v3386, 0
    %3390 = vmatprep.subr.mxu0 0.0
    %3391 = vmatpush1.msra.mxu0 %v221
    %3392 = vmatprep.subr.mxu0 0.0
    %3393 = vmatpush1.msra.mxu0 %v222
    %3394 = vmatprep.subr.mxu0 0.0
    %3395 = vmatpush1.msra.mxu0 0.0
    %3396 = vmatprep.subr.mxu0 0.0
    %3397 = vmatpush1.msra.mxu0 0.0
    %3398 = vmatprep.subr.mxu0 0.0
    %3399 = vmatpush1.msra.mxu0 0.0
    %3400 = vmatprep.subr.mxu0 0.0
    %3401 = vmatpush1.msra.mxu0 0.0
    %3402 = vmatprep.subr.mxu0 0.0
    %3403 = vmatpush1.msra.mxu0 0.0
    %3404 = vmatprep.subr.mxu0 0.0
    %3405 = vmatpush1.msra.mxu0 0.0
    %3406 = vmatprep.subr.mxu0 0.0
    %3407 = vmatpush1.msra.mxu0 0.0
    %3408 = vmatprep.subr.mxu0 0.0
    %3409 = vmatpush1.msra.mxu0 0.0
    %3410 = vmatprep.subr.mxu0 0.0
    %3411 = vmatpush1.msra.mxu0 0.0
    %3412 = vmatprep.subr.mxu0 0.0
    %3413 = vmatpush1.msra.mxu0 0.0
    %3414 = vmatprep.subr.mxu0 0.0
    %3415 = vmatpush1.msra.mxu0 0.0
    %3416 = vmatprep.subr.mxu0 0.0
    %3417 = vmatpush1.msra.mxu0 0.0
    %3418 = vmatprep.subr.mxu0 0.0
    %3419 = vmatpush1.msra.mxu0 0.0
    %3420 = vmatprep.subr.mxu0 0.0
    %3421 = vmatpush1.msra.mxu0 0.0
    %3422 = vmatprep.subr.mxu0 0.0
    %3423 = vmatpush1.msra.mxu0 0.0
    %3424 = vmatprep.subr.mxu0 0.0
    %3425 = vmatpush1.msra.mxu0 0.0
    %3426 = vmatprep.subr.mxu0 0.0
    %3427 = vmatpush1.msra.mxu0 0.0
    %3428 = vmatprep.subr.mxu0 0.0
    %3429 = vmatpush1.msra.mxu0 0.0
    %3430 = vmatprep.subr.mxu0 0.0
    %3431 = vmatpush1.msra.mxu0 0.0
    %3432 = vmatprep.subr.mxu0 0.0
    %3433 = vmatpush1.msra.mxu0 0.0
    %3434 = vmatprep.subr.mxu0 0.0
    %3435 = vmatpush1.msra.mxu0 0.0
    %3436 = vmatprep.subr.mxu0 0.0
    %3437 = vmatpush1.msra.mxu0 0.0
    %3438 = vmatprep.subr.mxu0 0.0
    %3439 = vmatpush1.msra.mxu0 0.0
    %3440 = vmatprep.subr.mxu0 0.0
    %3441 = vmatpush1.msra.mxu0 0.0
    %3442 = vmatprep.subr.mxu0 0.0
    %3443 = vmatpush1.msra.mxu0 0.0
    %3444 = vmatprep.subr.mxu0 0.0
    %3445 = vmatpush1.msra.mxu0 0.0
    %3446 = vmatprep.subr.mxu0 0.0
    %3447 = vmatpush1.msra.mxu0 0.0
    %3448 = vmatprep.subr.mxu0 0.0
    %3449 = vmatpush1.msra.mxu0 0.0
    %3450 = vmatprep.subr.mxu0 0.0
    %3451 = vmatpush1.msra.mxu0 0.0
    %3452 = vmatprep.subr.mxu0 0.0
    %3453 = vmatpush1.msra.mxu0 0.0
    %3454 = vmatprep.mubr.f32.mxu0 0.0
    %3455 = vmatmul.mubr.f32.gmra.mrb[0].mxu0 %v3388
    %v3456 = vpop.f32.mrb[0].mxu0
    %v3457 = vadd.f32 0.0, %v3456
    %v3458 = vpop.f32.mrb[0].mxu0
    %3459 = vdwg.mxu0
    %v3461 = vsel %vm1484, %v219, 0
    %v3464 = vsel %vm1484, %v220, 0
    %3466 = vmatprep.subr.mxu0 0.0
    %3467 = vmatpush1.msra.mxu0 %v3457
    %3468 = vmatprep.subr.mxu0 0.0
    %3469 = vmatpush1.msra.mxu0 0.0
    %3470 = vmatprep.subr.mxu0 0.0
    %3471 = vmatpush1.msra.mxu0 0.0
    %3472 = vmatprep.subr.mxu0 0.0
    %3473 = vmatpush1.msra.mxu0 0.0
    %3474 = vmatprep.subr.mxu0 0.0
    %3475 = vmatpush1.msra.mxu0 0.0
    %3476 = vmatprep.subr.mxu0 0.0
    %3477 = vmatpush1.msra.mxu0 0.0
    %3478 = vmatprep.subr.mxu0 0.0
    %3479 = vmatpush1.msra.mxu0 0.0
    %3480 = vmatprep.subr.mxu0 0.0
    %3481 = vmatpush1.msra.mxu0 0.0
    %3482 = vmatprep.subr.mxu0 0.0
    %3483 = vmatpush1.msra.mxu0 0.0
    %3484 = vmatprep.subr.mxu0 0.0
    %3485 = vmatpush1.msra.mxu0 0.0
    %3486 = vmatprep.subr.mxu0 0.0
    %3487 = vmatpush1.msra.mxu0 0.0
    %3488 = vmatprep.subr.mxu0 0.0
    %3489 = vmatpush1.msra.mxu0 0.0
    %3490 = vmatprep.subr.mxu0 0.0
    %3491 = vmatpush1.msra.mxu0 0.0
    %3492 = vmatprep.subr.mxu0 0.0
    %3493 = vmatpush1.msra.mxu0 0.0
    %3494 = vmatprep.subr.mxu0 0.0
    %3495 = vmatpush1.msra.mxu0 0.0
    %3496 = vmatprep.subr.mxu0 0.0
    %3497 = vmatpush1.msra.mxu0 0.0
    %3498 = vmatprep.subr.mxu0 0.0
    %3499 = vmatpush1.msra.mxu0 0.0
    %3500 = vmatprep.subr.mxu0 0.0
    %3501 = vmatpush1.msra.mxu0 0.0
    %3502 = vmatprep.subr.mxu0 0.0
    %3503 = vmatpush1.msra.mxu0 0.0
    %3504 = vmatprep.subr.mxu0 0.0
    %3505 = vmatpush1.msra.mxu0 0.0
    %3506 = vmatprep.subr.mxu0 0.0
    %3507 = vmatpush1.msra.mxu0 0.0
    %3508 = vmatprep.subr.mxu0 0.0
    %3509 = vmatpush1.msra.mxu0 0.0
    %3510 = vmatprep.subr.mxu0 0.0
    %3511 = vmatpush1.msra.mxu0 0.0
    %3512 = vmatprep.subr.mxu0 0.0
    %3513 = vmatpush1.msra.mxu0 0.0
    %3514 = vmatprep.subr.mxu0 0.0
    %3515 = vmatpush1.msra.mxu0 0.0
    %3516 = vmatprep.subr.mxu0 0.0
    %3517 = vmatpush1.msra.mxu0 0.0
    %3518 = vmatprep.subr.mxu0 0.0
    %3519 = vmatpush1.msra.mxu0 0.0
    %3520 = vmatprep.subr.mxu0 0.0
    %3521 = vmatpush1.msra.mxu0 0.0
    %3522 = vmatprep.subr.mxu0 0.0
    %3523 = vmatpush1.msra.mxu0 0.0
    %3524 = vmatprep.subr.mxu0 0.0
    %3525 = vmatpush1.msra.mxu0 0.0
    %3526 = vmatprep.subr.mxu0 0.0
    %3527 = vmatpush1.msra.mxu0 0.0
    %3528 = vmatprep.subr.mxu0 0.0
    %3529 = vmatpush1.msra.mxu0 0.0
    %3530 = vmatprep.mubr.f32.mxu0 0.0
    %3531 = vmatmul.mubr.f32.gmra.mrb[0].mxu0 %v3461
    %v3532 = vpop.f32.mrb[0].mxu0
    %v3533 = vadd.f32 0.0, %v3532
    %v3534 = vpop.f32.mrb[0].mxu0
    %3535 = vmatprep.mubr.f32.mxu0 0.0
    %3536 = vmatmul.mubr.f32.gmra.mrb[0].mxu0 %v3464
    %v3537 = vpop.f32.mrb[0].mxu0
    %v3538 = vadd.f32 0.0, %v3537
    %v3539 = vpop.f32.mrb[0].mxu0
    %3540 = vdwg.mxu0
    %v3542 = vsel %vm225, %v3533, 0
    %v3545 = vsel %vm225, %v3538, 0
    %3547 = vmatprep.subr.mxu0 0.0
    %3548 = vmatpush1.msra.mxu0 %v173
    %3549 = vmatprep.subr.mxu0 0.0
    %3550 = vmatpush1.msra.mxu0 %v174
    %3551 = vmatprep.subr.mxu0 0.0
    %3552 = vmatpush1.msra.mxu0 %v175
    %3553 = vmatprep.subr.mxu0 0.0
    %3554 = vmatpush1.msra.mxu0 %v176
    %3555 = vmatprep.subr.mxu0 0.0
    %3556 = vmatpush1.msra.mxu0 0.0
    %3557 = vmatprep.subr.mxu0 0.0
    %3558 = vmatpush1.msra.mxu0 0.0
    %3559 = vmatprep.subr.mxu0 0.0
    %3560 = vmatpush1.msra.mxu0 0.0
    %3561 = vmatprep.subr.mxu0 0.0
    %3562 = vmatpush1.msra.mxu0 0.0
    %3563 = vmatprep.subr.mxu0 0.0
    %3564 = vmatpush1.msra.mxu0 0.0
    %3565 = vmatprep.subr.mxu0 0.0
    %3566 = vmatpush1.msra.mxu0 0.0
    %3567 = vmatprep.subr.mxu0 0.0
    %3568 = vmatpush1.msra.mxu0 0.0
    %3569 = vmatprep.subr.mxu0 0.0
    %3570 = vmatpush1.msra.mxu0 0.0
    %3571 = vmatprep.subr.mxu0 0.0
    %3572 = vmatpush1.msra.mxu0 0.0
    %3573 = vmatprep.subr.mxu0 0.0
    %3574 = vmatpush1.msra.mxu0 0.0
    %3575 = vmatprep.subr.mxu0 0.0
    %3576 = vmatpush1.msra.mxu0 0.0
    %3577 = vmatprep.subr.mxu0 0.0
    %3578 = vmatpush1.msra.mxu0 0.0
    %3579 = vmatprep.subr.mxu0 0.0
    %3580 = vmatpush1.msra.mxu0 0.0
    %3581 = vmatprep.subr.mxu0 0.0
    %3582 = vmatpush1.msra.mxu0 0.0
    %3583 = vmatprep.subr.mxu0 0.0
    %3584 = vmatpush1.msra.mxu0 0.0
    %3585 = vmatprep.subr.mxu0 0.0
    %3586 = vmatpush1.msra.mxu0 0.0
    %3587 = vmatprep.subr.mxu0 0.0
    %3588 = vmatpush1.msra.mxu0 0.0
    %3589 = vmatprep.subr.mxu0 0.0
    %3590 = vmatpush1.msra.mxu0 0.0
    %3591 = vmatprep.subr.mxu0 0.0
    %3592 = vmatpush1.msra.mxu0 0.0
    %3593 = vmatprep.subr.mxu0 0.0
    %3594 = vmatpush1.msra.mxu0 0.0
    %3595 = vmatprep.subr.mxu0 0.0
    %3596 = vmatpush1.msra.mxu0 0.0
    %3597 = vmatprep.subr.mxu0 0.0
    %3598 = vmatpush1.msra.mxu0 0.0
    %3599 = vmatprep.subr.mxu0 0.0
    %3600 = vmatpush1.msra.mxu0 0.0
    %3601 = vmatprep.subr.mxu0 0.0
    %3602 = vmatpush1.msra.mxu0 0.0
    %3603 = vmatprep.subr.mxu0 0.0
    %3604 = vmatpush1.msra.mxu0 0.0
    %3605 = vmatprep.subr.mxu0 0.0
    %3606 = vmatpush1.msra.mxu0 0.0
    %3607 = vmatprep.subr.mxu0 0.0
    %3608 = vmatpush1.msra.mxu0 0.0
    %3609 = vmatprep.subr.mxu0 0.0
    %3610 = vmatpush1.msra.mxu0 0.0
    %3611 = vmatprep.mubr.f32.mxu0 0.0
    %3612 = vmatmul.mubr.f32.gmra.mrb[0].mxu0 %v3542
    %v3613 = vpop.f32.mrb[0].mxu0
    %v3614 = vadd.f32 0.0, %v3613
    %v3615 = vpop.f32.mrb[0].mxu0
    %3616 = vmatprep.mubr.f32.mxu0 0.0
    %3617 = vmatmul.mubr.f32.gmra.mrb[0].mxu0 %v3545
    %v3618 = vpop.f32.mrb[0].mxu0
    %v3619 = vadd.f32 0.0, %v3618
    %v3620 = vpop.f32.mrb[0].mxu0
    %3621 = vdwg.mxu0
    %3622 = vmatprep.subr.mxu0 0.0
    %3623 = vmatpush1.msra.mxu0 %v178
    %3624 = vmatprep.subr.mxu0 0.0
    %3625 = vmatpush1.msra.mxu0 %v179
    %3626 = vmatprep.subr.mxu0 0.0
    %3627 = vmatpush1.msra.mxu0 %v180
    %3628 = vmatprep.subr.mxu0 0.0
    %3629 = vmatpush1.msra.mxu0 %v181
    %3630 = vmatprep.subr.mxu0 0.0
    %3631 = vmatpush1.msra.mxu0 0.0
    %3632 = vmatprep.subr.mxu0 0.0
    %3633 = vmatpush1.msra.mxu0 0.0
    %3634 = vmatprep.subr.mxu0 0.0
    %3635 = vmatpush1.msra.mxu0 0.0
    %3636 = vmatprep.subr.mxu0 0.0
    %3637 = vmatpush1.msra.mxu0 0.0
    %3638 = vmatprep.subr.mxu0 0.0
    %3639 = vmatpush1.msra.mxu0 0.0
    %3640 = vmatprep.subr.mxu0 0.0
    %3641 = vmatpush1.msra.mxu0 0.0
    %3642 = vmatprep.subr.mxu0 0.0
    %3643 = vmatpush1.msra.mxu0 0.0
    %3644 = vmatprep.subr.mxu0 0.0
    %3645 = vmatpush1.msra.mxu0 0.0
    %3646 = vmatprep.subr.mxu0 0.0
    %3647 = vmatpush1.msra.mxu0 0.0
    %3648 = vmatprep.subr.mxu0 0.0
    %3649 = vmatpush1.msra.mxu0 0.0
    %3650 = vmatprep.subr.mxu0 0.0
    %3651 = vmatpush1.msra.mxu0 0.0
    %3652 = vmatprep.subr.mxu0 0.0
    %3653 = vmatpush1.msra.mxu0 0.0
    %3654 = vmatprep.subr.mxu0 0.0
    %3655 = vmatpush1.msra.mxu0 0.0
    %3656 = vmatprep.subr.mxu0 0.0
    %3657 = vmatpush1.msra.mxu0 0.0
    %3658 = vmatprep.subr.mxu0 0.0
    %3659 = vmatpush1.msra.mxu0 0.0
    %3660 = vmatprep.subr.mxu0 0.0
    %3661 = vmatpush1.msra.mxu0 0.0
    %3662 = vmatprep.subr.mxu0 0.0
    %3663 = vmatpush1.msra.mxu0 0.0
    %3664 = vmatprep.subr.mxu0 0.0
    %3665 = vmatpush1.msra.mxu0 0.0
    %3666 = vmatprep.subr.mxu0 0.0
    %3667 = vmatpush1.msra.mxu0 0.0
    %3668 = vmatprep.subr.mxu0 0.0
    %3669 = vmatpush1.msra.mxu0 0.0
    %3670 = vmatprep.subr.mxu0 0.0
    %3671 = vmatpush1.msra.mxu0 0.0
    %3672 = vmatprep.subr.mxu0 0.0
    %3673 = vmatpush1.msra.mxu0 0.0
    %3674 = vmatprep.subr.mxu0 0.0
    %3675 = vmatpush1.msra.mxu0 0.0
    %3676 = vmatprep.subr.mxu0 0.0
    %3677 = vmatpush1.msra.mxu0 0.0
    %3678 = vmatprep.subr.mxu0 0.0
    %3679 = vmatpush1.msra.mxu0 0.0
    %3680 = vmatprep.subr.mxu0 0.0
    %3681 = vmatpush1.msra.mxu0 0.0
    %3682 = vmatprep.subr.mxu0 0.0
    %3683 = vmatpush1.msra.mxu0 0.0
    %3684 = vmatprep.subr.mxu0 0.0
    %3685 = vmatpush1.msra.mxu0 0.0
    %3686 = vmatprep.mubr.f32.mxu0 0.0
    %3687 = vmatmul.mubr.f32.gmra.mrb[0].mxu0 %v3542
    %v3688 = vpop.f32.mrb[0].mxu0
    %v3689 = vadd.f32 0.0, %v3688
    %v3690 = vpop.f32.mrb[0].mxu0
    %3691 = vmatprep.mubr.f32.mxu0 0.0
    %3692 = vmatmul.mubr.f32.gmra.mrb[0].mxu0 %v3545
    %v3693 = vpop.f32.mrb[0].mxu0
    %v3694 = vadd.f32 0.0, %v3693
    %v3695 = vpop.f32.mrb[0].mxu0
    %3696 = vdwg.mxu0
    %3697 = vmatprep.subr.mxu0 0.0
    %3698 = vmatpush1.msra.mxu0 %v183
    %3699 = vmatprep.subr.mxu0 0.0
    %3700 = vmatpush1.msra.mxu0 %v184
    %3701 = vmatprep.subr.mxu0 0.0
    %3702 = vmatpush1.msra.mxu0 %v185
    %3703 = vmatprep.subr.mxu0 0.0
    %3704 = vmatpush1.msra.mxu0 %v186
    %3705 = vmatprep.subr.mxu0 0.0
    %3706 = vmatpush1.msra.mxu0 0.0
    %3707 = vmatprep.subr.mxu0 0.0
    %3708 = vmatpush1.msra.mxu0 0.0
    %3709 = vmatprep.subr.mxu0 0.0
    %3710 = vmatpush1.msra.mxu0 0.0
    %3711 = vmatprep.subr.mxu0 0.0
    %3712 = vmatpush1.msra.mxu0 0.0
    %3713 = vmatprep.subr.mxu0 0.0
    %3714 = vmatpush1.msra.mxu0 0.0
    %3715 = vmatprep.subr.mxu0 0.0
    %3716 = vmatpush1.msra.mxu0 0.0
    %3717 = vmatprep.subr.mxu0 0.0
    %3718 = vmatpush1.msra.mxu0 0.0
    %3719 = vmatprep.subr.mxu0 0.0
    %3720 = vmatpush1.msra.mxu0 0.0
    %3721 = vmatprep.subr.mxu0 0.0
    %3722 = vmatpush1.msra.mxu0 0.0
    %3723 = vmatprep.subr.mxu0 0.0
    %3724 = vmatpush1.msra.mxu0 0.0
    %3725 = vmatprep.subr.mxu0 0.0
    %3726 = vmatpush1.msra.mxu0 0.0
    %3727 = vmatprep.subr.mxu0 0.0
    %3728 = vmatpush1.msra.mxu0 0.0
    %3729 = vmatprep.subr.mxu0 0.0
    %3730 = vmatpush1.msra.mxu0 0.0
    %3731 = vmatprep.subr.mxu0 0.0
    %3732 = vmatpush1.msra.mxu0 0.0
    %3733 = vmatprep.subr.mxu0 0.0
    %3734 = vmatpush1.msra.mxu0 0.0
    %3735 = vmatprep.subr.mxu0 0.0
    %3736 = vmatpush1.msra.mxu0 0.0
    %3737 = vmatprep.subr.mxu0 0.0
    %3738 = vmatpush1.msra.mxu0 0.0
    %3739 = vmatprep.subr.mxu0 0.0
    %3740 = vmatpush1.msra.mxu0 0.0
    %3741 = vmatprep.subr.mxu0 0.0
    %3742 = vmatpush1.msra.mxu0 0.0
    %3743 = vmatprep.subr.mxu0 0.0
    %3744 = vmatpush1.msra.mxu0 0.0
    %3745 = vmatprep.subr.mxu0 0.0
    %3746 = vmatpush1.msra.mxu0 0.0
    %3747 = vmatprep.subr.mxu0 0.0
    %3748 = vmatpush1.msra.mxu0 0.0
    %3749 = vmatprep.subr.mxu0 0.0
    %3750 = vmatpush1.msra.mxu0 0.0
    %3751 = vmatprep.subr.mxu0 0.0
    %3752 = vmatpush1.msra.mxu0 0.0
    %3753 = vmatprep.subr.mxu0 0.0
    %3754 = vmatpush1.msra.mxu0 0.0
    %3755 = vmatprep.subr.mxu0 0.0
    %3756 = vmatpush1.msra.mxu0 0.0
    %3757 = vmatprep.subr.mxu0 0.0
    %3758 = vmatpush1.msra.mxu0 0.0
    %3759 = vmatprep.subr.mxu0 0.0
    %3760 = vmatpush1.msra.mxu0 0.0
    %3761 = vmatprep.mubr.f32.mxu0 0.0
    %3762 = vmatmul.mubr.f32.gmra.mrb[0].mxu0 %v3542
    %v3763 = vpop.f32.mrb[0].mxu0
    %v3764 = vadd.f32 0.0, %v3763
    %v3765 = vpop.f32.mrb[0].mxu0
    %3766 = vmatprep.mubr.f32.mxu0 0.0
    %3767 = vmatmul.mubr.f32.gmra.mrb[0].mxu0 %v3545
    %v3768 = vpop.f32.mrb[0].mxu0
    %v3769 = vadd.f32 0.0, %v3768
    %v3770 = vpop.f32.mrb[0].mxu0
    %3771 = vdwg.mxu0
    %s3772 = scalar_lea.vmem [#allocation6], 288
    %v3773 = vld [vmem:[%s3772] sm:$0xff]
    %v3774 = vld [vmem:[%s3772 + $0x8] sm:$0xff]
    %s3775 = scalar_lea.vmem [#allocation6], 304
    %v3776 = vld [vmem:[%s3775] sm:$0xff]
    %v3777 = vld [vmem:[%s3775 + $0x8] sm:$0xff]
    %v3779 = vsel %vm462, %v3776, 0
    %v3782 = vsel %vm462, %v3777, 0
    %3784 = vmatprep.subr.mxu0 0.0
    %3785 = vmatpush1.msra.mxu0 %v3689
    %3786 = vmatprep.subr.mxu0 0.0
    %3787 = vmatpush1.msra.mxu0 %v3694
    %3788 = vmatprep.subr.mxu0 0.0
    %3789 = vmatpush1.msra.mxu0 0.0
    %3790 = vmatprep.subr.mxu0 0.0
    %3791 = vmatpush1.msra.mxu0 0.0
    %3792 = vmatprep.subr.mxu0 0.0
    %3793 = vmatpush1.msra.mxu0 0.0
    %3794 = vmatprep.subr.mxu0 0.0
    %3795 = vmatpush1.msra.mxu0 0.0
    %3796 = vmatprep.subr.mxu0 0.0
    %3797 = vmatpush1.msra.mxu0 0.0
    %3798 = vmatprep.subr.mxu0 0.0
    %3799 = vmatpush1.msra.mxu0 0.0
    %3800 = vmatprep.subr.mxu0 0.0
    %3801 = vmatpush1.msra.mxu0 0.0
    %3802 = vmatprep.subr.mxu0 0.0
    %3803 = vmatpush1.msra.mxu0 0.0
    %3804 = vmatprep.subr.mxu0 0.0
    %3805 = vmatpush1.msra.mxu0 0.0
    %3806 = vmatprep.subr.mxu0 0.0
    %3807 = vmatpush1.msra.mxu0 0.0
    %3808 = vmatprep.subr.mxu0 0.0
    %3809 = vmatpush1.msra.mxu0 0.0
    %3810 = vmatprep.subr.mxu0 0.0
    %3811 = vmatpush1.msra.mxu0 0.0
    %3812 = vmatprep.subr.mxu0 0.0
    %3813 = vmatpush1.msra.mxu0 0.0
    %3814 = vmatprep.subr.mxu0 0.0
    %3815 = vmatpush1.msra.mxu0 0.0
    %3816 = vmatprep.subr.mxu0 0.0
    %3817 = vmatpush1.msra.mxu0 0.0
    %3818 = vmatprep.subr.mxu0 0.0
    %3819 = vmatpush1.msra.mxu0 0.0
    %3820 = vmatprep.subr.mxu0 0.0
    %3821 = vmatpush1.msra.mxu0 0.0
    %3822 = vmatprep.subr.mxu0 0.0
    %3823 = vmatpush1.msra.mxu0 0.0
    %3824 = vmatprep.subr.mxu0 0.0
    %3825 = vmatpush1.msra.mxu0 0.0
    %3826 = vmatprep.subr.mxu0 0.0
    %3827 = vmatpush1.msra.mxu0 0.0
    %3828 = vmatprep.subr.mxu0 0.0
    %3829 = vmatpush1.msra.mxu0 0.0
    %3830 = vmatprep.subr.mxu0 0.0
    %3831 = vmatpush1.msra.mxu0 0.0
    %3832 = vmatprep.subr.mxu0 0.0
    %3833 = vmatpush1.msra.mxu0 0.0
    %3834 = vmatprep.subr.mxu0 0.0
    %3835 = vmatpush1.msra.mxu0 0.0
    %3836 = vmatprep.subr.mxu0 0.0
    %3837 = vmatpush1.msra.mxu0 0.0
    %3838 = vmatprep.subr.mxu0 0.0
    %3839 = vmatpush1.msra.mxu0 0.0
    %3840 = vmatprep.subr.mxu0 0.0
    %3841 = vmatpush1.msra.mxu0 0.0
    %3842 = vmatprep.subr.mxu0 0.0
    %3843 = vmatpush1.msra.mxu0 0.0
    %3844 = vmatprep.subr.mxu0 0.0
    %3845 = vmatpush1.msra.mxu0 0.0
    %3846 = vmatprep.subr.mxu0 0.0
    %3847 = vmatpush1.msra.mxu0 0.0
    %3848 = vmatprep.mubr.f32.mxu0 0.0
    %3849 = vmatmul.mubr.f32.gmra.mrb[0].mxu0 %v3779
    %v3850 = vpop.f32.mrb[0].mxu0
    %v3851 = vadd.f32 0.0, %v3850
    %v3852 = vpop.f32.mrb[0].mxu0
    %3853 = vmatprep.mubr.f32.mxu0 0.0
    %3854 = vmatmul.mubr.f32.gmra.mrb[0].mxu0 %v3782
    %v3855 = vpop.f32.mrb[0].mxu0
    %v3856 = vadd.f32 0.0, %v3855
    %v3857 = vpop.f32.mrb[0].mxu0
    %3858 = vdwg.mxu0
    %v3860 = vsel %vm462, %v3773, 0
    %v3863 = vsel %vm462, %v3774, 0
    %3865 = vmatprep.subr.mxu0 0.0
    %3866 = vmatpush1.msra.mxu0 %v3614
    %3867 = vmatprep.subr.mxu0 0.0
    %3868 = vmatpush1.msra.mxu0 %v3619
    %3869 = vmatprep.subr.mxu0 0.0
    %3870 = vmatpush1.msra.mxu0 0.0
    %3871 = vmatprep.subr.mxu0 0.0
    %3872 = vmatpush1.msra.mxu0 0.0
    %3873 = vmatprep.subr.mxu0 0.0
    %3874 = vmatpush1.msra.mxu0 0.0
    %3875 = vmatprep.subr.mxu0 0.0
    %3876 = vmatpush1.msra.mxu0 0.0
    %3877 = vmatprep.subr.mxu0 0.0
    %3878 = vmatpush1.msra.mxu0 0.0
    %3879 = vmatprep.subr.mxu0 0.0
    %3880 = vmatpush1.msra.mxu0 0.0
    %3881 = vmatprep.subr.mxu0 0.0
    %3882 = vmatpush1.msra.mxu0 0.0
    %3883 = vmatprep.subr.mxu0 0.0
    %3884 = vmatpush1.msra.mxu0 0.0
    %3885 = vmatprep.subr.mxu0 0.0
    %3886 = vmatpush1.msra.mxu0 0.0
    %3887 = vmatprep.subr.mxu0 0.0
    %3888 = vmatpush1.msra.mxu0 0.0
    %3889 = vmatprep.subr.mxu0 0.0
    %3890 = vmatpush1.msra.mxu0 0.0
    %3891 = vmatprep.subr.mxu0 0.0
    %3892 = vmatpush1.msra.mxu0 0.0
    %3893 = vmatprep.subr.mxu0 0.0
    %3894 = vmatpush1.msra.mxu0 0.0
    %3895 = vmatprep.subr.mxu0 0.0
    %3896 = vmatpush1.msra.mxu0 0.0
    %3897 = vmatprep.subr.mxu0 0.0
    %3898 = vmatpush1.msra.mxu0 0.0
    %3899 = vmatprep.subr.mxu0 0.0
    %3900 = vmatpush1.msra.mxu0 0.0
    %3901 = vmatprep.subr.mxu0 0.0
    %3902 = vmatpush1.msra.mxu0 0.0
    %3903 = vmatprep.subr.mxu0 0.0
    %3904 = vmatpush1.msra.mxu0 0.0
    %3905 = vmatprep.subr.mxu0 0.0
    %3906 = vmatpush1.msra.mxu0 0.0
    %3907 = vmatprep.subr.mxu0 0.0
    %3908 = vmatpush1.msra.mxu0 0.0
    %3909 = vmatprep.subr.mxu0 0.0
    %3910 = vmatpush1.msra.mxu0 0.0
    %3911 = vmatprep.subr.mxu0 0.0
    %3912 = vmatpush1.msra.mxu0 0.0
    %3913 = vmatprep.subr.mxu0 0.0
    %3914 = vmatpush1.msra.mxu0 0.0
    %3915 = vmatprep.subr.mxu0 0.0
    %3916 = vmatpush1.msra.mxu0 0.0
    %3917 = vmatprep.subr.mxu0 0.0
    %3918 = vmatpush1.msra.mxu0 0.0
    %3919 = vmatprep.subr.mxu0 0.0
    %3920 = vmatpush1.msra.mxu0 0.0
    %3921 = vmatprep.subr.mxu0 0.0
    %3922 = vmatpush1.msra.mxu0 0.0
    %3923 = vmatprep.subr.mxu0 0.0
    %3924 = vmatpush1.msra.mxu0 0.0
    %3925 = vmatprep.subr.mxu0 0.0
    %3926 = vmatpush1.msra.mxu0 0.0
    %3927 = vmatprep.subr.mxu0 0.0
    %3928 = vmatpush1.msra.mxu0 0.0
    %3929 = vmatprep.mubr.f32.mxu0 0.0
    %3930 = vmatmul.mubr.f32.gmra.mrb[0].mxu0 %v3860
    %v3931 = vpop.f32.mrb[0].mxu0
    %v3932 = vadd.f32 %v3851, %v3931
    %v3933 = vpop.f32.mrb[0].mxu0
    %3934 = vmatprep.mubr.f32.mxu0 0.0
    %3935 = vmatmul.mubr.f32.gmra.mrb[0].mxu0 %v3863
    %v3936 = vpop.f32.mrb[0].mxu0
    %v3937 = vadd.f32 %v3856, %v3936
    %v3938 = vpop.f32.mrb[0].mxu0
    %3939 = vdwg.mxu0
    %s3940 = scalar_lea.vmem [#allocation6], 320
    %v3941 = vld [vmem:[%s3940] sm:$0xff]
    %v3942 = vld [vmem:[%s3940 + $0x8] sm:$0xff]
    %v3944 = vsel %vm462, %v3941, 0
    %v3947 = vsel %vm462, %v3942, 0
    %3949 = vmatprep.subr.mxu0 0.0
    %3950 = vmatpush1.msra.mxu0 %v3764
    %3951 = vmatprep.subr.mxu0 0.0
    %3952 = vmatpush1.msra.mxu0 %v3769
    %3953 = vmatprep.subr.mxu0 0.0
    %3954 = vmatpush1.msra.mxu0 0.0
    %3955 = vmatprep.subr.mxu0 0.0
    %3956 = vmatpush1.msra.mxu0 0.0
    %3957 = vmatprep.subr.mxu0 0.0
    %3958 = vmatpush1.msra.mxu0 0.0
    %3959 = vmatprep.subr.mxu0 0.0
    %3960 = vmatpush1.msra.mxu0 0.0
    %3961 = vmatprep.subr.mxu0 0.0
    %3962 = vmatpush1.msra.mxu0 0.0
    %3963 = vmatprep.subr.mxu0 0.0
    %3964 = vmatpush1.msra.mxu0 0.0
    %3965 = vmatprep.subr.mxu0 0.0
    %3966 = vmatpush1.msra.mxu0 0.0
    %3967 = vmatprep.subr.mxu0 0.0
    %3968 = vmatpush1.msra.mxu0 0.0
    %3969 = vmatprep.subr.mxu0 0.0
    %3970 = vmatpush1.msra.mxu0 0.0
    %3971 = vmatprep.subr.mxu0 0.0
    %3972 = vmatpush1.msra.mxu0 0.0
    %3973 = vmatprep.subr.mxu0 0.0
    %3974 = vmatpush1.msra.mxu0 0.0
    %3975 = vmatprep.subr.mxu0 0.0
    %3976 = vmatpush1.msra.mxu0 0.0
    %3977 = vmatprep.subr.mxu0 0.0
    %3978 = vmatpush1.msra.mxu0 0.0
    %3979 = vmatprep.subr.mxu0 0.0
    %3980 = vmatpush1.msra.mxu0 0.0
    %3981 = vmatprep.subr.mxu0 0.0
    %3982 = vmatpush1.msra.mxu0 0.0
    %3983 = vmatprep.subr.mxu0 0.0
    %3984 = vmatpush1.msra.mxu0 0.0
    %3985 = vmatprep.subr.mxu0 0.0
    %3986 = vmatpush1.msra.mxu0 0.0
    %3987 = vmatprep.subr.mxu0 0.0
    %3988 = vmatpush1.msra.mxu0 0.0
    %3989 = vmatprep.subr.mxu0 0.0
    %3990 = vmatpush1.msra.mxu0 0.0
    %3991 = vmatprep.subr.mxu0 0.0
    %3992 = vmatpush1.msra.mxu0 0.0
    %3993 = vmatprep.subr.mxu0 0.0
    %3994 = vmatpush1.msra.mxu0 0.0
    %3995 = vmatprep.subr.mxu0 0.0
    %3996 = vmatpush1.msra.mxu0 0.0
    %3997 = vmatprep.subr.mxu0 0.0
    %3998 = vmatpush1.msra.mxu0 0.0
    %3999 = vmatprep.subr.mxu0 0.0
    %4000 = vmatpush1.msra.mxu0 0.0
    %4001 = vmatprep.subr.mxu0 0.0
    %4002 = vmatpush1.msra.mxu0 0.0
    %4003 = vmatprep.subr.mxu0 0.0
    %4004 = vmatpush1.msra.mxu0 0.0
    %4005 = vmatprep.subr.mxu0 0.0
    %4006 = vmatpush1.msra.mxu0 0.0
    %4007 = vmatprep.subr.mxu0 0.0
    %4008 = vmatpush1.msra.mxu0 0.0
    %4009 = vmatprep.subr.mxu0 0.0
    %4010 = vmatpush1.msra.mxu0 0.0
    %4011 = vmatprep.subr.mxu0 0.0
    %4012 = vmatpush1.msra.mxu0 0.0
    %4013 = vmatprep.mubr.f32.mxu0 0.0
    %4014 = vmatmul.mubr.f32.gmra.mrb[0].mxu0 %v3944
    %v4015 = vpop.f32.mrb[0].mxu0
    %v4016 = vadd.f32 0.0, %v4015
    %v4017 = vpop.f32.mrb[0].mxu0
    %4018 = vmatprep.mubr.f32.mxu0 0.0
    %4019 = vmatmul.mubr.f32.gmra.mrb[0].mxu0 %v3947
    %v4020 = vpop.f32.mrb[0].mxu0
    %v4021 = vadd.f32 0.0, %v4020
    %v4022 = vpop.f32.mrb[0].mxu0
    %4023 = vdwg.mxu0
    %v4024 = vadd.f32 %v3932, %v4016
    %v4025 = vadd.f32 %v3937, %v4021
    %v4026 = vsel %vm225, %v4024, 0.0
    %v4027 = vsel %vm225, %v4025, 0.0
    %v4028 = vadd.f32 %v4026, %v4027
    %4029 = vadd.xlane.f32.xlu0 %v4028
    %v4030 = vpop.xlane.xlu0 %4029
    %v4031 = vrot.slane %v4030, 4
    %v4032 = vadd.f32 %v4030, %v4031
    %v4033 = vrot.slane %v4032, 2
    %v4034 = vadd.f32 %v4032, %v4033
    %v4035 = vrot.slane %v4034, 1
    %v4036 = vadd.f32 %v4034, %v4035
    %s4037 = vtos %v4036
    %v4038 = vstv %s4037
    %v4039 = vmul.f32 %v4024, %v4024
    %v4040 = vmul.f32 %v4025, %v4025
    %v4041 = vsel %vm225, %v4039, 0.0
    %v4042 = vsel %vm225, %v4040, 0.0
    %v4043 = vadd.f32 %v4041, %v4042
    %4044 = vadd.xlane.f32.xlu0 %v4043
    %v4045 = vpop.xlane.xlu0 %4044
    %v4046 = vrot.slane %v4045, 4
    %v4047 = vadd.f32 %v4045, %v4046
    %v4048 = vrot.slane %v4047, 2
    %v4049 = vadd.f32 %v4047, %v4048
    %v4050 = vrot.slane %v4049, 1
    %v4051 = vadd.f32 %v4049, %v4050
    %s4052 = vtos %v4051
    %v4053 = vstv %s4052
    %v4054 = vrcp.pop 512.0
    %v4055 = vmul.f32 %v4038, %v4054
    %v4056 = vmul.f32 %v4053, %v4054
    %v4057 = vmul.f32 %v4055, %v4055
    %v4058 = vsub.f32 %v4056, %v4057
    %v4059 = vmax.f32 %v4058, 0.0
    %s4060 = sld [smem:[#allocation15 + $0x2]]
    %v4061 = vadd.f32 %v4059, 1e-05
    %v4062 = vrsqrt.pop %v4061
    %v4063 = vstv %s4060
    %v4064 = vmul.f32 %v4063, %v4062
    %s4065 = sld [smem:[#allocation17 + $0x2]]
    %v4066 = vmul.f32 %v4055, %v4064
    %v4067 = vstv %s4065
    %v4068 = vsub.f32 %v4067, %v4066
    %v4069 = vmul.f32 %v4024, %v4064
    %v4070 = vmul.f32 %v4025, %v4064
    %v4071 = vadd.f32 %v4069, %v4068
    %v4072 = vadd.f32 %v4070, %v4068
    %v4074 = vsel %vm225, %v4071, 0
    %v4077 = vsel %vm225, %v4072, 0
    %4079 = vmatprep.subr.mxu0 0.0
    %4080 = vmatpush1.msra.mxu0 %v173
    %4081 = vmatprep.subr.mxu0 0.0
    %4082 = vmatpush1.msra.mxu0 %v174
    %4083 = vmatprep.subr.mxu0 0.0
    %4084 = vmatpush1.msra.mxu0 %v175
    %4085 = vmatprep.subr.mxu0 0.0
    %4086 = vmatpush1.msra.mxu0 %v176
    %4087 = vmatprep.subr.mxu0 0.0
    %4088 = vmatpush1.msra.mxu0 0.0
    %4089 = vmatprep.subr.mxu0 0.0
    %4090 = vmatpush1.msra.mxu0 0.0
    %4091 = vmatprep.subr.mxu0 0.0
    %4092 = vmatpush1.msra.mxu0 0.0
    %4093 = vmatprep.subr.mxu0 0.0
    %4094 = vmatpush1.msra.mxu0 0.0
    %4095 = vmatprep.subr.mxu0 0.0
    %4096 = vmatpush1.msra.mxu0 0.0
    %4097 = vmatprep.subr.mxu0 0.0
    %4098 = vmatpush1.msra.mxu0 0.0
    %4099 = vmatprep.subr.mxu0 0.0
    %4100 = vmatpush1.msra.mxu0 0.0
    %4101 = vmatprep.subr.mxu0 0.0
    %4102 = vmatpush1.msra.mxu0 0.0
    %4103 = vmatprep.subr.mxu0 0.0
    %4104 = vmatpush1.msra.mxu0 0.0
    %4105 = vmatprep.subr.mxu0 0.0
    %4106 = vmatpush1.msra.mxu0 0.0
    %4107 = vmatprep.subr.mxu0 0.0
    %4108 = vmatpush1.msra.mxu0 0.0
    %4109 = vmatprep.subr.mxu0 0.0
    %4110 = vmatpush1.msra.mxu0 0.0
    %4111 = vmatprep.subr.mxu0 0.0
    %4112 = vmatpush1.msra.mxu0 0.0
    %4113 = vmatprep.subr.mxu0 0.0
    %4114 = vmatpush1.msra.mxu0 0.0
    %4115 = vmatprep.subr.mxu0 0.0
    %4116 = vmatpush1.msra.mxu0 0.0
    %4117 = vmatprep.subr.mxu0 0.0
    %4118 = vmatpush1.msra.mxu0 0.0
    %4119 = vmatprep.subr.mxu0 0.0
    %4120 = vmatpush1.msra.mxu0 0.0
    %4121 = vmatprep.subr.mxu0 0.0
    %4122 = vmatpush1.msra.mxu0 0.0
    %4123 = vmatprep.subr.mxu0 0.0
    %4124 = vmatpush1.msra.mxu0 0.0
    %4125 = vmatprep.subr.mxu0 0.0
    %4126 = vmatpush1.msra.mxu0 0.0
    %4127 = vmatprep.subr.mxu0 0.0
    %4128 = vmatpush1.msra.mxu0 0.0
    %4129 = vmatprep.subr.mxu0 0.0
    %4130 = vmatpush1.msra.mxu0 0.0
    %4131 = vmatprep.subr.mxu0 0.0
    %4132 = vmatpush1.msra.mxu0 0.0
    %4133 = vmatprep.subr.mxu0 0.0
    %4134 = vmatpush1.msra.mxu0 0.0
    %4135 = vmatprep.subr.mxu0 0.0
    %4136 = vmatpush1.msra.mxu0 0.0
    %4137 = vmatprep.subr.mxu0 0.0
    %4138 = vmatpush1.msra.mxu0 0.0
    %4139 = vmatprep.subr.mxu0 0.0
    %4140 = vmatpush1.msra.mxu0 0.0
    %4141 = vmatprep.subr.mxu0 0.0
    %4142 = vmatpush1.msra.mxu0 0.0
    %4143 = vmatprep.mubr.f32.mxu0 0.0
    %4144 = vmatmul.mubr.f32.gmra.mrb[0].mxu0 %v4074
    %v4145 = vpop.f32.mrb[0].mxu0
    %v4146 = vadd.f32 0.0, %v4145
    %v4147 = vpop.f32.mrb[0].mxu0
    %4148 = vmatprep.mubr.f32.mxu0 0.0
    %4149 = vmatmul.mubr.f32.gmra.mrb[0].mxu0 %v4077
    %v4150 = vpop.f32.mrb[0].mxu0
    %v4151 = vadd.f32 0.0, %v4150
    %v4152 = vpop.f32.mrb[0].mxu0
    %4153 = vdwg.mxu0
    %4154 = vmatprep.subr.mxu0 0.0
    %4155 = vmatpush1.msra.mxu0 %v178
    %4156 = vmatprep.subr.mxu0 0.0
    %4157 = vmatpush1.msra.mxu0 %v179
    %4158 = vmatprep.subr.mxu0 0.0
    %4159 = vmatpush1.msra.mxu0 %v180
    %4160 = vmatprep.subr.mxu0 0.0
    %4161 = vmatpush1.msra.mxu0 %v181
    %4162 = vmatprep.subr.mxu0 0.0
    %4163 = vmatpush1.msra.mxu0 0.0
    %4164 = vmatprep.subr.mxu0 0.0
    %4165 = vmatpush1.msra.mxu0 0.0
    %4166 = vmatprep.subr.mxu0 0.0
    %4167 = vmatpush1.msra.mxu0 0.0
    %4168 = vmatprep.subr.mxu0 0.0
    %4169 = vmatpush1.msra.mxu0 0.0
    %4170 = vmatprep.subr.mxu0 0.0
    %4171 = vmatpush1.msra.mxu0 0.0
    %4172 = vmatprep.subr.mxu0 0.0
    %4173 = vmatpush1.msra.mxu0 0.0
    %4174 = vmatprep.subr.mxu0 0.0
    %4175 = vmatpush1.msra.mxu0 0.0
    %4176 = vmatprep.subr.mxu0 0.0
    %4177 = vmatpush1.msra.mxu0 0.0
    %4178 = vmatprep.subr.mxu0 0.0
    %4179 = vmatpush1.msra.mxu0 0.0
    %4180 = vmatprep.subr.mxu0 0.0
    %4181 = vmatpush1.msra.mxu0 0.0
    %4182 = vmatprep.subr.mxu0 0.0
    %4183 = vmatpush1.msra.mxu0 0.0
    %4184 = vmatprep.subr.mxu0 0.0
    %4185 = vmatpush1.msra.mxu0 0.0
    %4186 = vmatprep.subr.mxu0 0.0
    %4187 = vmatpush1.msra.mxu0 0.0
    %4188 = vmatprep.subr.mxu0 0.0
    %4189 = vmatpush1.msra.mxu0 0.0
    %4190 = vmatprep.subr.mxu0 0.0
    %4191 = vmatpush1.msra.mxu0 0.0
    %4192 = vmatprep.subr.mxu0 0.0
    %4193 = vmatpush1.msra.mxu0 0.0
    %4194 = vmatprep.subr.mxu0 0.0
    %4195 = vmatpush1.msra.mxu0 0.0
    %4196 = vmatprep.subr.mxu0 0.0
    %4197 = vmatpush1.msra.mxu0 0.0
    %4198 = vmatprep.subr.mxu0 0.0
    %4199 = vmatpush1.msra.mxu0 0.0
    %4200 = vmatprep.subr.mxu0 0.0
    %4201 = vmatpush1.msra.mxu0 0.0
    %4202 = vmatprep.subr.mxu0 0.0
    %4203 = vmatpush1.msra.mxu0 0.0
    %4204 = vmatprep.subr.mxu0 0.0
    %4205 = vmatpush1.msra.mxu0 0.0
    %4206 = vmatprep.subr.mxu0 0.0
    %4207 = vmatpush1.msra.mxu0 0.0
    %4208 = vmatprep.subr.mxu0 0.0
    %4209 = vmatpush1.msra.mxu0 0.0
    %4210 = vmatprep.subr.mxu0 0.0
    %4211 = vmatpush1.msra.mxu0 0.0
    %4212 = vmatprep.subr.mxu0 0.0
    %4213 = vmatpush1.msra.mxu0 0.0
    %4214 = vmatprep.subr.mxu0 0.0
    %4215 = vmatpush1.msra.mxu0 0.0
    %4216 = vmatprep.subr.mxu0 0.0
    %4217 = vmatpush1.msra.mxu0 0.0
    %4218 = vmatprep.mubr.f32.mxu0 0.0
    %4219 = vmatmul.mubr.f32.gmra.mrb[0].mxu0 %v4074
    %v4220 = vpop.f32.mrb[0].mxu0
    %v4221 = vadd.f32 0.0, %v4220
    %v4222 = vpop.f32.mrb[0].mxu0
    %4223 = vmatprep.mubr.f32.mxu0 0.0
    %4224 = vmatmul.mubr.f32.gmra.mrb[0].mxu0 %v4077
    %v4225 = vpop.f32.mrb[0].mxu0
    %v4226 = vadd.f32 0.0, %v4225
    %v4227 = vpop.f32.mrb[0].mxu0
    %4228 = vdwg.mxu0
    %4229 = vmatprep.subr.mxu0 0.0
    %4230 = vmatpush1.msra.mxu0 %v183
    %4231 = vmatprep.subr.mxu0 0.0
    %4232 = vmatpush1.msra.mxu0 %v184
    %4233 = vmatprep.subr.mxu0 0.0
    %4234 = vmatpush1.msra.mxu0 %v185
    %4235 = vmatprep.subr.mxu0 0.0
    %4236 = vmatpush1.msra.mxu0 %v186
    %4237 = vmatprep.subr.mxu0 0.0
    %4238 = vmatpush1.msra.mxu0 0.0
    %4239 = vmatprep.subr.mxu0 0.0
    %4240 = vmatpush1.msra.mxu0 0.0
    %4241 = vmatprep.subr.mxu0 0.0
    %4242 = vmatpush1.msra.mxu0 0.0
    %4243 = vmatprep.subr.mxu0 0.0
    %4244 = vmatpush1.msra.mxu0 0.0
    %4245 = vmatprep.subr.mxu0 0.0
    %4246 = vmatpush1.msra.mxu0 0.0
    %4247 = vmatprep.subr.mxu0 0.0
    %4248 = vmatpush1.msra.mxu0 0.0
    %4249 = vmatprep.subr.mxu0 0.0
    %4250 = vmatpush1.msra.mxu0 0.0
    %4251 = vmatprep.subr.mxu0 0.0
    %4252 = vmatpush1.msra.mxu0 0.0
    %4253 = vmatprep.subr.mxu0 0.0
    %4254 = vmatpush1.msra.mxu0 0.0
    %4255 = vmatprep.subr.mxu0 0.0
    %4256 = vmatpush1.msra.mxu0 0.0
    %4257 = vmatprep.subr.mxu0 0.0
    %4258 = vmatpush1.msra.mxu0 0.0
    %4259 = vmatprep.subr.mxu0 0.0
    %4260 = vmatpush1.msra.mxu0 0.0
    %4261 = vmatprep.subr.mxu0 0.0
    %4262 = vmatpush1.msra.mxu0 0.0
    %4263 = vmatprep.subr.mxu0 0.0
    %4264 = vmatpush1.msra.mxu0 0.0
    %4265 = vmatprep.subr.mxu0 0.0
    %4266 = vmatpush1.msra.mxu0 0.0
    %4267 = vmatprep.subr.mxu0 0.0
    %4268 = vmatpush1.msra.mxu0 0.0
    %4269 = vmatprep.subr.mxu0 0.0
    %4270 = vmatpush1.msra.mxu0 0.0
    %4271 = vmatprep.subr.mxu0 0.0
    %4272 = vmatpush1.msra.mxu0 0.0
    %4273 = vmatprep.subr.mxu0 0.0
    %4274 = vmatpush1.msra.mxu0 0.0
    %4275 = vmatprep.subr.mxu0 0.0
    %4276 = vmatpush1.msra.mxu0 0.0
    %4277 = vmatprep.subr.mxu0 0.0
    %4278 = vmatpush1.msra.mxu0 0.0
    %4279 = vmatprep.subr.mxu0 0.0
    %4280 = vmatpush1.msra.mxu0 0.0
    %4281 = vmatprep.subr.mxu0 0.0
    %4282 = vmatpush1.msra.mxu0 0.0
    %4283 = vmatprep.subr.mxu0 0.0
    %4284 = vmatpush1.msra.mxu0 0.0
    %4285 = vmatprep.subr.mxu0 0.0
    %4286 = vmatpush1.msra.mxu0 0.0
    %4287 = vmatprep.subr.mxu0 0.0
    %4288 = vmatpush1.msra.mxu0 0.0
    %4289 = vmatprep.subr.mxu0 0.0
    %4290 = vmatpush1.msra.mxu0 0.0
    %4291 = vmatprep.subr.mxu0 0.0
    %4292 = vmatpush1.msra.mxu0 0.0
    %4293 = vmatprep.mubr.f32.mxu0 0.0
    %4294 = vmatmul.mubr.f32.gmra.mrb[0].mxu0 %v4074
    %v4295 = vpop.f32.mrb[0].mxu0
    %v4296 = vadd.f32 0.0, %v4295
    %v4297 = vpop.f32.mrb[0].mxu0
    %4298 = vmatprep.mubr.f32.mxu0 0.0
    %4299 = vmatmul.mubr.f32.gmra.mrb[0].mxu0 %v4077
    %v4300 = vpop.f32.mrb[0].mxu0
    %v4301 = vadd.f32 0.0, %v4300
    %v4302 = vpop.f32.mrb[0].mxu0
    %4303 = vdwg.mxu0
    %s4304 = scalar_lea.vmem [#allocation6], 336
    %v4305 = vld [vmem:[%s4304] sm:$0xff]
    %v4306 = vld [vmem:[%s4304 + $0x8] sm:$0xff]
    %s4307 = scalar_lea.vmem [#allocation6], 352
    %v4308 = vld [vmem:[%s4307] sm:$0xff]
    %v4309 = vld [vmem:[%s4307 + $0x8] sm:$0xff]
    %v4311 = vsel %vm462, %v4308, 0
    %v4314 = vsel %vm462, %v4309, 0
    %4316 = vmatprep.subr.mxu0 0.0
    %4317 = vmatpush1.msra.mxu0 %v4221
    %4318 = vmatprep.subr.mxu0 0.0
    %4319 = vmatpush1.msra.mxu0 %v4226
    %4320 = vmatprep.subr.mxu0 0.0
    %4321 = vmatpush1.msra.mxu0 0.0
    %4322 = vmatprep.subr.mxu0 0.0
    %4323 = vmatpush1.msra.mxu0 0.0
    %4324 = vmatprep.subr.mxu0 0.0
    %4325 = vmatpush1.msra.mxu0 0.0
    %4326 = vmatprep.subr.mxu0 0.0
    %4327 = vmatpush1.msra.mxu0 0.0
    %4328 = vmatprep.subr.mxu0 0.0
    %4329 = vmatpush1.msra.mxu0 0.0
    %4330 = vmatprep.subr.mxu0 0.0
    %4331 = vmatpush1.msra.mxu0 0.0
    %4332 = vmatprep.subr.mxu0 0.0
    %4333 = vmatpush1.msra.mxu0 0.0
    %4334 = vmatprep.subr.mxu0 0.0
    %4335 = vmatpush1.msra.mxu0 0.0
    %4336 = vmatprep.subr.mxu0 0.0
    %4337 = vmatpush1.msra.mxu0 0.0
    %4338 = vmatprep.subr.mxu0 0.0
    %4339 = vmatpush1.msra.mxu0 0.0
    %4340 = vmatprep.subr.mxu0 0.0
    %4341 = vmatpush1.msra.mxu0 0.0
    %4342 = vmatprep.subr.mxu0 0.0
    %4343 = vmatpush1.msra.mxu0 0.0
    %4344 = vmatprep.subr.mxu0 0.0
    %4345 = vmatpush1.msra.mxu0 0.0
    %4346 = vmatprep.subr.mxu0 0.0
    %4347 = vmatpush1.msra.mxu0 0.0
    %4348 = vmatprep.subr.mxu0 0.0
    %4349 = vmatpush1.msra.mxu0 0.0
    %4350 = vmatprep.subr.mxu0 0.0
    %4351 = vmatpush1.msra.mxu0 0.0
    %4352 = vmatprep.subr.mxu0 0.0
    %4353 = vmatpush1.msra.mxu0 0.0
    %4354 = vmatprep.subr.mxu0 0.0
    %4355 = vmatpush1.msra.mxu0 0.0
    %4356 = vmatprep.subr.mxu0 0.0
    %4357 = vmatpush1.msra.mxu0 0.0
    %4358 = vmatprep.subr.mxu0 0.0
    %4359 = vmatpush1.msra.mxu0 0.0
    %4360 = vmatprep.subr.mxu0 0.0
    %4361 = vmatpush1.msra.mxu0 0.0
    %4362 = vmatprep.subr.mxu0 0.0
    %4363 = vmatpush1.msra.mxu0 0.0
    %4364 = vmatprep.subr.mxu0 0.0
    %4365 = vmatpush1.msra.mxu0 0.0
    %4366 = vmatprep.subr.mxu0 0.0
    %4367 = vmatpush1.msra.mxu0 0.0
    %4368 = vmatprep.subr.mxu0 0.0
    %4369 = vmatpush1.msra.mxu0 0.0
    %4370 = vmatprep.subr.mxu0 0.0
    %4371 = vmatpush1.msra.mxu0 0.0
    %4372 = vmatprep.subr.mxu0 0.0
    %4373 = vmatpush1.msra.mxu0 0.0
    %4374 = vmatprep.subr.mxu0 0.0
    %4375 = vmatpush1.msra.mxu0 0.0
    %4376 = vmatprep.subr.mxu0 0.0
    %4377 = vmatpush1.msra.mxu0 0.0
    %4378 = vmatprep.subr.mxu0 0.0
    %4379 = vmatpush1.msra.mxu0 0.0
    %4380 = vmatprep.mubr.f32.mxu0 0.0
    %4381 = vmatmul.mubr.f32.gmra.mrb[0].mxu0 %v4311
    %v4382 = vpop.f32.mrb[0].mxu0
    %v4383 = vadd.f32 0.0, %v4382
    %v4384 = vpop.f32.mrb[0].mxu0
    %4385 = vmatprep.mubr.f32.mxu0 0.0
    %4386 = vmatmul.mubr.f32.gmra.mrb[0].mxu0 %v4314
    %v4387 = vpop.f32.mrb[0].mxu0
    %v4388 = vadd.f32 0.0, %v4387
    %v4389 = vpop.f32.mrb[0].mxu0
    %4390 = vdwg.mxu0
    %v4392 = vsel %vm462, %v4305, 0
    %v4395 = vsel %vm462, %v4306, 0
    %4397 = vmatprep.subr.mxu0 0.0
    %4398 = vmatpush1.msra.mxu0 %v4146
    %4399 = vmatprep.subr.mxu0 0.0
    %4400 = vmatpush1.msra.mxu0 %v4151
    %4401 = vmatprep.subr.mxu0 0.0
    %4402 = vmatpush1.msra.mxu0 0.0
    %4403 = vmatprep.subr.mxu0 0.0
    %4404 = vmatpush1.msra.mxu0 0.0
    %4405 = vmatprep.subr.mxu0 0.0
    %4406 = vmatpush1.msra.mxu0 0.0
    %4407 = vmatprep.subr.mxu0 0.0
    %4408 = vmatpush1.msra.mxu0 0.0
    %4409 = vmatprep.subr.mxu0 0.0
    %4410 = vmatpush1.msra.mxu0 0.0
    %4411 = vmatprep.subr.mxu0 0.0
    %4412 = vmatpush1.msra.mxu0 0.0
    %4413 = vmatprep.subr.mxu0 0.0
    %4414 = vmatpush1.msra.mxu0 0.0
    %4415 = vmatprep.subr.mxu0 0.0
    %4416 = vmatpush1.msra.mxu0 0.0
    %4417 = vmatprep.subr.mxu0 0.0
    %4418 = vmatpush1.msra.mxu0 0.0
    %4419 = vmatprep.subr.mxu0 0.0
    %4420 = vmatpush1.msra.mxu0 0.0
    %4421 = vmatprep.subr.mxu0 0.0
    %4422 = vmatpush1.msra.mxu0 0.0
    %4423 = vmatprep.subr.mxu0 0.0
    %4424 = vmatpush1.msra.mxu0 0.0
    %4425 = vmatprep.subr.mxu0 0.0
    %4426 = vmatpush1.msra.mxu0 0.0
    %4427 = vmatprep.subr.mxu0 0.0
    %4428 = vmatpush1.msra.mxu0 0.0
    %4429 = vmatprep.subr.mxu0 0.0
    %4430 = vmatpush1.msra.mxu0 0.0
    %4431 = vmatprep.subr.mxu0 0.0
    %4432 = vmatpush1.msra.mxu0 0.0
    %4433 = vmatprep.subr.mxu0 0.0
    %4434 = vmatpush1.msra.mxu0 0.0
    %4435 = vmatprep.subr.mxu0 0.0
    %4436 = vmatpush1.msra.mxu0 0.0
    %4437 = vmatprep.subr.mxu0 0.0
    %4438 = vmatpush1.msra.mxu0 0.0
    %4439 = vmatprep.subr.mxu0 0.0
    %4440 = vmatpush1.msra.mxu0 0.0
    %4441 = vmatprep.subr.mxu0 0.0
    %4442 = vmatpush1.msra.mxu0 0.0
    %4443 = vmatprep.subr.mxu0 0.0
    %4444 = vmatpush1.msra.mxu0 0.0
    %4445 = vmatprep.subr.mxu0 0.0
    %4446 = vmatpush1.msra.mxu0 0.0
    %4447 = vmatprep.subr.mxu0 0.0
    %4448 = vmatpush1.msra.mxu0 0.0
    %4449 = vmatprep.subr.mxu0 0.0
    %4450 = vmatpush1.msra.mxu0 0.0
    %4451 = vmatprep.subr.mxu0 0.0
    %4452 = vmatpush1.msra.mxu0 0.0
    %4453 = vmatprep.subr.mxu0 0.0
    %4454 = vmatpush1.msra.mxu0 0.0
    %4455 = vmatprep.subr.mxu0 0.0
    %4456 = vmatpush1.msra.mxu0 0.0
    %4457 = vmatprep.subr.mxu0 0.0
    %4458 = vmatpush1.msra.mxu0 0.0
    %4459 = vmatprep.subr.mxu0 0.0
    %4460 = vmatpush1.msra.mxu0 0.0
    %4461 = vmatprep.mubr.f32.mxu0 0.0
    %4462 = vmatmul.mubr.f32.gmra.mrb[0].mxu0 %v4392
    %v4463 = vpop.f32.mrb[0].mxu0
    %v4464 = vadd.f32 %v4383, %v4463
    %v4465 = vpop.f32.mrb[0].mxu0
    %4466 = vmatprep.mubr.f32.mxu0 0.0
    %4467 = vmatmul.mubr.f32.gmra.mrb[0].mxu0 %v4395
    %v4468 = vpop.f32.mrb[0].mxu0
    %v4469 = vadd.f32 %v4388, %v4468
    %v4470 = vpop.f32.mrb[0].mxu0
    %4471 = vdwg.mxu0
    %s4472 = scalar_lea.vmem [#allocation6], 368
    %v4473 = vld [vmem:[%s4472] sm:$0xff]
    %v4474 = vld [vmem:[%s4472 + $0x8] sm:$0xff]
    %v4476 = vsel %vm462, %v4473, 0
    %v4479 = vsel %vm462, %v4474, 0
    %4481 = vmatprep.subr.mxu0 0.0
    %4482 = vmatpush1.msra.mxu0 %v4296
    %4483 = vmatprep.subr.mxu0 0.0
    %4484 = vmatpush1.msra.mxu0 %v4301
    %4485 = vmatprep.subr.mxu0 0.0
    %4486 = vmatpush1.msra.mxu0 0.0
    %4487 = vmatprep.subr.mxu0 0.0
    %4488 = vmatpush1.msra.mxu0 0.0
    %4489 = vmatprep.subr.mxu0 0.0
    %4490 = vmatpush1.msra.mxu0 0.0
    %4491 = vmatprep.subr.mxu0 0.0
    %4492 = vmatpush1.msra.mxu0 0.0
    %4493 = vmatprep.subr.mxu0 0.0
    %4494 = vmatpush1.msra.mxu0 0.0
    %4495 = vmatprep.subr.mxu0 0.0
    %4496 = vmatpush1.msra.mxu0 0.0
    %4497 = vmatprep.subr.mxu0 0.0
    %4498 = vmatpush1.msra.mxu0 0.0
    %4499 = vmatprep.subr.mxu0 0.0
    %4500 = vmatpush1.msra.mxu0 0.0
    %4501 = vmatprep.subr.mxu0 0.0
    %4502 = vmatpush1.msra.mxu0 0.0
    %4503 = vmatprep.subr.mxu0 0.0
    %4504 = vmatpush1.msra.mxu0 0.0
    %4505 = vmatprep.subr.mxu0 0.0
    %4506 = vmatpush1.msra.mxu0 0.0
    %4507 = vmatprep.subr.mxu0 0.0
    %4508 = vmatpush1.msra.mxu0 0.0
    %4509 = vmatprep.subr.mxu0 0.0
    %4510 = vmatpush1.msra.mxu0 0.0
    %4511 = vmatprep.subr.mxu0 0.0
    %4512 = vmatpush1.msra.mxu0 0.0
    %4513 = vmatprep.subr.mxu0 0.0
    %4514 = vmatpush1.msra.mxu0 0.0
    %4515 = vmatprep.subr.mxu0 0.0
    %4516 = vmatpush1.msra.mxu0 0.0
    %4517 = vmatprep.subr.mxu0 0.0
    %4518 = vmatpush1.msra.mxu0 0.0
    %4519 = vmatprep.subr.mxu0 0.0
    %4520 = vmatpush1.msra.mxu0 0.0
    %4521 = vmatprep.subr.mxu0 0.0
    %4522 = vmatpush1.msra.mxu0 0.0
    %4523 = vmatprep.subr.mxu0 0.0
    %4524 = vmatpush1.msra.mxu0 0.0
    %4525 = vmatprep.subr.mxu0 0.0
    %4526 = vmatpush1.msra.mxu0 0.0
    %4527 = vmatprep.subr.mxu0 0.0
    %4528 = vmatpush1.msra.mxu0 0.0
    %4529 = vmatprep.subr.mxu0 0.0
    %4530 = vmatpush1.msra.mxu0 0.0
    %4531 = vmatprep.subr.mxu0 0.0
    %4532 = vmatpush1.msra.mxu0 0.0
    %4533 = vmatprep.subr.mxu0 0.0
    %4534 = vmatpush1.msra.mxu0 0.0
    %4535 = vmatprep.subr.mxu0 0.0
    %4536 = vmatpush1.msra.mxu0 0.0
    %4537 = vmatprep.subr.mxu0 0.0
    %4538 = vmatpush1.msra.mxu0 0.0
    %4539 = vmatprep.subr.mxu0 0.0
    %4540 = vmatpush1.msra.mxu0 0.0
    %4541 = vmatprep.subr.mxu0 0.0
    %4542 = vmatpush1.msra.mxu0 0.0
    %4543 = vmatprep.subr.mxu0 0.0
    %4544 = vmatpush1.msra.mxu0 0.0
    %4545 = vmatprep.mubr.f32.mxu0 0.0
    %4546 = vmatmul.mubr.f32.gmra.mrb[0].mxu0 %v4476
    %v4547 = vpop.f32.mrb[0].mxu0
    %v4548 = vadd.f32 0.0, %v4547
    %v4549 = vpop.f32.mrb[0].mxu0
    %4550 = vmatprep.mubr.f32.mxu0 0.0
    %4551 = vmatmul.mubr.f32.gmra.mrb[0].mxu0 %v4479
    %v4552 = vpop.f32.mrb[0].mxu0
    %v4553 = vadd.f32 0.0, %v4552
    %v4554 = vpop.f32.mrb[0].mxu0
    %4555 = vdwg.mxu0
    %v4556 = vadd.f32 %v4464, %v4548
    %v4557 = vadd.f32 %v4469, %v4553
    %s4558 = sld [smem:[#allocation14 + $0x7]]
    %v4559 = vstv %s4558
    %v4560 = vadd.f32 %v4556, %v4559
    %v4561 = vadd.f32 %v4557, %v4559
    %v4562 = vsub.f32 0.0, %v4560
    %v4563 = vsub.f32 0.0, %v4561
    %v4564 = vmul.f32 %v4562, 1.442695
    %v4565 = vpow.pop %v4564
    %v4566 = vmul.f32 %v4563, 1.442695
    %v4567 = vpow.pop %v4566
    %v4568 = vadd.f32 %v4565, 1.0
    %v4569 = vadd.f32 %v4567, 1.0
    %v4570 = vrcp.pop %v4568
    %v4571 = vrcp.pop %v4569
    %v4572 = vsub.f32 %v223, %v4570
    %v4573 = vsub.f32 %v224, %v4571
    %v4574 = vmul.f32 %v4572, %v4572
    %v4575 = vmul.f32 %v4573, %v4573
    %v4576 = vsel %vm225, %v4574, 0.0
    %v4577 = vsel %vm225, %v4575, 0.0
    %v4578 = vadd.f32 %v4576, %v4577
    %4579 = vadd.xlane.f32.xlu0 %v4578
    %v4580 = vpop.xlane.xlu0 %4579
    %v4581 = vrot.slane %v4580, 4
    %v4582 = vadd.f32 %v4580, %v4581
    %v4583 = vrot.slane %v4582, 2
    %v4584 = vadd.f32 %v4582, %v4583
    %v4585 = vrot.slane %v4584, 1
    %v4586 = vadd.f32 %v4584, %v4585
    %s4587 = vtos %v4586
    %v4588 = vstv %s4587
    %v4589 = vmul.f32 %v4588, %v4054
    %vm4590 = vcmask 0
    %4591 = vst.msk [vmem:[#allocation19] sm:$0x1] %vm4590, %v4589
    // Predicated region
    $region102: #{tpu_custom_call.1} parent=1 // pred_check
      _
    $region103: #{tpu_custom_call.1} parent=1 // pred_check_branch
      %4593 = sbr.rel (0) target = $region105
    $region104: #{tpu_custom_call.1} parent=1 // pred_region
      %s4595 = ssub.s32 128, 128
      %4596 = vsyncadd [#allocation4], %s4595
      %s4598 = sshll.u32 [#allocation18], 4
      %s4599 = int_to_ptr.vmem [resolvable:$true] %s4598
      %4601 = dma.vmem_to_hbm [thread:$0]  %s4599, 128, %s16, [#allocation4]
    $region105: #{tpu_custom_call.1} parent=1 // pred_fallthru
      _
    // Predicated region
    $region106: #{tpu_custom_call.1} parent=1 // pred_check
      _
    $region107: #{tpu_custom_call.1} parent=1 // pred_check_branch
      %4603 = sbr.rel (0) target = $region109
    $region108: #{tpu_custom_call.1} parent=1 // pred_region
      %s4605 = ssub.s32 16, 16
      %4606 = vsyncadd [#allocation20], %s4605
      %s4608 = sshll.u32 [#allocation19], 4
      %s4609 = int_to_ptr.vmem [resolvable:$true] %s4608
      %4611 = dma.vmem_to_hbm [thread:$0]  %s4609, 16, %s17, [#allocation20]
    $region109: #{tpu_custom_call.1} parent=1 // pred_fallthru
      _
    // Predicated region
    $region110: #{tpu_custom_call.1} parent=1 // pred_check
      _
    $region111: #{tpu_custom_call.1} parent=1 // pred_check_branch
      %4613 = sbr.rel (0) target = $region113
    $region112: #{tpu_custom_call.1} parent=1 // pred_region
      %4614 = dma.done [#allocation4], 128
    $region113: #{tpu_custom_call.1} parent=1 // pred_fallthru
      _
    // Predicated region
    $region114: #{tpu_custom_call.1} parent=1 // pred_check
      _
    $region115: #{tpu_custom_call.1} parent=1 // pred_check_branch
      %4616 = sbr.rel (0) target = $region117
    $region116: #{tpu_custom_call.1} parent=1 // pred_region
      %4617 = dma.done [#allocation20], 16
    $region117: #{tpu_custom_call.1} parent=1 // pred_fallthru
      _
    %4618 = vsyncpa [#allocation3], 1
    %4619 = vsyncpa [#allocation7], 1
    %4620 = vsyncpa [#allocation10], 1
    %4621 = vsyncpa [#allocation13], 1
    %4622 = vsyncpa [#allocation4], 1
    %4623 = vsyncpa [#allocation20], 1
    %4624 = vsyncpa [#allocation5], 1
    %4625 = vsyncpa [#allocation16], 1

</llo_original>
